<compile_context>
chip_gen: v7x
topology: tpu7x:2x2x1
jax: 0.10.0
libtpu: 0.0.40
codegen_flags: <defaults>
</compile_context>

<pallas_src>
import functools
import jax
import jax.numpy as jnp
from jax.experimental import pallas as pl
from jax.experimental.pallas import tpu as pltpu

# ------------------------- model hyper-params (small, synthetic) ----------------
B = 2            # batch
S = 8            # sequence length
H = 32           # hidden size (roberta.config.hidden_size)
NH = 4           # attention heads
DH = H // NH     # head dim
I = 64           # FFN intermediate size
L = 2            # encoder layers
VOCAB = 64
NUM_LABELS = 3
LN_EPS = 1e-5
M = B * S        # rows of the activation slab


# ------------------------------- in-kernel helpers -------------------------------
def _ln(x, g, b):
    mu = jnp.mean(x, axis=-1, keepdims=True)
    var = jnp.mean((x - mu) * (x - mu), axis=-1, keepdims=True)
    return (x - mu) * jax.lax.rsqrt(var + LN_EPS) * g + b


def _gelu(x):
    # TODO(synk): HF RoBERTa uses exact erf-GELU; tanh approximation used here for
    # robust Mosaic lowering (EUP tanh).
    return 0.5 * x * (1.0 + jnp.tanh(0.7978845608028654 * (x + 0.044715 * x * x * x)))


# ------------------------------- fused encoder kernel ----------------------------
def _encoder_kernel(
    x_ref,            # (M, H)   f32   embeddings (word + pos + type), pre-LN
    bias_ref,         # (B, S, S) f32  additive key-mask bias, pre-broadcast
    eg_ref, eb_ref,   # (1, H)   f32   embedding LayerNorm gamma / beta
    wqkv_ref,         # (L, H, 3H) bf16
    bqkv_ref,         # (L, 1, 3H) f32
    wo_ref,           # (L, H, H)  bf16
    bo_ref,           # (L, 1, H)  f32
    ln1g_ref, ln1b_ref,   # (L, 1, H) f32
    wi_ref,           # (L, H, I)  bf16
    bi_ref,           # (L, 1, I)  f32
    wo2_ref,          # (L, I, H)  bf16
    bo2_ref,          # (L, 1, H)  f32
    ln2g_ref, ln2b_ref,   # (L, 1, H) f32
    o_ref,            # (M, H)   f32   last_hidden_state slab
    ctx_scr,          # (M, H)   f32   VMEM scratch: per-head attention context
):
    x = _ln(x_ref[...], eg_ref[...], eb_ref[...])          # embedding LayerNorm
    bias = bias_ref[...]                                   # (B, S, S)
    scale = float(DH) ** -0.5

    for li in range(L):                                    # static unroll, L is tiny
        # ---- fused QKV projection: one (M, H) @ (H, 3H) MXU matmul -------------
        qkv = (
            jnp.dot(x.astype(jnp.bfloat16), wqkv_ref[li],
                    preferred_element_type=jnp.float32)
            + bqkv_ref[li]
        )                                                  # (M, 3H) f32
        q = qkv[:, 0:H].reshape(B, S, H)
        k = qkv[:, H:2 * H].reshape(B, S, H)
        v = qkv[:, 2 * H:3 * H].reshape(B, S, H)

        # ---- attention: heads are static lane slices, batched einsum per head --
        for h in range(NH):
            lo, hi = h * DH, (h + 1) * DH
            qh = q[:, :, lo:hi].astype(jnp.bfloat16)       # (B, S, DH)
            kh = k[:, :, lo:hi].astype(jnp.bfloat16)
            vh = v[:, :, lo:hi].astype(jnp.bfloat16)
            s = (
                jnp.einsum("bqd,bkd->bqk", qh, kh,
                           preferred_element_type=jnp.float32) * scale
                + bias
            )                                              # (B, S, S)
            s = s - jnp.max(s, axis=-1, keepdims=True)
            p = jnp.exp(s)
            p = p * pl.reciprocal(jnp.sum(p, axis=-1, keepdims=True), approx=True)
            ch = jnp.einsum("bqk,bkd->bqd", p.astype(jnp.bfloat16), vh,
                            preferred_element_type=jnp.float32)  # (B, S, DH)
            ctx_scr[:, lo:hi] = ch.reshape(M, DH)

        # ---- output projection + residual + LN1 (epilogue, all in VMEM) --------
        attn = (
            jnp.dot(ctx_scr[...].astype(jnp.bfloat16), wo_ref[li],
                    preferred_element_type=jnp.float32)
            + bo_ref[li]
        )
        x = _ln(x + attn, ln1g_ref[li], ln1b_ref[li])

        # ---- FFN: matmul + GELU + matmul + residual + LN2 -----------------------
        ff = (
            jnp.dot(x.astype(jnp.bfloat16), wi_ref[li],
                    preferred_element_type=jnp.float32)
            + bi_ref[li]
        )
        ff = _gelu(ff)
        ff = (
            jnp.dot(ff.astype(jnp.bfloat16), wo2_ref[li],
                    preferred_element_type=jnp.float32)
            + bo2_ref[li]
        )
        x = _ln(x + ff, ln2g_ref[li], ln2b_ref[li])

    o_ref[...] = x


def _vmem_spec():
    return pl.BlockSpec(memory_space=pltpu.MemorySpace.VMEM)


def encoder_forward(params, x_emb, bias_bss):
    """One pallas_call: embedding LN + all L transformer layers. Everything resident
    in VMEM (total params + activations are well under 1 MiB at these sizes)."""
    n_in = 16
    return pl.pallas_call(
        _encoder_kernel,
        out_shape=jax.ShapeDtypeStruct((M, H), jnp.float32),
        in_specs=[_vmem_spec()] * n_in,
        out_specs=_vmem_spec(),
        scratch_shapes=[pltpu.VMEM((M, H), jnp.float32)],
    )(
        x_emb, bias_bss,
        params["emb_ln_g"], params["emb_ln_b"],
        params["wqkv"], params["bqkv"],
        params["wo"], params["bo"],
        params["ln1_g"], params["ln1_b"],
        params["wi"], params["bi"],
        params["wo2"], params["bo2"],
        params["ln2_g"], params["ln2_b"],
    )


# ------------------------------ parameter construction ---------------------------
def init_params(key):
    std = 0.02

    def w_init(k, fan_in, fan_out):
        # bf16 weights for the MXU path; f32 accumulation inside the kernel.
        return (std * jax.random.normal(k, (fan_in, fan_out), jnp.float32)).astype(jnp.bfloat16)

    keys = jax.random.split(key, 4 + L)
    p = {}
    p["word_emb"] = std * jax.random.normal(keys[0], (VOCAB, H), jnp.float32)
    p["pos_emb"] = std * jax.random.normal(keys[1], (S, H), jnp.float32)
    p["type_emb"] = std * jax.random.normal(keys[2], (1, H), jnp.float32)
    p["emb_ln_g"] = jnp.ones((1, H), jnp.float32)
    p["emb_ln_b"] = jnp.zeros((1, H), jnp.float32)

    wqkv, bqkv, wo, bo, ln1g, ln1b = [], [], [], [], [], []
    wi, bi, wo2, bo2, ln2g, ln2b = [], [], [], [], [], []
    for li in range(L):
        lk = jax.random.split(keys[3 + li], 6)
        wq = w_init(lk[0], H, H)
        wk = w_init(lk[1], H, H)
        wv = w_init(lk[2], H, H)
        wqkv.append(jnp.concatenate([wq, wk, wv], axis=1))      # (H, 3H)
        bqkv.append(jnp.zeros((1, 3 * H), jnp.float32))
        wo.append(w_init(lk[3], H, H))
        bo.append(jnp.zeros((1, H), jnp.float32))
        ln1g.append(jnp.ones((1, H), jnp.float32))
        ln1b.append(jnp.zeros((1, H), jnp.float32))
        wi.append(w_init(lk[4], H, I))
        bi.append(jnp.zeros((1, I), jnp.float32))
        wo2.append(w_init(lk[5], I, H))
        bo2.append(jnp.zeros((1, H), jnp.float32))
        ln2g.append(jnp.ones((1, H), jnp.float32))
        ln2b.append(jnp.zeros((1, H), jnp.float32))

    p["wqkv"] = jnp.stack(wqkv)      # (L, H, 3H) bf16
    p["bqkv"] = jnp.stack(bqkv)      # (L, 1, 3H) f32
    p["wo"] = jnp.stack(wo)
    p["bo"] = jnp.stack(bo)
    p["ln1_g"] = jnp.stack(ln1g)
    p["ln1_b"] = jnp.stack(ln1b)
    p["wi"] = jnp.stack(wi)
    p["bi"] = jnp.stack(bi)
    p["wo2"] = jnp.stack(wo2)
    p["bo2"] = jnp.stack(bo2)
    p["ln2_g"] = jnp.stack(ln2g)
    p["ln2_b"] = jnp.stack(ln2b)

    # classifier head (the only trainable part in the PyTorch module; torch.manual_seed(42)
    # there -> deterministic init here). Kept in f32 / plain JAX (see forward).
    p["cls_w"] = std * jax.random.normal(keys[3 + L], (H, NUM_LABELS), jnp.float32)
    p["cls_b"] = jnp.zeros((NUM_LABELS,), jnp.float32)
    return p


# --------------------------------- forward pass ----------------------------------
def roberta_classifier_forward(params, input_ids, attention_mask, return_logits=True):
    b_, s = input_ids.shape
    # embeddings (gather stays in plain JAX glue)
    x = params["word_emb"][input_ids]                              # (B, S, H)
    x = x + params["pos_emb"][jnp.arange(s)][None, :, :]
    x = x + params["type_emb"][0][None, None, :]
    x2 = x.reshape(b_ * s, H)

    # additive attention-mask bias, pre-broadcast to (B, S_q, S_k) so the kernel
    # adds it elementwise (only keys are masked, as in standard RoBERTa attention)
    bias = (1.0 - attention_mask.astype(jnp.float32)) * -1e9       # (B, S)
    bias = jnp.broadcast_to(bias[:, None, :], (b_, s, s))          # (B, S, S)

    hidden = encoder_forward(params, x2, bias)                     # (B*S, H), one fused Pallas call
    cls_representation = hidden.reshape(b_, s, H)[:, 0, :]         # last_hidden_state[:, 0, :]

    # Classifier head (32 -> 3) stays in plain JAX: a (B, 3) Pallas output would
    # force masked sub-lane stores for negligible compute (perf review).
    logits = cls_representation @ params["cls_w"] + params["cls_b"]  # (B, NUM_LABELS)
    if return_logits:
        return logits
    return jnp.argmax(logits, axis=1) + 1


# -------------------------------------- main --------------------------------------
if __name__ == "__main__":
    root = jax.random.PRNGKey(0)
    k_params, k_ids = jax.random.split(root)

    params = init_params(k_params)

    input_ids = jax.random.randint(k_ids, (B, S), 0, VOCAB, dtype=jnp.int32)
    attention_mask = jnp.array(
        [[1, 1, 1, 1, 1, 1, 1, 1],
         [1, 1, 1, 1, 1, 0, 0, 0]], dtype=jnp.int32
    )

    fwd = jax.jit(functools.partial(roberta_classifier_forward, params))
    logits = fwd(input_ids, attention_mask)
    jax.block_until_ready(logits)

    assert logits.shape == (B, NUM_LABELS)
    assert logits.dtype == jnp.float32
    print("KERNEL_OK")
</pallas_src>

<mosaic_0001>
module attributes {stable_mosaic.version = 11 : i64} {
  func.func @_encoder_kernel(%arg0: memref<16x32xf32, #tpu.memory_space<vmem>>, %arg1: memref<2x8x8xf32, #tpu.memory_space<vmem>>, %arg2: memref<1x32xf32, #tpu.memory_space<vmem>>, %arg3: memref<1x32xf32, #tpu.memory_space<vmem>>, %arg4: memref<2x32x96xbf16, #tpu.memory_space<vmem>>, %arg5: memref<2x1x96xf32, #tpu.memory_space<vmem>>, %arg6: memref<2x32x32xbf16, #tpu.memory_space<vmem>>, %arg7: memref<2x1x32xf32, #tpu.memory_space<vmem>>, %arg8: memref<2x1x32xf32, #tpu.memory_space<vmem>>, %arg9: memref<2x1x32xf32, #tpu.memory_space<vmem>>, %arg10: memref<2x32x64xbf16, #tpu.memory_space<vmem>>, %arg11: memref<2x1x64xf32, #tpu.memory_space<vmem>>, %arg12: memref<2x64x32xbf16, #tpu.memory_space<vmem>>, %arg13: memref<2x1x32xf32, #tpu.memory_space<vmem>>, %arg14: memref<2x1x32xf32, #tpu.memory_space<vmem>>, %arg15: memref<2x1x32xf32, #tpu.memory_space<vmem>>, %arg16: memref<16x32xf32, #tpu.memory_space<vmem>>, %arg17: memref<16x32xf32, #tpu.memory_space<vmem>>) attributes {dimension_semantics = [], scalar_prefetch = 0 : i64, scratch_operands = 1 : i64, tpu.core_type = #tpu.core_type<tc>} {
    %c0 = arith.constant 0 : index
    %c0_0 = arith.constant 0 : index
    %0 = vector.load %arg0[%c0, %c0_0] : memref<16x32xf32, #tpu.memory_space<vmem>>, vector<16x32xf32>
    %c0_1 = arith.constant 0 : index
    %c0_2 = arith.constant 0 : index
    %1 = vector.load %arg2[%c0_1, %c0_2] : memref<1x32xf32, #tpu.memory_space<vmem>>, vector<1x32xf32>
    %c0_3 = arith.constant 0 : index
    %c0_4 = arith.constant 0 : index
    %2 = vector.load %arg3[%c0_3, %c0_4] : memref<1x32xf32, #tpu.memory_space<vmem>>, vector<1x32xf32>
    %cst = arith.constant dense<0.000000e+00> : vector<16xf32>
    %3 = vector.multi_reduction <add>, %0, %cst [1] : vector<16x32xf32> to vector<16xf32>
    %4 = vector.shape_cast %3 : vector<16xf32> to vector<16x1xf32>
    %cst_5 = arith.constant 3.200000e+01 : f32
    %5 = vector.broadcast %cst_5 : f32 to vector<16x1xf32>
    %6 = arith.divf %4, %5 : vector<16x1xf32>
    %7 = vector.broadcast %6 : vector<16x1xf32> to vector<16x32xf32>
    %8 = arith.subf %0, %7 : vector<16x32xf32>
    %9 = vector.broadcast %6 : vector<16x1xf32> to vector<16x32xf32>
    %10 = arith.subf %0, %9 : vector<16x32xf32>
    %11 = arith.mulf %8, %10 : vector<16x32xf32>
    %cst_6 = arith.constant dense<0.000000e+00> : vector<16xf32>
    %12 = vector.multi_reduction <add>, %11, %cst_6 [1] : vector<16x32xf32> to vector<16xf32>
    %13 = vector.shape_cast %12 : vector<16xf32> to vector<16x1xf32>
    %cst_7 = arith.constant 3.200000e+01 : f32
    %14 = vector.broadcast %cst_7 : f32 to vector<16x1xf32>
    %15 = arith.divf %13, %14 : vector<16x1xf32>
    %16 = vector.broadcast %6 : vector<16x1xf32> to vector<16x32xf32>
    %17 = arith.subf %0, %16 : vector<16x32xf32>
    %cst_8 = arith.constant 9.99999974E-6 : f32
    %18 = vector.broadcast %cst_8 : f32 to vector<16x1xf32>
    %19 = arith.addf %15, %18 : vector<16x1xf32>
    %20 = math.rsqrt %19 : vector<16x1xf32>
    %21 = vector.broadcast %20 : vector<16x1xf32> to vector<16x32xf32>
    %22 = arith.mulf %17, %21 : vector<16x32xf32>
    %23 = vector.broadcast %1 : vector<1x32xf32> to vector<16x32xf32>
    %24 = arith.mulf %22, %23 : vector<16x32xf32>
    %25 = vector.broadcast %2 : vector<1x32xf32> to vector<16x32xf32>
    %26 = arith.addf %24, %25 : vector<16x32xf32>
    %c0_9 = arith.constant 0 : index
    %c0_10 = arith.constant 0 : index
    %c0_11 = arith.constant 0 : index
    %27 = vector.load %arg1[%c0_9, %c0_10, %c0_11] : memref<2x8x8xf32, #tpu.memory_space<vmem>>, vector<2x8x8xf32>
    %28 = arith.truncf %26 : vector<16x32xf32> to vector<16x32xbf16>
    %c0_12 = arith.constant 0 : index
    %c0_13 = arith.constant 0 : index
    %c0_14 = arith.constant 0 : index
    %29 = vector.load %arg4[%c0_12, %c0_13, %c0_14] : memref<2x32x96xbf16, #tpu.memory_space<vmem>>, vector<1x32x96xbf16>
    %30 = vector.shape_cast %29 : vector<1x32x96xbf16> to vector<32x96xbf16>
    %cst_15 = arith.constant dense<0.000000e+00> : vector<16x96xf32>
    %31 = tpu.matmul %28, %30, %cst_15 {dimension_numbers = #tpu.dot_dimension_numbers<[1], [0], [0], [1], [0, 0, 1, 1], [], []>} : vector<16x32xbf16>, vector<32x96xbf16>, vector<16x96xf32> -> vector<16x96xf32>
    %c0_16 = arith.constant 0 : index
    %c0_17 = arith.constant 0 : index
    %c0_18 = arith.constant 0 : index
    %32 = vector.load %arg5[%c0_16, %c0_17, %c0_18] : memref<2x1x96xf32, #tpu.memory_space<vmem>>, vector<1x1x96xf32>
    %33 = vector.shape_cast %32 : vector<1x1x96xf32> to vector<1x96xf32>
    %34 = vector.broadcast %33 : vector<1x96xf32> to vector<16x96xf32>
    %35 = arith.addf %31, %34 : vector<16x96xf32>
    %36 = vector.extract_strided_slice %35 {offsets = [0, 0], sizes = [16, 32], strides = [1, 1]} : vector<16x96xf32> to vector<16x32xf32>
    %37 = vector.shape_cast %36 : vector<16x32xf32> to vector<2x8x32xf32>
    %38 = vector.extract_strided_slice %35 {offsets = [0, 32], sizes = [16, 32], strides = [1, 1]} : vector<16x96xf32> to vector<16x32xf32>
    %39 = vector.shape_cast %38 : vector<16x32xf32> to vector<2x8x32xf32>
    %40 = vector.extract_strided_slice %35 {offsets = [0, 64], sizes = [16, 32], strides = [1, 1]} : vector<16x96xf32> to vector<16x32xf32>
    %41 = vector.shape_cast %40 : vector<16x32xf32> to vector<2x8x32xf32>
    %42 = vector.extract_strided_slice %37 {offsets = [0, 0, 0], sizes = [2, 8, 8], strides = [1, 1, 1]} : vector<2x8x32xf32> to vector<2x8x8xf32>
    %43 = arith.truncf %42 : vector<2x8x8xf32> to vector<2x8x8xbf16>
    %44 = vector.extract_strided_slice %39 {offsets = [0, 0, 0], sizes = [2, 8, 8], strides = [1, 1, 1]} : vector<2x8x32xf32> to vector<2x8x8xf32>
    %45 = arith.truncf %44 : vector<2x8x8xf32> to vector<2x8x8xbf16>
    %46 = vector.extract_strided_slice %41 {offsets = [0, 0, 0], sizes = [2, 8, 8], strides = [1, 1, 1]} : vector<2x8x32xf32> to vector<2x8x8xf32>
    %47 = arith.truncf %46 : vector<2x8x8xf32> to vector<2x8x8xbf16>
    "tpu.trace_start"() <{level = 10 : i32, message = "bqd,bkd->bqk"}> : () -> ()
    %cst_19 = arith.constant dense<0.000000e+00> : vector<2x8x8xf32>
    %48 = tpu.matmul %43, %45, %cst_19 {dimension_numbers = #tpu.dot_dimension_numbers<[2], [2], [1], [1], [0, 0, 0, 1, 1, 1], [0], [0]>} : vector<2x8x8xbf16>, vector<2x8x8xbf16>, vector<2x8x8xf32> -> vector<2x8x8xf32>
    "tpu.trace_stop"() : () -> ()
    %cst_20 = arith.constant 0.353553385 : f32
    %49 = vector.broadcast %cst_20 : f32 to vector<2x8x8xf32>
    %50 = arith.mulf %48, %49 : vector<2x8x8xf32>
    %51 = arith.addf %50, %27 : vector<2x8x8xf32>
    %cst_21 = arith.constant dense<0xFF800000> : vector<2x8xf32>
    %52 = vector.multi_reduction <maximumf>, %51, %cst_21 [2] : vector<2x8x8xf32> to vector<2x8xf32>
    %53 = vector.shape_cast %52 : vector<2x8xf32> to vector<2x8x1xf32>
    %54 = vector.broadcast %53 : vector<2x8x1xf32> to vector<2x8x8xf32>
    %55 = arith.subf %51, %54 : vector<2x8x8xf32>
    %56 = math.exp %55 : vector<2x8x8xf32>
    %cst_22 = arith.constant dense<0.000000e+00> : vector<2x8xf32>
    %57 = vector.multi_reduction <add>, %56, %cst_22 [2] : vector<2x8x8xf32> to vector<2x8xf32>
    %58 = vector.shape_cast %57 : vector<2x8xf32> to vector<2x8x1xf32>
    %59 = tpu.reciprocal %58 {approx = true} : vector<2x8x1xf32> -> vector<2x8x1xf32>
    %60 = vector.broadcast %59 : vector<2x8x1xf32> to vector<2x8x8xf32>
    %61 = arith.mulf %56, %60 : vector<2x8x8xf32>
    %62 = arith.truncf %61 : vector<2x8x8xf32> to vector<2x8x8xbf16>
    "tpu.trace_start"() <{level = 10 : i32, message = "bqk,bkd->bqd"}> : () -> ()
    %cst_23 = arith.constant dense<0.000000e+00> : vector<2x8x8xf32>
    %63 = tpu.matmul %62, %47, %cst_23 {dimension_numbers = #tpu.dot_dimension_numbers<[2], [1], [1], [2], [0, 0, 0, 1, 1, 2], [0], [0]>} : vector<2x8x8xbf16>, vector<2x8x8xbf16>, vector<2x8x8xf32> -> vector<2x8x8xf32>
    "tpu.trace_stop"() : () -> ()
    %64 = vector.shape_cast %63 : vector<2x8x8xf32> to vector<16x8xf32>
    %c0_24 = arith.constant 0 : index
    %c0_25 = arith.constant 0 : index
    %65 = vector.load %arg17[%c0_24, %c0_25] : memref<16x32xf32, #tpu.memory_space<vmem>>, vector<16x8xf32>
    tpu.vector_store %arg17[%c0_24, %c0_25], %64 {strides = array<i32>} : memref<16x32xf32, #tpu.memory_space<vmem>>, vector<16x8xf32>,
    %66 = vector.extract_strided_slice %37 {offsets = [0, 0, 8], sizes = [2, 8, 8], strides = [1, 1, 1]} : vector<2x8x32xf32> to vector<2x8x8xf32>
    %67 = arith.truncf %66 : vector<2x8x8xf32> to vector<2x8x8xbf16>
    %68 = vector.extract_strided_slice %39 {offsets = [0, 0, 8], sizes = [2, 8, 8], strides = [1, 1, 1]} : vector<2x8x32xf32> to vector<2x8x8xf32>
    %69 = arith.truncf %68 : vector<2x8x8xf32> to vector<2x8x8xbf16>
    %70 = vector.extract_strided_slice %41 {offsets = [0, 0, 8], sizes = [2, 8, 8], strides = [1, 1, 1]} : vector<2x8x32xf32> to vector<2x8x8xf32>
    %71 = arith.truncf %70 : vector<2x8x8xf32> to vector<2x8x8xbf16>
    "tpu.trace_start"() <{level = 10 : i32, message = "bqd,bkd->bqk"}> : () -> ()
    %cst_26 = arith.constant dense<0.000000e+00> : vector<2x8x8xf32>
    %72 = tpu.matmul %67, %69, %cst_26 {dimension_numbers = #tpu.dot_dimension_numbers<[2], [2], [1], [1], [0, 0, 0, 1, 1, 1], [0], [0]>} : vector<2x8x8xbf16>, vector<2x8x8xbf16>, vector<2x8x8xf32> -> vector<2x8x8xf32>
    "tpu.trace_stop"() : () -> ()
    %cst_27 = arith.constant 0.353553385 : f32
    %73 = vector.broadcast %cst_27 : f32 to vector<2x8x8xf32>
    %74 = arith.mulf %72, %73 : vector<2x8x8xf32>
    %75 = arith.addf %74, %27 : vector<2x8x8xf32>
    %cst_28 = arith.constant dense<0xFF800000> : vector<2x8xf32>
    %76 = vector.multi_reduction <maximumf>, %75, %cst_28 [2] : vector<2x8x8xf32> to vector<2x8xf32>
    %77 = vector.shape_cast %76 : vector<2x8xf32> to vector<2x8x1xf32>
    %78 = vector.broadcast %77 : vector<2x8x1xf32> to vector<2x8x8xf32>
    %79 = arith.subf %75, %78 : vector<2x8x8xf32>
    %80 = math.exp %79 : vector<2x8x8xf32>
    %cst_29 = arith.constant dense<0.000000e+00> : vector<2x8xf32>
    %81 = vector.multi_reduction <add>, %80, %cst_29 [2] : vector<2x8x8xf32> to vector<2x8xf32>
    %82 = vector.shape_cast %81 : vector<2x8xf32> to vector<2x8x1xf32>
    %83 = tpu.reciprocal %82 {approx = true} : vector<2x8x1xf32> -> vector<2x8x1xf32>
    %84 = vector.broadcast %83 : vector<2x8x1xf32> to vector<2x8x8xf32>
    %85 = arith.mulf %80, %84 : vector<2x8x8xf32>
    %86 = arith.truncf %85 : vector<2x8x8xf32> to vector<2x8x8xbf16>
    "tpu.trace_start"() <{level = 10 : i32, message = "bqk,bkd->bqd"}> : () -> ()
    %cst_30 = arith.constant dense<0.000000e+00> : vector<2x8x8xf32>
    %87 = tpu.matmul %86, %71, %cst_30 {dimension_numbers = #tpu.dot_dimension_numbers<[2], [1], [1], [2], [0, 0, 0, 1, 1, 2], [0], [0]>} : vector<2x8x8xbf16>, vector<2x8x8xbf16>, vector<2x8x8xf32> -> vector<2x8x8xf32>
    "tpu.trace_stop"() : () -> ()
    %88 = vector.shape_cast %87 : vector<2x8x8xf32> to vector<16x8xf32>
    %c0_31 = arith.constant 0 : index
    %c8 = arith.constant 8 : index
    %89 = vector.load %arg17[%c0_31, %c8] : memref<16x32xf32, #tpu.memory_space<vmem>>, vector<16x8xf32>
    tpu.vector_store %arg17[%c0_31, %c8], %88 {strides = array<i32>} : memref<16x32xf32, #tpu.memory_space<vmem>>, vector<16x8xf32>,
    %90 = vector.extract_strided_slice %37 {offsets = [0, 0, 16], sizes = [2, 8, 8], strides = [1, 1, 1]} : vector<2x8x32xf32> to vector<2x8x8xf32>
    %91 = arith.truncf %90 : vector<2x8x8xf32> to vector<2x8x8xbf16>
    %92 = vector.extract_strided_slice %39 {offsets = [0, 0, 16], sizes = [2, 8, 8], strides = [1, 1, 1]} : vector<2x8x32xf32> to vector<2x8x8xf32>
    %93 = arith.truncf %92 : vector<2x8x8xf32> to vector<2x8x8xbf16>
    %94 = vector.extract_strided_slice %41 {offsets = [0, 0, 16], sizes = [2, 8, 8], strides = [1, 1, 1]} : vector<2x8x32xf32> to vector<2x8x8xf32>
    %95 = arith.truncf %94 : vector<2x8x8xf32> to vector<2x8x8xbf16>
    "tpu.trace_start"() <{level = 10 : i32, message = "bqd,bkd->bqk"}> : () -> ()
    %cst_32 = arith.constant dense<0.000000e+00> : vector<2x8x8xf32>
    %96 = tpu.matmul %91, %93, %cst_32 {dimension_numbers = #tpu.dot_dimension_numbers<[2], [2], [1], [1], [0, 0, 0, 1, 1, 1], [0], [0]>} : vector<2x8x8xbf16>, vector<2x8x8xbf16>, vector<2x8x8xf32> -> vector<2x8x8xf32>
    "tpu.trace_stop"() : () -> ()
    %cst_33 = arith.constant 0.353553385 : f32
    %97 = vector.broadcast %cst_33 : f32 to vector<2x8x8xf32>
    %98 = arith.mulf %96, %97 : vector<2x8x8xf32>
    %99 = arith.addf %98, %27 : vector<2x8x8xf32>
    %cst_34 = arith.constant dense<0xFF800000> : vector<2x8xf32>
    %100 = vector.multi_reduction <maximumf>, %99, %cst_34 [2] : vector<2x8x8xf32> to vector<2x8xf32>
    %101 = vector.shape_cast %100 : vector<2x8xf32> to vector<2x8x1xf32>
    %102 = vector.broadcast %101 : vector<2x8x1xf32> to vector<2x8x8xf32>
    %103 = arith.subf %99, %102 : vector<2x8x8xf32>
    %104 = math.exp %103 : vector<2x8x8xf32>
    %cst_35 = arith.constant dense<0.000000e+00> : vector<2x8xf32>
    %105 = vector.multi_reduction <add>, %104, %cst_35 [2] : vector<2x8x8xf32> to vector<2x8xf32>
    %106 = vector.shape_cast %105 : vector<2x8xf32> to vector<2x8x1xf32>
    %107 = tpu.reciprocal %106 {approx = true} : vector<2x8x1xf32> -> vector<2x8x1xf32>
    %108 = vector.broadcast %107 : vector<2x8x1xf32> to vector<2x8x8xf32>
    %109 = arith.mulf %104, %108 : vector<2x8x8xf32>
    %110 = arith.truncf %109 : vector<2x8x8xf32> to vector<2x8x8xbf16>
    "tpu.trace_start"() <{level = 10 : i32, message = "bqk,bkd->bqd"}> : () -> ()
    %cst_36 = arith.constant dense<0.000000e+00> : vector<2x8x8xf32>
    %111 = tpu.matmul %110, %95, %cst_36 {dimension_numbers = #tpu.dot_dimension_numbers<[2], [1], [1], [2], [0, 0, 0, 1, 1, 2], [0], [0]>} : vector<2x8x8xbf16>, vector<2x8x8xbf16>, vector<2x8x8xf32> -> vector<2x8x8xf32>
    "tpu.trace_stop"() : () -> ()
    %112 = vector.shape_cast %111 : vector<2x8x8xf32> to vector<16x8xf32>
    %c0_37 = arith.constant 0 : index
    %c16 = arith.constant 16 : index
    %113 = vector.load %arg17[%c0_37, %c16] : memref<16x32xf32, #tpu.memory_space<vmem>>, vector<16x8xf32>
    tpu.vector_store %arg17[%c0_37, %c16], %112 {strides = array<i32>} : memref<16x32xf32, #tpu.memory_space<vmem>>, vector<16x8xf32>,
    %114 = vector.extract_strided_slice %37 {offsets = [0, 0, 24], sizes = [2, 8, 8], strides = [1, 1, 1]} : vector<2x8x32xf32> to vector<2x8x8xf32>
    %115 = arith.truncf %114 : vector<2x8x8xf32> to vector<2x8x8xbf16>
    %116 = vector.extract_strided_slice %39 {offsets = [0, 0, 24], sizes = [2, 8, 8], strides = [1, 1, 1]} : vector<2x8x32xf32> to vector<2x8x8xf32>
    %117 = arith.truncf %116 : vector<2x8x8xf32> to vector<2x8x8xbf16>
    %118 = vector.extract_strided_slice %41 {offsets = [0, 0, 24], sizes = [2, 8, 8], strides = [1, 1, 1]} : vector<2x8x32xf32> to vector<2x8x8xf32>
    %119 = arith.truncf %118 : vector<2x8x8xf32> to vector<2x8x8xbf16>
    "tpu.trace_start"() <{level = 10 : i32, message = "bqd,bkd->bqk"}> : () -> ()
    %cst_38 = arith.constant dense<0.000000e+00> : vector<2x8x8xf32>
    %120 = tpu.matmul %115, %117, %cst_38 {dimension_numbers = #tpu.dot_dimension_numbers<[2], [2], [1], [1], [0, 0, 0, 1, 1, 1], [0], [0]>} : vector<2x8x8xbf16>, vector<2x8x8xbf16>, vector<2x8x8xf32> -> vector<2x8x8xf32>
    "tpu.trace_stop"() : () -> ()
    %cst_39 = arith.constant 0.353553385 : f32
    %121 = vector.broadcast %cst_39 : f32 to vector<2x8x8xf32>
    %122 = arith.mulf %120, %121 : vector<2x8x8xf32>
    %123 = arith.addf %122, %27 : vector<2x8x8xf32>
    %cst_40 = arith.constant dense<0xFF800000> : vector<2x8xf32>
    %124 = vector.multi_reduction <maximumf>, %123, %cst_40 [2] : vector<2x8x8xf32> to vector<2x8xf32>
    %125 = vector.shape_cast %124 : vector<2x8xf32> to vector<2x8x1xf32>
    %126 = vector.broadcast %125 : vector<2x8x1xf32> to vector<2x8x8xf32>
    %127 = arith.subf %123, %126 : vector<2x8x8xf32>
    %128 = math.exp %127 : vector<2x8x8xf32>
    %cst_41 = arith.constant dense<0.000000e+00> : vector<2x8xf32>
    %129 = vector.multi_reduction <add>, %128, %cst_41 [2] : vector<2x8x8xf32> to vector<2x8xf32>
    %130 = vector.shape_cast %129 : vector<2x8xf32> to vector<2x8x1xf32>
    %131 = tpu.reciprocal %130 {approx = true} : vector<2x8x1xf32> -> vector<2x8x1xf32>
    %132 = vector.broadcast %131 : vector<2x8x1xf32> to vector<2x8x8xf32>
    %133 = arith.mulf %128, %132 : vector<2x8x8xf32>
    %134 = arith.truncf %133 : vector<2x8x8xf32> to vector<2x8x8xbf16>
    "tpu.trace_start"() <{level = 10 : i32, message = "bqk,bkd->bqd"}> : () -> ()
    %cst_42 = arith.constant dense<0.000000e+00> : vector<2x8x8xf32>
    %135 = tpu.matmul %134, %119, %cst_42 {dimension_numbers = #tpu.dot_dimension_numbers<[2], [1], [1], [2], [0, 0, 0, 1, 1, 2], [0], [0]>} : vector<2x8x8xbf16>, vector<2x8x8xbf16>, vector<2x8x8xf32> -> vector<2x8x8xf32>
    "tpu.trace_stop"() : () -> ()
    %136 = vector.shape_cast %135 : vector<2x8x8xf32> to vector<16x8xf32>
    %c0_43 = arith.constant 0 : index
    %c24 = arith.constant 24 : index
    %137 = vector.load %arg17[%c0_43, %c24] : memref<16x32xf32, #tpu.memory_space<vmem>>, vector<16x8xf32>
    tpu.vector_store %arg17[%c0_43, %c24], %136 {strides = array<i32>} : memref<16x32xf32, #tpu.memory_space<vmem>>, vector<16x8xf32>,
    %c0_44 = arith.constant 0 : index
    %c0_45 = arith.constant 0 : index
    %138 = vector.load %arg17[%c0_44, %c0_45] : memref<16x32xf32, #tpu.memory_space<vmem>>, vector<16x32xf32>
    %139 = arith.truncf %138 : vector<16x32xf32> to vector<16x32xbf16>
    %c0_46 = arith.constant 0 : index
    %c0_47 = arith.constant 0 : index
    %c0_48 = arith.constant 0 : index
    %140 = vector.load %arg6[%c0_46, %c0_47, %c0_48] : memref<2x32x32xbf16, #tpu.memory_space<vmem>>, vector<1x32x32xbf16>
    %141 = vector.shape_cast %140 : vector<1x32x32xbf16> to vector<32x32xbf16>
    %cst_49 = arith.constant dense<0.000000e+00> : vector<16x32xf32>
    %142 = tpu.matmul %139, %141, %cst_49 {dimension_numbers = #tpu.dot_dimension_numbers<[1], [0], [0], [1], [0, 0, 1, 1], [], []>} : vector<16x32xbf16>, vector<32x32xbf16>, vector<16x32xf32> -> vector<16x32xf32>
    %c0_50 = arith.constant 0 : index
    %c0_51 = arith.constant 0 : index
    %c0_52 = arith.constant 0 : index
    %143 = vector.load %arg7[%c0_50, %c0_51, %c0_52] : memref<2x1x32xf32, #tpu.memory_space<vmem>>, vector<1x1x32xf32>
    %144 = vector.shape_cast %143 : vector<1x1x32xf32> to vector<1x32xf32>
    %145 = vector.broadcast %144 : vector<1x32xf32> to vector<16x32xf32>
    %146 = arith.addf %142, %145 : vector<16x32xf32>
    %147 = arith.addf %26, %146 : vector<16x32xf32>
    %c0_53 = arith.constant 0 : index
    %c0_54 = arith.constant 0 : index
    %c0_55 = arith.constant 0 : index
    %148 = vector.load %arg8[%c0_53, %c0_54, %c0_55] : memref<2x1x32xf32, #tpu.memory_space<vmem>>, vector<1x1x32xf32>
    %149 = vector.shape_cast %148 : vector<1x1x32xf32> to vector<1x32xf32>
    %c0_56 = arith.constant 0 : index
    %c0_57 = arith.constant 0 : index
    %c0_58 = arith.constant 0 : index
    %150 = vector.load %arg9[%c0_56, %c0_57, %c0_58] : memref<2x1x32xf32, #tpu.memory_space<vmem>>, vector<1x1x32xf32>
    %151 = vector.shape_cast %150 : vector<1x1x32xf32> to vector<1x32xf32>
    %cst_59 = arith.constant dense<0.000000e+00> : vector<16xf32>
    %152 = vector.multi_reduction <add>, %147, %cst_59 [1] : vector<16x32xf32> to vector<16xf32>
    %153 = vector.shape_cast %152 : vector<16xf32> to vector<16x1xf32>
    %cst_60 = arith.constant 3.200000e+01 : f32
    %154 = vector.broadcast %cst_60 : f32 to vector<16x1xf32>
    %155 = arith.divf %153, %154 : vector<16x1xf32>
    %156 = vector.broadcast %155 : vector<16x1xf32> to vector<16x32xf32>
    %157 = arith.subf %147, %156 : vector<16x32xf32>
    %158 = vector.broadcast %155 : vector<16x1xf32> to vector<16x32xf32>
    %159 = arith.subf %147, %158 : vector<16x32xf32>
    %160 = arith.mulf %157, %159 : vector<16x32xf32>
    %cst_61 = arith.constant dense<0.000000e+00> : vector<16xf32>
    %161 = vector.multi_reduction <add>, %160, %cst_61 [1] : vector<16x32xf32> to vector<16xf32>
    %162 = vector.shape_cast %161 : vector<16xf32> to vector<16x1xf32>
    %cst_62 = arith.constant 3.200000e+01 : f32
    %163 = vector.broadcast %cst_62 : f32 to vector<16x1xf32>
    %164 = arith.divf %162, %163 : vector<16x1xf32>
    %165 = vector.broadcast %155 : vector<16x1xf32> to vector<16x32xf32>
    %166 = arith.subf %147, %165 : vector<16x32xf32>
    %cst_63 = arith.constant 9.99999974E-6 : f32
    %167 = vector.broadcast %cst_63 : f32 to vector<16x1xf32>
    %168 = arith.addf %164, %167 : vector<16x1xf32>
    %169 = math.rsqrt %168 : vector<16x1xf32>
    %170 = vector.broadcast %169 : vector<16x1xf32> to vector<16x32xf32>
    %171 = arith.mulf %166, %170 : vector<16x32xf32>
    %172 = vector.broadcast %149 : vector<1x32xf32> to vector<16x32xf32>
    %173 = arith.mulf %171, %172 : vector<16x32xf32>
    %174 = vector.broadcast %151 : vector<1x32xf32> to vector<16x32xf32>
    %175 = arith.addf %173, %174 : vector<16x32xf32>
    %176 = arith.truncf %175 : vector<16x32xf32> to vector<16x32xbf16>
    %c0_64 = arith.constant 0 : index
    %c0_65 = arith.constant 0 : index
    %c0_66 = arith.constant 0 : index
    %177 = vector.load %arg10[%c0_64, %c0_65, %c0_66] : memref<2x32x64xbf16, #tpu.memory_space<vmem>>, vector<1x32x64xbf16>
    %178 = vector.shape_cast %177 : vector<1x32x64xbf16> to vector<32x64xbf16>
    %cst_67 = arith.constant dense<0.000000e+00> : vector<16x64xf32>
    %179 = tpu.matmul %176, %178, %cst_67 {dimension_numbers = #tpu.dot_dimension_numbers<[1], [0], [0], [1], [0, 0, 1, 1], [], []>} : vector<16x32xbf16>, vector<32x64xbf16>, vector<16x64xf32> -> vector<16x64xf32>
    %c0_68 = arith.constant 0 : index
    %c0_69 = arith.constant 0 : index
    %c0_70 = arith.constant 0 : index
    %180 = vector.load %arg11[%c0_68, %c0_69, %c0_70] : memref<2x1x64xf32, #tpu.memory_space<vmem>>, vector<1x1x64xf32>
    %181 = vector.shape_cast %180 : vector<1x1x64xf32> to vector<1x64xf32>
    %182 = vector.broadcast %181 : vector<1x64xf32> to vector<16x64xf32>
    %183 = arith.addf %179, %182 : vector<16x64xf32>
    %cst_71 = arith.constant 5.000000e-01 : f32
    %184 = vector.broadcast %cst_71 : f32 to vector<16x64xf32>
    %185 = arith.mulf %184, %183 : vector<16x64xf32>
    %cst_72 = arith.constant 4.471500e-02 : f32
    %186 = vector.broadcast %cst_72 : f32 to vector<16x64xf32>
    %187 = arith.mulf %186, %183 : vector<16x64xf32>
    %188 = arith.mulf %187, %183 : vector<16x64xf32>
    %189 = arith.mulf %188, %183 : vector<16x64xf32>
    %190 = arith.addf %183, %189 : vector<16x64xf32>
    %cst_73 = arith.constant 0.797884583 : f32
    %191 = vector.broadcast %cst_73 : f32 to vector<16x64xf32>
    %192 = arith.mulf %191, %190 : vector<16x64xf32>
    %193 = math.tanh %192 : vector<16x64xf32>
    %cst_74 = arith.constant 1.000000e+00 : f32
    %194 = vector.broadcast %cst_74 : f32 to vector<16x64xf32>
    %195 = arith.addf %194, %193 : vector<16x64xf32>
    %196 = arith.mulf %185, %195 : vector<16x64xf32>
    %197 = arith.truncf %196 : vector<16x64xf32> to vector<16x64xbf16>
    %c0_75 = arith.constant 0 : index
    %c0_76 = arith.constant 0 : index
    %c0_77 = arith.constant 0 : index
    %198 = vector.load %arg12[%c0_75, %c0_76, %c0_77] : memref<2x64x32xbf16, #tpu.memory_space<vmem>>, vector<1x64x32xbf16>
    %199 = vector.shape_cast %198 : vector<1x64x32xbf16> to vector<64x32xbf16>
    %cst_78 = arith.constant dense<0.000000e+00> : vector<16x32xf32>
    %200 = tpu.matmul %197, %199, %cst_78 {dimension_numbers = #tpu.dot_dimension_numbers<[1], [0], [0], [1], [0, 0, 1, 1], [], []>} : vector<16x64xbf16>, vector<64x32xbf16>, vector<16x32xf32> -> vector<16x32xf32>
    %c0_79 = arith.constant 0 : index
    %c0_80 = arith.constant 0 : index
    %c0_81 = arith.constant 0 : index
    %201 = vector.load %arg13[%c0_79, %c0_80, %c0_81] : memref<2x1x32xf32, #tpu.memory_space<vmem>>, vector<1x1x32xf32>
    %202 = vector.shape_cast %201 : vector<1x1x32xf32> to vector<1x32xf32>
    %203 = vector.broadcast %202 : vector<1x32xf32> to vector<16x32xf32>
    %204 = arith.addf %200, %203 : vector<16x32xf32>
    %205 = arith.addf %175, %204 : vector<16x32xf32>
    %c0_82 = arith.constant 0 : index
    %c0_83 = arith.constant 0 : index
    %c0_84 = arith.constant 0 : index
    %206 = vector.load %arg14[%c0_82, %c0_83, %c0_84] : memref<2x1x32xf32, #tpu.memory_space<vmem>>, vector<1x1x32xf32>
    %207 = vector.shape_cast %206 : vector<1x1x32xf32> to vector<1x32xf32>
    %c0_85 = arith.constant 0 : index
    %c0_86 = arith.constant 0 : index
    %c0_87 = arith.constant 0 : index
    %208 = vector.load %arg15[%c0_85, %c0_86, %c0_87] : memref<2x1x32xf32, #tpu.memory_space<vmem>>, vector<1x1x32xf32>
    %209 = vector.shape_cast %208 : vector<1x1x32xf32> to vector<1x32xf32>
    %cst_88 = arith.constant dense<0.000000e+00> : vector<16xf32>
    %210 = vector.multi_reduction <add>, %205, %cst_88 [1] : vector<16x32xf32> to vector<16xf32>
    %211 = vector.shape_cast %210 : vector<16xf32> to vector<16x1xf32>
    %cst_89 = arith.constant 3.200000e+01 : f32
    %212 = vector.broadcast %cst_89 : f32 to vector<16x1xf32>
    %213 = arith.divf %211, %212 : vector<16x1xf32>
    %214 = vector.broadcast %213 : vector<16x1xf32> to vector<16x32xf32>
    %215 = arith.subf %205, %214 : vector<16x32xf32>
    %216 = vector.broadcast %213 : vector<16x1xf32> to vector<16x32xf32>
    %217 = arith.subf %205, %216 : vector<16x32xf32>
    %218 = arith.mulf %215, %217 : vector<16x32xf32>
    %cst_90 = arith.constant dense<0.000000e+00> : vector<16xf32>
    %219 = vector.multi_reduction <add>, %218, %cst_90 [1] : vector<16x32xf32> to vector<16xf32>
    %220 = vector.shape_cast %219 : vector<16xf32> to vector<16x1xf32>
    %cst_91 = arith.constant 3.200000e+01 : f32
    %221 = vector.broadcast %cst_91 : f32 to vector<16x1xf32>
    %222 = arith.divf %220, %221 : vector<16x1xf32>
    %223 = vector.broadcast %213 : vector<16x1xf32> to vector<16x32xf32>
    %224 = arith.subf %205, %223 : vector<16x32xf32>
    %cst_92 = arith.constant 9.99999974E-6 : f32
    %225 = vector.broadcast %cst_92 : f32 to vector<16x1xf32>
    %226 = arith.addf %222, %225 : vector<16x1xf32>
    %227 = math.rsqrt %226 : vector<16x1xf32>
    %228 = vector.broadcast %227 : vector<16x1xf32> to vector<16x32xf32>
    %229 = arith.mulf %224, %228 : vector<16x32xf32>
    %230 = vector.broadcast %207 : vector<1x32xf32> to vector<16x32xf32>
    %231 = arith.mulf %229, %230 : vector<16x32xf32>
    %232 = vector.broadcast %209 : vector<1x32xf32> to vector<16x32xf32>
    %233 = arith.addf %231, %232 : vector<16x32xf32>
    %234 = arith.truncf %233 : vector<16x32xf32> to vector<16x32xbf16>
    %c1 = arith.constant 1 : index
    %c0_93 = arith.constant 0 : index
    %c0_94 = arith.constant 0 : index
    %235 = vector.load %arg4[%c1, %c0_93, %c0_94] : memref<2x32x96xbf16, #tpu.memory_space<vmem>>, vector<1x32x96xbf16>
    %236 = vector.shape_cast %235 : vector<1x32x96xbf16> to vector<32x96xbf16>
    %cst_95 = arith.constant dense<0.000000e+00> : vector<16x96xf32>
    %237 = tpu.matmul %234, %236, %cst_95 {dimension_numbers = #tpu.dot_dimension_numbers<[1], [0], [0], [1], [0, 0, 1, 1], [], []>} : vector<16x32xbf16>, vector<32x96xbf16>, vector<16x96xf32> -> vector<16x96xf32>
    %c1_96 = arith.constant 1 : index
    %c0_97 = arith.constant 0 : index
    %c0_98 = arith.constant 0 : index
    %238 = vector.load %arg5[%c1_96, %c0_97, %c0_98] : memref<2x1x96xf32, #tpu.memory_space<vmem>>, vector<1x1x96xf32>
    %239 = vector.shape_cast %238 : vector<1x1x96xf32> to vector<1x96xf32>
    %240 = vector.broadcast %239 : vector<1x96xf32> to vector<16x96xf32>
    %241 = arith.addf %237, %240 : vector<16x96xf32>
    %242 = vector.extract_strided_slice %241 {offsets = [0, 0], sizes = [16, 32], strides = [1, 1]} : vector<16x96xf32> to vector<16x32xf32>
    %243 = vector.shape_cast %242 : vector<16x32xf32> to vector<2x8x32xf32>
    %244 = vector.extract_strided_slice %241 {offsets = [0, 32], sizes = [16, 32], strides = [1, 1]} : vector<16x96xf32> to vector<16x32xf32>
    %245 = vector.shape_cast %244 : vector<16x32xf32> to vector<2x8x32xf32>
    %246 = vector.extract_strided_slice %241 {offsets = [0, 64], sizes = [16, 32], strides = [1, 1]} : vector<16x96xf32> to vector<16x32xf32>
    %247 = vector.shape_cast %246 : vector<16x32xf32> to vector<2x8x32xf32>
    %248 = vector.extract_strided_slice %243 {offsets = [0, 0, 0], sizes = [2, 8, 8], strides = [1, 1, 1]} : vector<2x8x32xf32> to vector<2x8x8xf32>
    %249 = arith.truncf %248 : vector<2x8x8xf32> to vector<2x8x8xbf16>
    %250 = vector.extract_strided_slice %245 {offsets = [0, 0, 0], sizes = [2, 8, 8], strides = [1, 1, 1]} : vector<2x8x32xf32> to vector<2x8x8xf32>
    %251 = arith.truncf %250 : vector<2x8x8xf32> to vector<2x8x8xbf16>
    %252 = vector.extract_strided_slice %247 {offsets = [0, 0, 0], sizes = [2, 8, 8], strides = [1, 1, 1]} : vector<2x8x32xf32> to vector<2x8x8xf32>
    %253 = arith.truncf %252 : vector<2x8x8xf32> to vector<2x8x8xbf16>
    "tpu.trace_start"() <{level = 10 : i32, message = "bqd,bkd->bqk"}> : () -> ()
    %cst_99 = arith.constant dense<0.000000e+00> : vector<2x8x8xf32>
    %254 = tpu.matmul %249, %251, %cst_99 {dimension_numbers = #tpu.dot_dimension_numbers<[2], [2], [1], [1], [0, 0, 0, 1, 1, 1], [0], [0]>} : vector<2x8x8xbf16>, vector<2x8x8xbf16>, vector<2x8x8xf32> -> vector<2x8x8xf32>
    "tpu.trace_stop"() : () -> ()
    %cst_100 = arith.constant 0.353553385 : f32
    %255 = vector.broadcast %cst_100 : f32 to vector<2x8x8xf32>
    %256 = arith.mulf %254, %255 : vector<2x8x8xf32>
    %257 = arith.addf %256, %27 : vector<2x8x8xf32>
    %cst_101 = arith.constant dense<0xFF800000> : vector<2x8xf32>
    %258 = vector.multi_reduction <maximumf>, %257, %cst_101 [2] : vector<2x8x8xf32> to vector<2x8xf32>
    %259 = vector.shape_cast %258 : vector<2x8xf32> to vector<2x8x1xf32>
    %260 = vector.broadcast %259 : vector<2x8x1xf32> to vector<2x8x8xf32>
    %261 = arith.subf %257, %260 : vector<2x8x8xf32>
    %262 = math.exp %261 : vector<2x8x8xf32>
    %cst_102 = arith.constant dense<0.000000e+00> : vector<2x8xf32>
    %263 = vector.multi_reduction <add>, %262, %cst_102 [2] : vector<2x8x8xf32> to vector<2x8xf32>
    %264 = vector.shape_cast %263 : vector<2x8xf32> to vector<2x8x1xf32>
    %265 = tpu.reciprocal %264 {approx = true} : vector<2x8x1xf32> -> vector<2x8x1xf32>
    %266 = vector.broadcast %265 : vector<2x8x1xf32> to vector<2x8x8xf32>
    %267 = arith.mulf %262, %266 : vector<2x8x8xf32>
    %268 = arith.truncf %267 : vector<2x8x8xf32> to vector<2x8x8xbf16>
    "tpu.trace_start"() <{level = 10 : i32, message = "bqk,bkd->bqd"}> : () -> ()
    %cst_103 = arith.constant dense<0.000000e+00> : vector<2x8x8xf32>
    %269 = tpu.matmul %268, %253, %cst_103 {dimension_numbers = #tpu.dot_dimension_numbers<[2], [1], [1], [2], [0, 0, 0, 1, 1, 2], [0], [0]>} : vector<2x8x8xbf16>, vector<2x8x8xbf16>, vector<2x8x8xf32> -> vector<2x8x8xf32>
    "tpu.trace_stop"() : () -> ()
    %270 = vector.shape_cast %269 : vector<2x8x8xf32> to vector<16x8xf32>
    %c0_104 = arith.constant 0 : index
    %c0_105 = arith.constant 0 : index
    %271 = vector.load %arg17[%c0_104, %c0_105] : memref<16x32xf32, #tpu.memory_space<vmem>>, vector<16x8xf32>
    tpu.vector_store %arg17[%c0_104, %c0_105], %270 {strides = array<i32>} : memref<16x32xf32, #tpu.memory_space<vmem>>, vector<16x8xf32>,
    %272 = vector.extract_strided_slice %243 {offsets = [0, 0, 8], sizes = [2, 8, 8], strides = [1, 1, 1]} : vector<2x8x32xf32> to vector<2x8x8xf32>
    %273 = arith.truncf %272 : vector<2x8x8xf32> to vector<2x8x8xbf16>
    %274 = vector.extract_strided_slice %245 {offsets = [0, 0, 8], sizes = [2, 8, 8], strides = [1, 1, 1]} : vector<2x8x32xf32> to vector<2x8x8xf32>
    %275 = arith.truncf %274 : vector<2x8x8xf32> to vector<2x8x8xbf16>
    %276 = vector.extract_strided_slice %247 {offsets = [0, 0, 8], sizes = [2, 8, 8], strides = [1, 1, 1]} : vector<2x8x32xf32> to vector<2x8x8xf32>
    %277 = arith.truncf %276 : vector<2x8x8xf32> to vector<2x8x8xbf16>
    "tpu.trace_start"() <{level = 10 : i32, message = "bqd,bkd->bqk"}> : () -> ()
    %cst_106 = arith.constant dense<0.000000e+00> : vector<2x8x8xf32>
    %278 = tpu.matmul %273, %275, %cst_106 {dimension_numbers = #tpu.dot_dimension_numbers<[2], [2], [1], [1], [0, 0, 0, 1, 1, 1], [0], [0]>} : vector<2x8x8xbf16>, vector<2x8x8xbf16>, vector<2x8x8xf32> -> vector<2x8x8xf32>
    "tpu.trace_stop"() : () -> ()
    %cst_107 = arith.constant 0.353553385 : f32
    %279 = vector.broadcast %cst_107 : f32 to vector<2x8x8xf32>
    %280 = arith.mulf %278, %279 : vector<2x8x8xf32>
    %281 = arith.addf %280, %27 : vector<2x8x8xf32>
    %cst_108 = arith.constant dense<0xFF800000> : vector<2x8xf32>
    %282 = vector.multi_reduction <maximumf>, %281, %cst_108 [2] : vector<2x8x8xf32> to vector<2x8xf32>
    %283 = vector.shape_cast %282 : vector<2x8xf32> to vector<2x8x1xf32>
    %284 = vector.broadcast %283 : vector<2x8x1xf32> to vector<2x8x8xf32>
    %285 = arith.subf %281, %284 : vector<2x8x8xf32>
    %286 = math.exp %285 : vector<2x8x8xf32>
    %cst_109 = arith.constant dense<0.000000e+00> : vector<2x8xf32>
    %287 = vector.multi_reduction <add>, %286, %cst_109 [2] : vector<2x8x8xf32> to vector<2x8xf32>
    %288 = vector.shape_cast %287 : vector<2x8xf32> to vector<2x8x1xf32>
    %289 = tpu.reciprocal %288 {approx = true} : vector<2x8x1xf32> -> vector<2x8x1xf32>
    %290 = vector.broadcast %289 : vector<2x8x1xf32> to vector<2x8x8xf32>
    %291 = arith.mulf %286, %290 : vector<2x8x8xf32>
    %292 = arith.truncf %291 : vector<2x8x8xf32> to vector<2x8x8xbf16>
    "tpu.trace_start"() <{level = 10 : i32, message = "bqk,bkd->bqd"}> : () -> ()
    %cst_110 = arith.constant dense<0.000000e+00> : vector<2x8x8xf32>
    %293 = tpu.matmul %292, %277, %cst_110 {dimension_numbers = #tpu.dot_dimension_numbers<[2], [1], [1], [2], [0, 0, 0, 1, 1, 2], [0], [0]>} : vector<2x8x8xbf16>, vector<2x8x8xbf16>, vector<2x8x8xf32> -> vector<2x8x8xf32>
    "tpu.trace_stop"() : () -> ()
    %294 = vector.shape_cast %293 : vector<2x8x8xf32> to vector<16x8xf32>
    %c0_111 = arith.constant 0 : index
    %c8_112 = arith.constant 8 : index
    %295 = vector.load %arg17[%c0_111, %c8_112] : memref<16x32xf32, #tpu.memory_space<vmem>>, vector<16x8xf32>
    tpu.vector_store %arg17[%c0_111, %c8_112], %294 {strides = array<i32>} : memref<16x32xf32, #tpu.memory_space<vmem>>, vector<16x8xf32>,
    %296 = vector.extract_strided_slice %243 {offsets = [0, 0, 16], sizes = [2, 8, 8], strides = [1, 1, 1]} : vector<2x8x32xf32> to vector<2x8x8xf32>
    %297 = arith.truncf %296 : vector<2x8x8xf32> to vector<2x8x8xbf16>
    %298 = vector.extract_strided_slice %245 {offsets = [0, 0, 16], sizes = [2, 8, 8], strides = [1, 1, 1]} : vector<2x8x32xf32> to vector<2x8x8xf32>
    %299 = arith.truncf %298 : vector<2x8x8xf32> to vector<2x8x8xbf16>
    %300 = vector.extract_strided_slice %247 {offsets = [0, 0, 16], sizes = [2, 8, 8], strides = [1, 1, 1]} : vector<2x8x32xf32> to vector<2x8x8xf32>
    %301 = arith.truncf %300 : vector<2x8x8xf32> to vector<2x8x8xbf16>
    "tpu.trace_start"() <{level = 10 : i32, message = "bqd,bkd->bqk"}> : () -> ()
    %cst_113 = arith.constant dense<0.000000e+00> : vector<2x8x8xf32>
    %302 = tpu.matmul %297, %299, %cst_113 {dimension_numbers = #tpu.dot_dimension_numbers<[2], [2], [1], [1], [0, 0, 0, 1, 1, 1], [0], [0]>} : vector<2x8x8xbf16>, vector<2x8x8xbf16>, vector<2x8x8xf32> -> vector<2x8x8xf32>
    "tpu.trace_stop"() : () -> ()
    %cst_114 = arith.constant 0.353553385 : f32
    %303 = vector.broadcast %cst_114 : f32 to vector<2x8x8xf32>
    %304 = arith.mulf %302, %303 : vector<2x8x8xf32>
    %305 = arith.addf %304, %27 : vector<2x8x8xf32>
    %cst_115 = arith.constant dense<0xFF800000> : vector<2x8xf32>
    %306 = vector.multi_reduction <maximumf>, %305, %cst_115 [2] : vector<2x8x8xf32> to vector<2x8xf32>
    %307 = vector.shape_cast %306 : vector<2x8xf32> to vector<2x8x1xf32>
    %308 = vector.broadcast %307 : vector<2x8x1xf32> to vector<2x8x8xf32>
    %309 = arith.subf %305, %308 : vector<2x8x8xf32>
    %310 = math.exp %309 : vector<2x8x8xf32>
    %cst_116 = arith.constant dense<0.000000e+00> : vector<2x8xf32>
    %311 = vector.multi_reduction <add>, %310, %cst_116 [2] : vector<2x8x8xf32> to vector<2x8xf32>
    %312 = vector.shape_cast %311 : vector<2x8xf32> to vector<2x8x1xf32>
    %313 = tpu.reciprocal %312 {approx = true} : vector<2x8x1xf32> -> vector<2x8x1xf32>
    %314 = vector.broadcast %313 : vector<2x8x1xf32> to vector<2x8x8xf32>
    %315 = arith.mulf %310, %314 : vector<2x8x8xf32>
    %316 = arith.truncf %315 : vector<2x8x8xf32> to vector<2x8x8xbf16>
    "tpu.trace_start"() <{level = 10 : i32, message = "bqk,bkd->bqd"}> : () -> ()
    %cst_117 = arith.constant dense<0.000000e+00> : vector<2x8x8xf32>
    %317 = tpu.matmul %316, %301, %cst_117 {dimension_numbers = #tpu.dot_dimension_numbers<[2], [1], [1], [2], [0, 0, 0, 1, 1, 2], [0], [0]>} : vector<2x8x8xbf16>, vector<2x8x8xbf16>, vector<2x8x8xf32> -> vector<2x8x8xf32>
    "tpu.trace_stop"() : () -> ()
    %318 = vector.shape_cast %317 : vector<2x8x8xf32> to vector<16x8xf32>
    %c0_118 = arith.constant 0 : index
    %c16_119 = arith.constant 16 : index
    %319 = vector.load %arg17[%c0_118, %c16_119] : memref<16x32xf32, #tpu.memory_space<vmem>>, vector<16x8xf32>
    tpu.vector_store %arg17[%c0_118, %c16_119], %318 {strides = array<i32>} : memref<16x32xf32, #tpu.memory_space<vmem>>, vector<16x8xf32>,
    %320 = vector.extract_strided_slice %243 {offsets = [0, 0, 24], sizes = [2, 8, 8], strides = [1, 1, 1]} : vector<2x8x32xf32> to vector<2x8x8xf32>
    %321 = arith.truncf %320 : vector<2x8x8xf32> to vector<2x8x8xbf16>
    %322 = vector.extract_strided_slice %245 {offsets = [0, 0, 24], sizes = [2, 8, 8], strides = [1, 1, 1]} : vector<2x8x32xf32> to vector<2x8x8xf32>
    %323 = arith.truncf %322 : vector<2x8x8xf32> to vector<2x8x8xbf16>
    %324 = vector.extract_strided_slice %247 {offsets = [0, 0, 24], sizes = [2, 8, 8], strides = [1, 1, 1]} : vector<2x8x32xf32> to vector<2x8x8xf32>
    %325 = arith.truncf %324 : vector<2x8x8xf32> to vector<2x8x8xbf16>
    "tpu.trace_start"() <{level = 10 : i32, message = "bqd,bkd->bqk"}> : () -> ()
    %cst_120 = arith.constant dense<0.000000e+00> : vector<2x8x8xf32>
    %326 = tpu.matmul %321, %323, %cst_120 {dimension_numbers = #tpu.dot_dimension_numbers<[2], [2], [1], [1], [0, 0, 0, 1, 1, 1], [0], [0]>} : vector<2x8x8xbf16>, vector<2x8x8xbf16>, vector<2x8x8xf32> -> vector<2x8x8xf32>
    "tpu.trace_stop"() : () -> ()
    %cst_121 = arith.constant 0.353553385 : f32
    %327 = vector.broadcast %cst_121 : f32 to vector<2x8x8xf32>
    %328 = arith.mulf %326, %327 : vector<2x8x8xf32>
    %329 = arith.addf %328, %27 : vector<2x8x8xf32>
    %cst_122 = arith.constant dense<0xFF800000> : vector<2x8xf32>
    %330 = vector.multi_reduction <maximumf>, %329, %cst_122 [2] : vector<2x8x8xf32> to vector<2x8xf32>
    %331 = vector.shape_cast %330 : vector<2x8xf32> to vector<2x8x1xf32>
    %332 = vector.broadcast %331 : vector<2x8x1xf32> to vector<2x8x8xf32>
    %333 = arith.subf %329, %332 : vector<2x8x8xf32>
    %334 = math.exp %333 : vector<2x8x8xf32>
    %cst_123 = arith.constant dense<0.000000e+00> : vector<2x8xf32>
    %335 = vector.multi_reduction <add>, %334, %cst_123 [2] : vector<2x8x8xf32> to vector<2x8xf32>
    %336 = vector.shape_cast %335 : vector<2x8xf32> to vector<2x8x1xf32>
    %337 = tpu.reciprocal %336 {approx = true} : vector<2x8x1xf32> -> vector<2x8x1xf32>
    %338 = vector.broadcast %337 : vector<2x8x1xf32> to vector<2x8x8xf32>
    %339 = arith.mulf %334, %338 : vector<2x8x8xf32>
    %340 = arith.truncf %339 : vector<2x8x8xf32> to vector<2x8x8xbf16>
    "tpu.trace_start"() <{level = 10 : i32, message = "bqk,bkd->bqd"}> : () -> ()
    %cst_124 = arith.constant dense<0.000000e+00> : vector<2x8x8xf32>
    %341 = tpu.matmul %340, %325, %cst_124 {dimension_numbers = #tpu.dot_dimension_numbers<[2], [1], [1], [2], [0, 0, 0, 1, 1, 2], [0], [0]>} : vector<2x8x8xbf16>, vector<2x8x8xbf16>, vector<2x8x8xf32> -> vector<2x8x8xf32>
    "tpu.trace_stop"() : () -> ()
    %342 = vector.shape_cast %341 : vector<2x8x8xf32> to vector<16x8xf32>
    %c0_125 = arith.constant 0 : index
    %c24_126 = arith.constant 24 : index
    %343 = vector.load %arg17[%c0_125, %c24_126] : memref<16x32xf32, #tpu.memory_space<vmem>>, vector<16x8xf32>
    tpu.vector_store %arg17[%c0_125, %c24_126], %342 {strides = array<i32>} : memref<16x32xf32, #tpu.memory_space<vmem>>, vector<16x8xf32>,
    %c0_127 = arith.constant 0 : index
    %c0_128 = arith.constant 0 : index
    %344 = vector.load %arg17[%c0_127, %c0_128] : memref<16x32xf32, #tpu.memory_space<vmem>>, vector<16x32xf32>
    %345 = arith.truncf %344 : vector<16x32xf32> to vector<16x32xbf16>
    %c1_129 = arith.constant 1 : index
    %c0_130 = arith.constant 0 : index
    %c0_131 = arith.constant 0 : index
    %346 = vector.load %arg6[%c1_129, %c0_130, %c0_131] : memref<2x32x32xbf16, #tpu.memory_space<vmem>>, vector<1x32x32xbf16>
    %347 = vector.shape_cast %346 : vector<1x32x32xbf16> to vector<32x32xbf16>
    %cst_132 = arith.constant dense<0.000000e+00> : vector<16x32xf32>
    %348 = tpu.matmul %345, %347, %cst_132 {dimension_numbers = #tpu.dot_dimension_numbers<[1], [0], [0], [1], [0, 0, 1, 1], [], []>} : vector<16x32xbf16>, vector<32x32xbf16>, vector<16x32xf32> -> vector<16x32xf32>
    %c1_133 = arith.constant 1 : index
    %c0_134 = arith.constant 0 : index
    %c0_135 = arith.constant 0 : index
    %349 = vector.load %arg7[%c1_133, %c0_134, %c0_135] : memref<2x1x32xf32, #tpu.memory_space<vmem>>, vector<1x1x32xf32>
    %350 = vector.shape_cast %349 : vector<1x1x32xf32> to vector<1x32xf32>
    %351 = vector.broadcast %350 : vector<1x32xf32> to vector<16x32xf32>
    %352 = arith.addf %348, %351 : vector<16x32xf32>
    %353 = arith.addf %233, %352 : vector<16x32xf32>
    %c1_136 = arith.constant 1 : index
    %c0_137 = arith.constant 0 : index
    %c0_138 = arith.constant 0 : index
    %354 = vector.load %arg8[%c1_136, %c0_137, %c0_138] : memref<2x1x32xf32, #tpu.memory_space<vmem>>, vector<1x1x32xf32>
    %355 = vector.shape_cast %354 : vector<1x1x32xf32> to vector<1x32xf32>
    %c1_139 = arith.constant 1 : index
    %c0_140 = arith.constant 0 : index
    %c0_141 = arith.constant 0 : index
    %356 = vector.load %arg9[%c1_139, %c0_140, %c0_141] : memref<2x1x32xf32, #tpu.memory_space<vmem>>, vector<1x1x32xf32>
    %357 = vector.shape_cast %356 : vector<1x1x32xf32> to vector<1x32xf32>
    %cst_142 = arith.constant dense<0.000000e+00> : vector<16xf32>
    %358 = vector.multi_reduction <add>, %353, %cst_142 [1] : vector<16x32xf32> to vector<16xf32>
    %359 = vector.shape_cast %358 : vector<16xf32> to vector<16x1xf32>
    %cst_143 = arith.constant 3.200000e+01 : f32
    %360 = vector.broadcast %cst_143 : f32 to vector<16x1xf32>
    %361 = arith.divf %359, %360 : vector<16x1xf32>
    %362 = vector.broadcast %361 : vector<16x1xf32> to vector<16x32xf32>
    %363 = arith.subf %353, %362 : vector<16x32xf32>
    %364 = vector.broadcast %361 : vector<16x1xf32> to vector<16x32xf32>
    %365 = arith.subf %353, %364 : vector<16x32xf32>
    %366 = arith.mulf %363, %365 : vector<16x32xf32>
    %cst_144 = arith.constant dense<0.000000e+00> : vector<16xf32>
    %367 = vector.multi_reduction <add>, %366, %cst_144 [1] : vector<16x32xf32> to vector<16xf32>
    %368 = vector.shape_cast %367 : vector<16xf32> to vector<16x1xf32>
    %cst_145 = arith.constant 3.200000e+01 : f32
    %369 = vector.broadcast %cst_145 : f32 to vector<16x1xf32>
    %370 = arith.divf %368, %369 : vector<16x1xf32>
    %371 = vector.broadcast %361 : vector<16x1xf32> to vector<16x32xf32>
    %372 = arith.subf %353, %371 : vector<16x32xf32>
    %cst_146 = arith.constant 9.99999974E-6 : f32
    %373 = vector.broadcast %cst_146 : f32 to vector<16x1xf32>
    %374 = arith.addf %370, %373 : vector<16x1xf32>
    %375 = math.rsqrt %374 : vector<16x1xf32>
    %376 = vector.broadcast %375 : vector<16x1xf32> to vector<16x32xf32>
    %377 = arith.mulf %372, %376 : vector<16x32xf32>
    %378 = vector.broadcast %355 : vector<1x32xf32> to vector<16x32xf32>
    %379 = arith.mulf %377, %378 : vector<16x32xf32>
    %380 = vector.broadcast %357 : vector<1x32xf32> to vector<16x32xf32>
    %381 = arith.addf %379, %380 : vector<16x32xf32>
    %382 = arith.truncf %381 : vector<16x32xf32> to vector<16x32xbf16>
    %c1_147 = arith.constant 1 : index
    %c0_148 = arith.constant 0 : index
    %c0_149 = arith.constant 0 : index
    %383 = vector.load %arg10[%c1_147, %c0_148, %c0_149] : memref<2x32x64xbf16, #tpu.memory_space<vmem>>, vector<1x32x64xbf16>
    %384 = vector.shape_cast %383 : vector<1x32x64xbf16> to vector<32x64xbf16>
    %cst_150 = arith.constant dense<0.000000e+00> : vector<16x64xf32>
    %385 = tpu.matmul %382, %384, %cst_150 {dimension_numbers = #tpu.dot_dimension_numbers<[1], [0], [0], [1], [0, 0, 1, 1], [], []>} : vector<16x32xbf16>, vector<32x64xbf16>, vector<16x64xf32> -> vector<16x64xf32>
    %c1_151 = arith.constant 1 : index
    %c0_152 = arith.constant 0 : index
    %c0_153 = arith.constant 0 : index
    %386 = vector.load %arg11[%c1_151, %c0_152, %c0_153] : memref<2x1x64xf32, #tpu.memory_space<vmem>>, vector<1x1x64xf32>
    %387 = vector.shape_cast %386 : vector<1x1x64xf32> to vector<1x64xf32>
    %388 = vector.broadcast %387 : vector<1x64xf32> to vector<16x64xf32>
    %389 = arith.addf %385, %388 : vector<16x64xf32>
    %cst_154 = arith.constant 5.000000e-01 : f32
    %390 = vector.broadcast %cst_154 : f32 to vector<16x64xf32>
    %391 = arith.mulf %390, %389 : vector<16x64xf32>
    %cst_155 = arith.constant 4.471500e-02 : f32
    %392 = vector.broadcast %cst_155 : f32 to vector<16x64xf32>
    %393 = arith.mulf %392, %389 : vector<16x64xf32>
    %394 = arith.mulf %393, %389 : vector<16x64xf32>
    %395 = arith.mulf %394, %389 : vector<16x64xf32>
    %396 = arith.addf %389, %395 : vector<16x64xf32>
    %cst_156 = arith.constant 0.797884583 : f32
    %397 = vector.broadcast %cst_156 : f32 to vector<16x64xf32>
    %398 = arith.mulf %397, %396 : vector<16x64xf32>
    %399 = math.tanh %398 : vector<16x64xf32>
    %cst_157 = arith.constant 1.000000e+00 : f32
    %400 = vector.broadcast %cst_157 : f32 to vector<16x64xf32>
    %401 = arith.addf %400, %399 : vector<16x64xf32>
    %402 = arith.mulf %391, %401 : vector<16x64xf32>
    %403 = arith.truncf %402 : vector<16x64xf32> to vector<16x64xbf16>
    %c1_158 = arith.constant 1 : index
    %c0_159 = arith.constant 0 : index
    %c0_160 = arith.constant 0 : index
    %404 = vector.load %arg12[%c1_158, %c0_159, %c0_160] : memref<2x64x32xbf16, #tpu.memory_space<vmem>>, vector<1x64x32xbf16>
    %405 = vector.shape_cast %404 : vector<1x64x32xbf16> to vector<64x32xbf16>
    %cst_161 = arith.constant dense<0.000000e+00> : vector<16x32xf32>
    %406 = tpu.matmul %403, %405, %cst_161 {dimension_numbers = #tpu.dot_dimension_numbers<[1], [0], [0], [1], [0, 0, 1, 1], [], []>} : vector<16x64xbf16>, vector<64x32xbf16>, vector<16x32xf32> -> vector<16x32xf32>
    %c1_162 = arith.constant 1 : index
    %c0_163 = arith.constant 0 : index
    %c0_164 = arith.constant 0 : index
    %407 = vector.load %arg13[%c1_162, %c0_163, %c0_164] : memref<2x1x32xf32, #tpu.memory_space<vmem>>, vector<1x1x32xf32>
    %408 = vector.shape_cast %407 : vector<1x1x32xf32> to vector<1x32xf32>
    %409 = vector.broadcast %408 : vector<1x32xf32> to vector<16x32xf32>
    %410 = arith.addf %406, %409 : vector<16x32xf32>
    %411 = arith.addf %381, %410 : vector<16x32xf32>
    %c1_165 = arith.constant 1 : index
    %c0_166 = arith.constant 0 : index
    %c0_167 = arith.constant 0 : index
    %412 = vector.load %arg14[%c1_165, %c0_166, %c0_167] : memref<2x1x32xf32, #tpu.memory_space<vmem>>, vector<1x1x32xf32>
    %413 = vector.shape_cast %412 : vector<1x1x32xf32> to vector<1x32xf32>
    %c1_168 = arith.constant 1 : index
    %c0_169 = arith.constant 0 : index
    %c0_170 = arith.constant 0 : index
    %414 = vector.load %arg15[%c1_168, %c0_169, %c0_170] : memref<2x1x32xf32, #tpu.memory_space<vmem>>, vector<1x1x32xf32>
    %415 = vector.shape_cast %414 : vector<1x1x32xf32> to vector<1x32xf32>
    %cst_171 = arith.constant dense<0.000000e+00> : vector<16xf32>
    %416 = vector.multi_reduction <add>, %411, %cst_171 [1] : vector<16x32xf32> to vector<16xf32>
    %417 = vector.shape_cast %416 : vector<16xf32> to vector<16x1xf32>
    %cst_172 = arith.constant 3.200000e+01 : f32
    %418 = vector.broadcast %cst_172 : f32 to vector<16x1xf32>
    %419 = arith.divf %417, %418 : vector<16x1xf32>
    %420 = vector.broadcast %419 : vector<16x1xf32> to vector<16x32xf32>
    %421 = arith.subf %411, %420 : vector<16x32xf32>
    %422 = vector.broadcast %419 : vector<16x1xf32> to vector<16x32xf32>
    %423 = arith.subf %411, %422 : vector<16x32xf32>
    %424 = arith.mulf %421, %423 : vector<16x32xf32>
    %cst_173 = arith.constant dense<0.000000e+00> : vector<16xf32>
    %425 = vector.multi_reduction <add>, %424, %cst_173 [1] : vector<16x32xf32> to vector<16xf32>
    %426 = vector.shape_cast %425 : vector<16xf32> to vector<16x1xf32>
    %cst_174 = arith.constant 3.200000e+01 : f32
    %427 = vector.broadcast %cst_174 : f32 to vector<16x1xf32>
    %428 = arith.divf %426, %427 : vector<16x1xf32>
    %429 = vector.broadcast %419 : vector<16x1xf32> to vector<16x32xf32>
    %430 = arith.subf %411, %429 : vector<16x32xf32>
    %cst_175 = arith.constant 9.99999974E-6 : f32
    %431 = vector.broadcast %cst_175 : f32 to vector<16x1xf32>
    %432 = arith.addf %428, %431 : vector<16x1xf32>
    %433 = math.rsqrt %432 : vector<16x1xf32>
    %434 = vector.broadcast %433 : vector<16x1xf32> to vector<16x32xf32>
    %435 = arith.mulf %430, %434 : vector<16x32xf32>
    %436 = vector.broadcast %413 : vector<1x32xf32> to vector<16x32xf32>
    %437 = arith.mulf %435, %436 : vector<16x32xf32>
    %438 = vector.broadcast %415 : vector<1x32xf32> to vector<16x32xf32>
    %439 = arith.addf %437, %438 : vector<16x32xf32>
    %c0_176 = arith.constant 0 : index
    %c0_177 = arith.constant 0 : index
    %440 = vector.load %arg16[%c0_176, %c0_177] : memref<16x32xf32, #tpu.memory_space<vmem>>, vector<16x32xf32>
    tpu.vector_store %arg16[%c0_176, %c0_177], %439 {strides = array<i32>} : memref<16x32xf32, #tpu.memory_space<vmem>>, vector<16x32xf32>,
    return
  }
}

</mosaic_0001>

<llo_original>
// kernel: roberta_classifier_forward.1
$region0: #{roberta_classifier_forward.1}
  #allocation0 [shape = 'u32[]', space=smem, size = 0x4, offset = 0x4, fixed_abs, tag = 'smem constant byte address 0x4 - core index']
  #allocation1 [shape = 'u32[144,128]{1,0:T(1,128)}', space=vmem, size = 0x12000, scoped, tag = 'internal scratch']
  #allocation2 [shape = 'f32[16,32]{1,0:T(8,128)}', space=vmem, size = 0x2000, scoped, tag = 'scratch operand']
  %s0 = inlined_call_operand.vmem [shape: f32[16,32], index: 0, kind: input, shape index: {}]
  %s1 = inlined_call_operand.vmem [shape: f32[2,8,8], index: 1, kind: input, shape index: {}]
  %s2 = inlined_call_operand.vmem [shape: f32[1,32], index: 2, kind: input, shape index: {}]
  %s3 = inlined_call_operand.vmem [shape: f32[1,32], index: 3, kind: input, shape index: {}]
  %s4 = inlined_call_operand.vmem [shape: bf16[2,32,96], index: 4, kind: input, shape index: {}]
  %s5 = inlined_call_operand.vmem [shape: f32[2,1,96], index: 5, kind: input, shape index: {}]
  %s6 = inlined_call_operand.vmem [shape: bf16[2,32,32], index: 6, kind: input, shape index: {}]
  %s7 = inlined_call_operand.vmem [shape: f32[2,1,32], index: 7, kind: input, shape index: {}, may-alias: {7,9,13,15}]
  %s8 = inlined_call_operand.vmem [shape: f32[2,1,32], index: 8, kind: input, shape index: {}, may-alias: {8,14}]
  %s9 = inlined_call_operand.vmem [shape: f32[2,1,32], index: 9, kind: input, shape index: {}, may-alias: {7,9,13,15}]
  %s10 = inlined_call_operand.vmem [shape: bf16[2,32,64], index: 10, kind: input, shape index: {}]
  %s11 = inlined_call_operand.vmem [shape: f32[2,1,64], index: 11, kind: input, shape index: {}]
  %s12 = inlined_call_operand.vmem [shape: bf16[2,64,32], index: 12, kind: input, shape index: {}]
  %s13 = inlined_call_operand.vmem [shape: f32[2,1,32], index: 13, kind: input, shape index: {}, may-alias: {7,9,13,15}]
  %s14 = inlined_call_operand.vmem [shape: f32[2,1,32], index: 14, kind: input, shape index: {}, may-alias: {8,14}]
  %s15 = inlined_call_operand.vmem [shape: f32[2,1,32], index: 15, kind: input, shape index: {}, may-alias: {7,9,13,15}]
  %s16 = inlined_call_operand.vmem [shape: f32[16,32], index: 16, kind: output, shape index: {}]
  %s17 = sld [smem:[#allocation0]]
  $region74: #{roberta_classifier_forward.1} parent=0
    _
  %s19 = ssub.s32 1, %s17
  %s20 = scalar_select 0, %s19, %s17
  // Predicated region
  $region2: #{roberta_classifier_forward.1} parent=0 // pred_check
    _
  $region3: #{roberta_classifier_forward.1} parent=0 // pred_check_branch
    %22 = sbr.rel (0) target = $region5
  $region4: #{roberta_classifier_forward.1} parent=0 // pred_region
    _
  $region5: #{roberta_classifier_forward.1} parent=0 // pred_fallthru
    _
  // Predicated region
  $region6: #{roberta_classifier_forward.1} parent=0 // pred_check
    _
  $region7: #{roberta_classifier_forward.1} parent=0 // pred_check_branch
    %24 = sbr.rel (0) target = $region9
  $region8: #{roberta_classifier_forward.1} parent=0 // pred_region
    _
  $region9: #{roberta_classifier_forward.1} parent=0 // pred_fallthru
    _
  // Predicated region
  $region10: #{roberta_classifier_forward.1} parent=0 // pred_check
    _
  $region11: #{roberta_classifier_forward.1} parent=0 // pred_check_branch
    %26 = sbr.rel (0) target = $region13
  $region12: #{roberta_classifier_forward.1} parent=0 // pred_region
    _
  $region13: #{roberta_classifier_forward.1} parent=0 // pred_fallthru
    _
  // Predicated region
  $region14: #{roberta_classifier_forward.1} parent=0 // pred_check
    _
  $region15: #{roberta_classifier_forward.1} parent=0 // pred_check_branch
    %28 = sbr.rel (0) target = $region17
  $region16: #{roberta_classifier_forward.1} parent=0 // pred_region
    _
  $region17: #{roberta_classifier_forward.1} parent=0 // pred_fallthru
    _
  // Predicated region
  $region18: #{roberta_classifier_forward.1} parent=0 // pred_check
    _
  $region19: #{roberta_classifier_forward.1} parent=0 // pred_check_branch
    %30 = sbr.rel (0) target = $region21
  $region20: #{roberta_classifier_forward.1} parent=0 // pred_region
    _
  $region21: #{roberta_classifier_forward.1} parent=0 // pred_fallthru
    _
  // Predicated region
  $region22: #{roberta_classifier_forward.1} parent=0 // pred_check
    _
  $region23: #{roberta_classifier_forward.1} parent=0 // pred_check_branch
    %32 = sbr.rel (0) target = $region25
  $region24: #{roberta_classifier_forward.1} parent=0 // pred_region
    _
  $region25: #{roberta_classifier_forward.1} parent=0 // pred_fallthru
    _
  // Predicated region
  $region26: #{roberta_classifier_forward.1} parent=0 // pred_check
    _
  $region27: #{roberta_classifier_forward.1} parent=0 // pred_check_branch
    %34 = sbr.rel (0) target = $region29
  $region28: #{roberta_classifier_forward.1} parent=0 // pred_region
    _
  $region29: #{roberta_classifier_forward.1} parent=0 // pred_fallthru
    _
  // Predicated region
  $region30: #{roberta_classifier_forward.1} parent=0 // pred_check
    _
  $region31: #{roberta_classifier_forward.1} parent=0 // pred_check_branch
    %36 = sbr.rel (0) target = $region33
  $region32: #{roberta_classifier_forward.1} parent=0 // pred_region
    _
  $region33: #{roberta_classifier_forward.1} parent=0 // pred_fallthru
    _
  // Predicated region
  $region34: #{roberta_classifier_forward.1} parent=0 // pred_check
    _
  $region35: #{roberta_classifier_forward.1} parent=0 // pred_check_branch
    %38 = sbr.rel (0) target = $region37
  $region36: #{roberta_classifier_forward.1} parent=0 // pred_region
    _
  $region37: #{roberta_classifier_forward.1} parent=0 // pred_fallthru
    _
  // Predicated region
  $region38: #{roberta_classifier_forward.1} parent=0 // pred_check
    _
  $region39: #{roberta_classifier_forward.1} parent=0 // pred_check_branch
    %40 = sbr.rel (0) target = $region41
  $region40: #{roberta_classifier_forward.1} parent=0 // pred_region
    _
  $region41: #{roberta_classifier_forward.1} parent=0 // pred_fallthru
    _
  // Predicated region
  $region42: #{roberta_classifier_forward.1} parent=0 // pred_check
    _
  $region43: #{roberta_classifier_forward.1} parent=0 // pred_check_branch
    %42 = sbr.rel (0) target = $region45
  $region44: #{roberta_classifier_forward.1} parent=0 // pred_region
    _
  $region45: #{roberta_classifier_forward.1} parent=0 // pred_fallthru
    _
  // Predicated region
  $region46: #{roberta_classifier_forward.1} parent=0 // pred_check
    _
  $region47: #{roberta_classifier_forward.1} parent=0 // pred_check_branch
    %44 = sbr.rel (0) target = $region49
  $region48: #{roberta_classifier_forward.1} parent=0 // pred_region
    _
  $region49: #{roberta_classifier_forward.1} parent=0 // pred_fallthru
    _
  // Predicated region
  $region50: #{roberta_classifier_forward.1} parent=0 // pred_check
    _
  $region51: #{roberta_classifier_forward.1} parent=0 // pred_check_branch
    %46 = sbr.rel (0) target = $region53
  $region52: #{roberta_classifier_forward.1} parent=0 // pred_region
    _
  $region53: #{roberta_classifier_forward.1} parent=0 // pred_fallthru
    _
  // Predicated region
  $region54: #{roberta_classifier_forward.1} parent=0 // pred_check
    _
  $region55: #{roberta_classifier_forward.1} parent=0 // pred_check_branch
    %48 = sbr.rel (0) target = $region57
  $region56: #{roberta_classifier_forward.1} parent=0 // pred_region
    _
  $region57: #{roberta_classifier_forward.1} parent=0 // pred_fallthru
    _
  // Predicated region
  $region58: #{roberta_classifier_forward.1} parent=0 // pred_check
    _
  $region59: #{roberta_classifier_forward.1} parent=0 // pred_check_branch
    %50 = sbr.rel (0) target = $region61
  $region60: #{roberta_classifier_forward.1} parent=0 // pred_region
    _
  $region61: #{roberta_classifier_forward.1} parent=0 // pred_fallthru
    _
  // Predicated region
  $region62: #{roberta_classifier_forward.1} parent=0 // pred_check
    _
  $region63: #{roberta_classifier_forward.1} parent=0 // pred_check_branch
    %52 = sbr.rel (0) target = $region65
  $region64: #{roberta_classifier_forward.1} parent=0 // pred_region
    _
  $region65: #{roberta_classifier_forward.1} parent=0 // pred_fallthru
    _
  %v54 = vld [vmem:[%s0] sm:$0xff]
  %v55 = vld [vmem:[%s0 + $0x8] sm:$0xff]
  %v56 = vld [vmem:[%s2] sm:$0x1]
  %v57 = vld [vmem:[%s3] sm:$0x1]
  %vm58 = vcmask 261120
  %v59 = vsel %vm58, %v54, 0.0
  %60 = vadd.xlane.f32.xlu0 %v59
  %v61 = vpop.xlane.xlu0 %60
  %v62 = vsel %vm58, %v55, 0.0
  %63 = vadd.xlane.f32.xlu0 %v62
  %v64 = vpop.xlane.xlu0 %63
  %v65 = vrcp.pop 32.0
  %v66 = vmul.f32 %v61, %v65
  %v67 = vmul.f32 %v64, %v65
  %v68 = vsub.f32 %v54, %v66
  %v69 = vsub.f32 %v55, %v67
  %v70 = vmul.f32 %v68, %v68
  %v71 = vmul.f32 %v69, %v69
  %v72 = vsel %vm58, %v70, 0.0
  %73 = vadd.xlane.f32.xlu0 %v72
  %v74 = vpop.xlane.xlu0 %73
  %v75 = vsel %vm58, %v71, 0.0
  %76 = vadd.xlane.f32.xlu0 %v75
  %v77 = vpop.xlane.xlu0 %76
  %v78 = vmul.f32 %v74, %v65
  %v79 = vmul.f32 %v77, %v65
  %v80 = vadd.f32 %v78, 1e-05
  %v81 = vadd.f32 %v79, 1e-05
  %v82 = vrsqrt.pop %v80
  %v83 = vrsqrt.pop %v81
  %v84 = vmul.f32 %v68, %v82
  %v85 = vmul.f32 %v69, %v83
  %v87 = vlaneseq
  %v88 = vshrl.u32 %v87, 7
  %v89 = vsub.s32 0, %v88
  %v90 = vrot.slane %v56, %v89
  %v92 = vmul.f32 %v84, %v90
  %v93 = vmul.f32 %v85, %v90
  %v95 = vlaneseq
  %v96 = vshrl.u32 %v95, 7
  %v97 = vsub.s32 0, %v96
  %v98 = vrot.slane %v57, %v97
  %v100 = vadd.f32 %v92, %v98
  %v101 = vadd.f32 %v93, %v98
  %v102 = vld [vmem:[%s1] sm:$0xff]
  %v103 = vld [vmem:[%s1 + $0x8] sm:$0xff]
  %v104 = vpack.c.bf16 %v101, %v100
  %v105 = vld [vmem:[%s4] sm:$0xf]
  %v106 = vld [vmem:[%s4 + $0x4] sm:$0xf]
  %v107 = vld [vmem:[%s4 + $0x8] sm:$0xf]
  %v108 = vld [vmem:[%s4 + $0xc] sm:$0xf]
  %v109 = vld [vmem:[%s5] sm:$0x1]
  %v111 = vlaneseq
  %v112 = vshrl.u32 %v111, 7
  %v113 = vsub.s32 0, %v112
  %v114 = vrot.slane %v109, %v113
  %v120 = vunpack.c.l.b16 %v105
  %v121 = vunpack.c.l.b16 %v106
  %v122 = vunpack.c.l.b16 %v107
  %v123 = vunpack.c.l.b16 %v108
  %v124 = vpack.c.b16 %v121, %v120
  %v125 = vpack.c.b16 %v123, %v122
  %v129 = vsel %vm58, %v104, 0
  %131 = vmatprep.subr.bf16.mxu0 0
  %132 = vmatpush1.bf16.msra.mxu0 %v124
  %133 = vmatprep.subr.bf16.mxu0 0
  %134 = vmatpush1.bf16.msra.mxu0 %v125
  %135 = vmatprep.subr.bf16.mxu0 0
  %136 = vmatpush1.bf16.msra.mxu0 0
  %137 = vmatprep.subr.bf16.mxu0 0
  %138 = vmatpush1.bf16.msra.mxu0 0
  %139 = vmatprep.subr.bf16.mxu0 0
  %140 = vmatpush1.bf16.msra.mxu0 0
  %141 = vmatprep.subr.bf16.mxu0 0
  %142 = vmatpush1.bf16.msra.mxu0 0
  %143 = vmatprep.subr.bf16.mxu0 0
  %144 = vmatpush1.bf16.msra.mxu0 0
  %145 = vmatprep.subr.bf16.mxu0 0
  %146 = vmatpush1.bf16.msra.mxu0 0
  %147 = vmatprep.subr.bf16.mxu0 0
  %148 = vmatpush1.bf16.msra.mxu0 0
  %149 = vmatprep.subr.bf16.mxu0 0
  %150 = vmatpush1.bf16.msra.mxu0 0
  %151 = vmatprep.subr.bf16.mxu0 0
  %152 = vmatpush1.bf16.msra.mxu0 0
  %153 = vmatprep.subr.bf16.mxu0 0
  %154 = vmatpush1.bf16.msra.mxu0 0
  %155 = vmatprep.subr.bf16.mxu0 0
  %156 = vmatpush1.bf16.msra.mxu0 0
  %157 = vmatprep.subr.bf16.mxu0 0
  %158 = vmatpush1.bf16.msra.mxu0 0
  %159 = vmatprep.subr.bf16.mxu0 0
  %160 = vmatpush1.bf16.msra.mxu0 0
  %161 = vmatprep.subr.bf16.mxu0 0
  %162 = vmatpush1.bf16.msra.mxu0 0
  %163 = vmatprep.mubr.bf16.mxu0 0
  %164 = vmatmul.mubr.bf16.gmra.mrb[0].mxu0 %v129
  %v165 = vpop.f32.mrb[0].mxu0
  %v166 = vadd.f32 %v114, %v165
  %v167 = vpop.f32.mrb[0].mxu0
  %v168 = vpop.f32.mrb[0].mxu0
  %v169 = vadd.f32 %v114, %v168
  %v170 = vpop.f32.mrb[0].mxu0
  %171 = vdwg.mxu0
  %v172 = vpack.c.bf16 %v166, %v166
  %v173 = vpack.c.bf16 %v169, %v169
  %175 = vrot.lane.b32.xlu0 %v172, 96
  %v176 = vpop.permute.xlu0 %175
  %vm177 = vcmask 64512
  %v179 = vsel %vm177, %v172, 0
  %v182 = vsel %vm177, %v176, 0
  %184 = vmatprep.subr.bf16.mxu0 0
  %185 = vmatpush1.bf16.xpose.msra.mxu0 %v182
  %186 = vmatprep.subr.bf16.mxu0 0
  %187 = vmatpush1.bf16.xpose.msra.mxu0 0
  %188 = vmatprep.subr.bf16.mxu0 0
  %189 = vmatpush1.bf16.xpose.msra.mxu0 0
  %190 = vmatprep.subr.bf16.mxu0 0
  %191 = vmatpush1.bf16.xpose.msra.mxu0 0
  %192 = vmatprep.subr.bf16.mxu0 0
  %193 = vmatpush1.bf16.xpose.msra.mxu0 0
  %194 = vmatprep.subr.bf16.mxu0 0
  %195 = vmatpush1.bf16.xpose.msra.mxu0 0
  %196 = vmatprep.subr.bf16.mxu0 0
  %197 = vmatpush1.bf16.xpose.msra.mxu0 0
  %198 = vmatprep.subr.bf16.mxu0 0
  %199 = vmatpush1.bf16.xpose.msra.mxu0 0
  %200 = vmatprep.subr.bf16.mxu0 0
  %201 = vmatpush1.bf16.xpose.msra.mxu0 0
  %202 = vmatprep.subr.bf16.mxu0 0
  %203 = vmatpush1.bf16.xpose.msra.mxu0 0
  %204 = vmatprep.subr.bf16.mxu0 0
  %205 = vmatpush1.bf16.xpose.msra.mxu0 0
  %206 = vmatprep.subr.bf16.mxu0 0
  %207 = vmatpush1.bf16.xpose.msra.mxu0 0
  %208 = vmatprep.subr.bf16.mxu0 0
  %209 = vmatpush1.bf16.xpose.msra.mxu0 0
  %210 = vmatprep.subr.bf16.mxu0 0
  %211 = vmatpush1.bf16.xpose.msra.mxu0 0
  %212 = vmatprep.subr.bf16.mxu0 0
  %213 = vmatpush1.bf16.xpose.msra.mxu0 0
  %214 = vmatprep.subr.bf16.mxu0 0
  %215 = vmatpush1.bf16.xpose.msra.mxu0 0
  %216 = vmatprep.mubr.bf16.mxu0 0
  %217 = vmatmul.mubr.bf16.gmra.mrb[0].mxu0 %v179
  %v218 = vpop.f32.mrb[0].mxu0
  %v219 = vadd.f32 0.0, %v218
  %v220 = vpop.f32.mrb[0].mxu0
  %v221 = vpop.f32.mrb[0].mxu0
  %v222 = vpop.f32.mrb[0].mxu0
  %223 = vdwg.mxu0
  %225 = vrot.lane.b32.xlu0 %v173, 96
  %v226 = vpop.permute.xlu0 %225
  %v228 = vsel %vm177, %v173, 0
  %v231 = vsel %vm177, %v226, 0
  %233 = vmatprep.subr.bf16.mxu0 0
  %234 = vmatpush1.bf16.xpose.msra.mxu0 %v231
  %235 = vmatprep.subr.bf16.mxu0 0
  %236 = vmatpush1.bf16.xpose.msra.mxu0 0
  %237 = vmatprep.subr.bf16.mxu0 0
  %238 = vmatpush1.bf16.xpose.msra.mxu0 0
  %239 = vmatprep.subr.bf16.mxu0 0
  %240 = vmatpush1.bf16.xpose.msra.mxu0 0
  %241 = vmatprep.subr.bf16.mxu0 0
  %242 = vmatpush1.bf16.xpose.msra.mxu0 0
  %243 = vmatprep.subr.bf16.mxu0 0
  %244 = vmatpush1.bf16.xpose.msra.mxu0 0
  %245 = vmatprep.subr.bf16.mxu0 0
  %246 = vmatpush1.bf16.xpose.msra.mxu0 0
  %247 = vmatprep.subr.bf16.mxu0 0
  %248 = vmatpush1.bf16.xpose.msra.mxu0 0
  %249 = vmatprep.subr.bf16.mxu0 0
  %250 = vmatpush1.bf16.xpose.msra.mxu0 0
  %251 = vmatprep.subr.bf16.mxu0 0
  %252 = vmatpush1.bf16.xpose.msra.mxu0 0
  %253 = vmatprep.subr.bf16.mxu0 0
  %254 = vmatpush1.bf16.xpose.msra.mxu0 0
  %255 = vmatprep.subr.bf16.mxu0 0
  %256 = vmatpush1.bf16.xpose.msra.mxu0 0
  %257 = vmatprep.subr.bf16.mxu0 0
  %258 = vmatpush1.bf16.xpose.msra.mxu0 0
  %259 = vmatprep.subr.bf16.mxu0 0
  %260 = vmatpush1.bf16.xpose.msra.mxu0 0
  %261 = vmatprep.subr.bf16.mxu0 0
  %262 = vmatpush1.bf16.xpose.msra.mxu0 0
  %263 = vmatprep.subr.bf16.mxu0 0
  %264 = vmatpush1.bf16.xpose.msra.mxu0 0
  %265 = vmatprep.mubr.bf16.mxu0 0
  %266 = vmatmul.mubr.bf16.gmra.mrb[0].mxu0 %v228
  %v267 = vpop.f32.mrb[0].mxu0
  %v268 = vadd.f32 0.0, %v267
  %v269 = vpop.f32.mrb[0].mxu0
  %v270 = vpop.f32.mrb[0].mxu0
  %v271 = vpop.f32.mrb[0].mxu0
  %272 = vdwg.mxu0
  %v273 = vmul.f32 %v219, 0.35355338
  %v274 = vmul.f32 %v268, 0.35355338
  %v275 = vadd.f32 %v273, %v102
  %v276 = vadd.f32 %v274, %v103
  %v277 = vsel %vm177, %v275, -inf
  %278 = vmax.xlane.f32.xlu0 %v277
  %v279 = vpop.xlane.xlu0 %278
  %v280 = vsel %vm177, %v276, -inf
  %281 = vmax.xlane.f32.xlu0 %v280
  %v282 = vpop.xlane.xlu0 %281
  %v283 = vsub.f32 %v275, %v279
  %v284 = vsub.f32 %v276, %v282
  %v285 = vmul.f32 %v283, 1.442695
  %v286 = vpow.pop %v285
  %v287 = vmul.f32 %v284, 1.442695
  %v288 = vpow.pop %v287
  %v289 = vsel %vm177, %v286, 0.0
  %290 = vadd.xlane.f32.xlu0 %v289
  %v291 = vpop.xlane.xlu0 %290
  %v292 = vsel %vm177, %v288, 0.0
  %293 = vadd.xlane.f32.xlu0 %v292
  %v294 = vpop.xlane.xlu0 %293
  %v295 = vrcp.pop %v291
  %v296 = vrcp.pop %v294
  %v297 = vmul.f32 %v286, %v295
  %v298 = vmul.f32 %v288, %v296
  %v299 = vpack.c.bf16 %v297, %v297
  %v300 = vpack.c.bf16 %v298, %v298
  %301 = vrot.lane.b32.xlu0 %v172, 64
  %v302 = vpop.permute.xlu0 %301
  %v304 = vsel %vm177, %v299, 0
  %vm306 = vcmask 1043456
  %v308 = vsel %vm306, %v302, 0
  %310 = vmatprep.subr.bf16.mxu0 0
  %311 = vmatpush1.bf16.msra.mxu0 %v308
  %312 = vmatprep.subr.bf16.mxu0 0
  %313 = vmatpush1.bf16.msra.mxu0 0
  %314 = vmatprep.subr.bf16.mxu0 0
  %315 = vmatpush1.bf16.msra.mxu0 0
  %316 = vmatprep.subr.bf16.mxu0 0
  %317 = vmatpush1.bf16.msra.mxu0 0
  %318 = vmatprep.subr.bf16.mxu0 0
  %319 = vmatpush1.bf16.msra.mxu0 0
  %320 = vmatprep.subr.bf16.mxu0 0
  %321 = vmatpush1.bf16.msra.mxu0 0
  %322 = vmatprep.subr.bf16.mxu0 0
  %323 = vmatpush1.bf16.msra.mxu0 0
  %324 = vmatprep.subr.bf16.mxu0 0
  %325 = vmatpush1.bf16.msra.mxu0 0
  %326 = vmatprep.subr.bf16.mxu0 0
  %327 = vmatpush1.bf16.msra.mxu0 0
  %328 = vmatprep.subr.bf16.mxu0 0
  %329 = vmatpush1.bf16.msra.mxu0 0
  %330 = vmatprep.subr.bf16.mxu0 0
  %331 = vmatpush1.bf16.msra.mxu0 0
  %332 = vmatprep.subr.bf16.mxu0 0
  %333 = vmatpush1.bf16.msra.mxu0 0
  %334 = vmatprep.subr.bf16.mxu0 0
  %335 = vmatpush1.bf16.msra.mxu0 0
  %336 = vmatprep.subr.bf16.mxu0 0
  %337 = vmatpush1.bf16.msra.mxu0 0
  %338 = vmatprep.subr.bf16.mxu0 0
  %339 = vmatpush1.bf16.msra.mxu0 0
  %340 = vmatprep.subr.bf16.mxu0 0
  %341 = vmatpush1.bf16.msra.mxu0 0
  %342 = vmatprep.mubr.bf16.mxu0 0
  %343 = vmatmul.mubr.bf16.gmra.mrb[0].mxu0 %v304
  %v344 = vpop.f32.mrb[0].mxu0
  %v345 = vadd.f32 0.0, %v344
  %v346 = vpop.f32.mrb[0].mxu0
  %v347 = vpop.f32.mrb[0].mxu0
  %v348 = vpop.f32.mrb[0].mxu0
  %349 = vdwg.mxu0
  %350 = vrot.lane.b32.xlu0 %v173, 64
  %v351 = vpop.permute.xlu0 %350
  %v353 = vsel %vm177, %v300, 0
  %v356 = vsel %vm306, %v351, 0
  %358 = vmatprep.subr.bf16.mxu0 0
  %359 = vmatpush1.bf16.msra.mxu0 %v356
  %360 = vmatprep.subr.bf16.mxu0 0
  %361 = vmatpush1.bf16.msra.mxu0 0
  %362 = vmatprep.subr.bf16.mxu0 0
  %363 = vmatpush1.bf16.msra.mxu0 0
  %364 = vmatprep.subr.bf16.mxu0 0
  %365 = vmatpush1.bf16.msra.mxu0 0
  %366 = vmatprep.subr.bf16.mxu0 0
  %367 = vmatpush1.bf16.msra.mxu0 0
  %368 = vmatprep.subr.bf16.mxu0 0
  %369 = vmatpush1.bf16.msra.mxu0 0
  %370 = vmatprep.subr.bf16.mxu0 0
  %371 = vmatpush1.bf16.msra.mxu0 0
  %372 = vmatprep.subr.bf16.mxu0 0
  %373 = vmatpush1.bf16.msra.mxu0 0
  %374 = vmatprep.subr.bf16.mxu0 0
  %375 = vmatpush1.bf16.msra.mxu0 0
  %376 = vmatprep.subr.bf16.mxu0 0
  %377 = vmatpush1.bf16.msra.mxu0 0
  %378 = vmatprep.subr.bf16.mxu0 0
  %379 = vmatpush1.bf16.msra.mxu0 0
  %380 = vmatprep.subr.bf16.mxu0 0
  %381 = vmatpush1.bf16.msra.mxu0 0
  %382 = vmatprep.subr.bf16.mxu0 0
  %383 = vmatpush1.bf16.msra.mxu0 0
  %384 = vmatprep.subr.bf16.mxu0 0
  %385 = vmatpush1.bf16.msra.mxu0 0
  %386 = vmatprep.subr.bf16.mxu0 0
  %387 = vmatpush1.bf16.msra.mxu0 0
  %388 = vmatprep.subr.bf16.mxu0 0
  %389 = vmatpush1.bf16.msra.mxu0 0
  %390 = vmatprep.mubr.bf16.mxu0 0
  %391 = vmatmul.mubr.bf16.gmra.mrb[0].mxu0 %v353
  %v392 = vpop.f32.mrb[0].mxu0
  %v393 = vadd.f32 0.0, %v392
  %v394 = vpop.f32.mrb[0].mxu0
  %v395 = vpop.f32.mrb[0].mxu0
  %v396 = vpop.f32.mrb[0].mxu0
  %397 = vdwg.mxu0
  %398 = vst.msk [vmem:[#allocation2] sm:$0xff] %vm177, %v345
  %399 = vst.msk [vmem:[#allocation2 + $0x8] sm:$0xff] %vm177, %v393
  %400 = vrot.lane.b32.xlu0 %v172, 120
  %v401 = vpop.permute.xlu0 %400
  %402 = vrot.lane.b32.xlu0 %v172, 88
  %v403 = vpop.permute.xlu0 %402
  %v405 = vsel %vm177, %v401, 0
  %v408 = vsel %vm177, %v403, 0
  %410 = vmatprep.subr.bf16.mxu0 0
  %411 = vmatpush1.bf16.xpose.msra.mxu0 %v408
  %412 = vmatprep.subr.bf16.mxu0 0
  %413 = vmatpush1.bf16.xpose.msra.mxu0 0
  %414 = vmatprep.subr.bf16.mxu0 0
  %415 = vmatpush1.bf16.xpose.msra.mxu0 0
  %416 = vmatprep.subr.bf16.mxu0 0
  %417 = vmatpush1.bf16.xpose.msra.mxu0 0
  %418 = vmatprep.subr.bf16.mxu0 0
  %419 = vmatpush1.bf16.xpose.msra.mxu0 0
  %420 = vmatprep.subr.bf16.mxu0 0
  %421 = vmatpush1.bf16.xpose.msra.mxu0 0
  %422 = vmatprep.subr.bf16.mxu0 0
  %423 = vmatpush1.bf16.xpose.msra.mxu0 0
  %424 = vmatprep.subr.bf16.mxu0 0
  %425 = vmatpush1.bf16.xpose.msra.mxu0 0
  %426 = vmatprep.subr.bf16.mxu0 0
  %427 = vmatpush1.bf16.xpose.msra.mxu0 0
  %428 = vmatprep.subr.bf16.mxu0 0
  %429 = vmatpush1.bf16.xpose.msra.mxu0 0
  %430 = vmatprep.subr.bf16.mxu0 0
  %431 = vmatpush1.bf16.xpose.msra.mxu0 0
  %432 = vmatprep.subr.bf16.mxu0 0
  %433 = vmatpush1.bf16.xpose.msra.mxu0 0
  %434 = vmatprep.subr.bf16.mxu0 0
  %435 = vmatpush1.bf16.xpose.msra.mxu0 0
  %436 = vmatprep.subr.bf16.mxu0 0
  %437 = vmatpush1.bf16.xpose.msra.mxu0 0
  %438 = vmatprep.subr.bf16.mxu0 0
  %439 = vmatpush1.bf16.xpose.msra.mxu0 0
  %440 = vmatprep.subr.bf16.mxu0 0
  %441 = vmatpush1.bf16.xpose.msra.mxu0 0
  %442 = vmatprep.mubr.bf16.mxu0 0
  %443 = vmatmul.mubr.bf16.gmra.mrb[0].mxu0 %v405
  %v444 = vpop.f32.mrb[0].mxu0
  %v445 = vadd.f32 0.0, %v444
  %v446 = vpop.f32.mrb[0].mxu0
  %v447 = vpop.f32.mrb[0].mxu0
  %v448 = vpop.f32.mrb[0].mxu0
  %449 = vdwg.mxu0
  %450 = vrot.lane.b32.xlu0 %v173, 120
  %v451 = vpop.permute.xlu0 %450
  %452 = vrot.lane.b32.xlu0 %v173, 88
  %v453 = vpop.permute.xlu0 %452
  %v455 = vsel %vm177, %v451, 0
  %v458 = vsel %vm177, %v453, 0
  %460 = vmatprep.subr.bf16.mxu0 0
  %461 = vmatpush1.bf16.xpose.msra.mxu0 %v458
  %462 = vmatprep.subr.bf16.mxu0 0
  %463 = vmatpush1.bf16.xpose.msra.mxu0 0
  %464 = vmatprep.subr.bf16.mxu0 0
  %465 = vmatpush1.bf16.xpose.msra.mxu0 0
  %466 = vmatprep.subr.bf16.mxu0 0
  %467 = vmatpush1.bf16.xpose.msra.mxu0 0
  %468 = vmatprep.subr.bf16.mxu0 0
  %469 = vmatpush1.bf16.xpose.msra.mxu0 0
  %470 = vmatprep.subr.bf16.mxu0 0
  %471 = vmatpush1.bf16.xpose.msra.mxu0 0
  %472 = vmatprep.subr.bf16.mxu0 0
  %473 = vmatpush1.bf16.xpose.msra.mxu0 0
  %474 = vmatprep.subr.bf16.mxu0 0
  %475 = vmatpush1.bf16.xpose.msra.mxu0 0
  %476 = vmatprep.subr.bf16.mxu0 0
  %477 = vmatpush1.bf16.xpose.msra.mxu0 0
  %478 = vmatprep.subr.bf16.mxu0 0
  %479 = vmatpush1.bf16.xpose.msra.mxu0 0
  %480 = vmatprep.subr.bf16.mxu0 0
  %481 = vmatpush1.bf16.xpose.msra.mxu0 0
  %482 = vmatprep.subr.bf16.mxu0 0
  %483 = vmatpush1.bf16.xpose.msra.mxu0 0
  %484 = vmatprep.subr.bf16.mxu0 0
  %485 = vmatpush1.bf16.xpose.msra.mxu0 0
  %486 = vmatprep.subr.bf16.mxu0 0
  %487 = vmatpush1.bf16.xpose.msra.mxu0 0
  %488 = vmatprep.subr.bf16.mxu0 0
  %489 = vmatpush1.bf16.xpose.msra.mxu0 0
  %490 = vmatprep.subr.bf16.mxu0 0
  %491 = vmatpush1.bf16.xpose.msra.mxu0 0
  %492 = vmatprep.mubr.bf16.mxu0 0
  %493 = vmatmul.mubr.bf16.gmra.mrb[0].mxu0 %v455
  %v494 = vpop.f32.mrb[0].mxu0
  %v495 = vadd.f32 0.0, %v494
  %v496 = vpop.f32.mrb[0].mxu0
  %v497 = vpop.f32.mrb[0].mxu0
  %v498 = vpop.f32.mrb[0].mxu0
  %499 = vdwg.mxu0
  %v500 = vmul.f32 %v445, 0.35355338
  %v501 = vmul.f32 %v495, 0.35355338
  %v502 = vadd.f32 %v500, %v102
  %v503 = vadd.f32 %v501, %v103
  %v504 = vsel %vm177, %v502, -inf
  %505 = vmax.xlane.f32.xlu0 %v504
  %v506 = vpop.xlane.xlu0 %505
  %v507 = vsel %vm177, %v503, -inf
  %508 = vmax.xlane.f32.xlu0 %v507
  %v509 = vpop.xlane.xlu0 %508
  %v510 = vsub.f32 %v502, %v506
  %v511 = vsub.f32 %v503, %v509
  %v512 = vmul.f32 %v510, 1.442695
  %v513 = vpow.pop %v512
  %v514 = vmul.f32 %v511, 1.442695
  %v515 = vpow.pop %v514
  %v516 = vsel %vm177, %v513, 0.0
  %517 = vadd.xlane.f32.xlu0 %v516
  %v518 = vpop.xlane.xlu0 %517
  %v519 = vsel %vm177, %v515, 0.0
  %520 = vadd.xlane.f32.xlu0 %v519
  %v521 = vpop.xlane.xlu0 %520
  %v522 = vrcp.pop %v518
  %v523 = vrcp.pop %v521
  %v524 = vmul.f32 %v513, %v522
  %v525 = vmul.f32 %v515, %v523
  %v526 = vpack.c.bf16 %v524, %v524
  %v527 = vpack.c.bf16 %v525, %v525
  %528 = vrot.lane.b32.xlu0 %v172, 56
  %v529 = vpop.permute.xlu0 %528
  %v531 = vsel %vm177, %v526, 0
  %v534 = vsel %vm306, %v529, 0
  %536 = vmatprep.subr.bf16.mxu0 0
  %537 = vmatpush1.bf16.msra.mxu0 %v534
  %538 = vmatprep.subr.bf16.mxu0 0
  %539 = vmatpush1.bf16.msra.mxu0 0
  %540 = vmatprep.subr.bf16.mxu0 0
  %541 = vmatpush1.bf16.msra.mxu0 0
  %542 = vmatprep.subr.bf16.mxu0 0
  %543 = vmatpush1.bf16.msra.mxu0 0
  %544 = vmatprep.subr.bf16.mxu0 0
  %545 = vmatpush1.bf16.msra.mxu0 0
  %546 = vmatprep.subr.bf16.mxu0 0
  %547 = vmatpush1.bf16.msra.mxu0 0
  %548 = vmatprep.subr.bf16.mxu0 0
  %549 = vmatpush1.bf16.msra.mxu0 0
  %550 = vmatprep.subr.bf16.mxu0 0
  %551 = vmatpush1.bf16.msra.mxu0 0
  %552 = vmatprep.subr.bf16.mxu0 0
  %553 = vmatpush1.bf16.msra.mxu0 0
  %554 = vmatprep.subr.bf16.mxu0 0
  %555 = vmatpush1.bf16.msra.mxu0 0
  %556 = vmatprep.subr.bf16.mxu0 0
  %557 = vmatpush1.bf16.msra.mxu0 0
  %558 = vmatprep.subr.bf16.mxu0 0
  %559 = vmatpush1.bf16.msra.mxu0 0
  %560 = vmatprep.subr.bf16.mxu0 0
  %561 = vmatpush1.bf16.msra.mxu0 0
  %562 = vmatprep.subr.bf16.mxu0 0
  %563 = vmatpush1.bf16.msra.mxu0 0
  %564 = vmatprep.subr.bf16.mxu0 0
  %565 = vmatpush1.bf16.msra.mxu0 0
  %566 = vmatprep.subr.bf16.mxu0 0
  %567 = vmatpush1.bf16.msra.mxu0 0
  %568 = vmatprep.mubr.bf16.mxu0 0
  %569 = vmatmul.mubr.bf16.gmra.mrb[0].mxu0 %v531
  %v570 = vpop.f32.mrb[0].mxu0
  %v571 = vadd.f32 0.0, %v570
  %v572 = vpop.f32.mrb[0].mxu0
  %v573 = vpop.f32.mrb[0].mxu0
  %v574 = vpop.f32.mrb[0].mxu0
  %575 = vdwg.mxu0
  %576 = vrot.lane.b32.xlu0 %v173, 56
  %v577 = vpop.permute.xlu0 %576
  %v579 = vsel %vm177, %v527, 0
  %v582 = vsel %vm306, %v577, 0
  %584 = vmatprep.subr.bf16.mxu0 0
  %585 = vmatpush1.bf16.msra.mxu0 %v582
  %586 = vmatprep.subr.bf16.mxu0 0
  %587 = vmatpush1.bf16.msra.mxu0 0
  %588 = vmatprep.subr.bf16.mxu0 0
  %589 = vmatpush1.bf16.msra.mxu0 0
  %590 = vmatprep.subr.bf16.mxu0 0
  %591 = vmatpush1.bf16.msra.mxu0 0
  %592 = vmatprep.subr.bf16.mxu0 0
  %593 = vmatpush1.bf16.msra.mxu0 0
  %594 = vmatprep.subr.bf16.mxu0 0
  %595 = vmatpush1.bf16.msra.mxu0 0
  %596 = vmatprep.subr.bf16.mxu0 0
  %597 = vmatpush1.bf16.msra.mxu0 0
  %598 = vmatprep.subr.bf16.mxu0 0
  %599 = vmatpush1.bf16.msra.mxu0 0
  %600 = vmatprep.subr.bf16.mxu0 0
  %601 = vmatpush1.bf16.msra.mxu0 0
  %602 = vmatprep.subr.bf16.mxu0 0
  %603 = vmatpush1.bf16.msra.mxu0 0
  %604 = vmatprep.subr.bf16.mxu0 0
  %605 = vmatpush1.bf16.msra.mxu0 0
  %606 = vmatprep.subr.bf16.mxu0 0
  %607 = vmatpush1.bf16.msra.mxu0 0
  %608 = vmatprep.subr.bf16.mxu0 0
  %609 = vmatpush1.bf16.msra.mxu0 0
  %610 = vmatprep.subr.bf16.mxu0 0
  %611 = vmatpush1.bf16.msra.mxu0 0
  %612 = vmatprep.subr.bf16.mxu0 0
  %613 = vmatpush1.bf16.msra.mxu0 0
  %614 = vmatprep.subr.bf16.mxu0 0
  %615 = vmatpush1.bf16.msra.mxu0 0
  %616 = vmatprep.mubr.bf16.mxu0 0
  %617 = vmatmul.mubr.bf16.gmra.mrb[0].mxu0 %v579
  %v618 = vpop.f32.mrb[0].mxu0
  %v619 = vadd.f32 0.0, %v618
  %v620 = vpop.f32.mrb[0].mxu0
  %v621 = vpop.f32.mrb[0].mxu0
  %v622 = vpop.f32.mrb[0].mxu0
  %623 = vdwg.mxu0
  %626 = vrot.lane.b32.xlu0 %v571, 8
  %v627 = vpop.permute.xlu0 %626
  %628 = vrot.lane.b32.xlu0 %v619, 8
  %v629 = vpop.permute.xlu0 %628
  %vm632 = vcmask 130112
  %633 = vst.msk [vmem:[#allocation2] sm:$0xff] %vm632, %v627
  %634 = vst.msk [vmem:[#allocation2 + $0x8] sm:$0xff] %vm632, %v629
  %635 = vrot.lane.b32.xlu0 %v172, 112
  %v636 = vpop.permute.xlu0 %635
  %637 = vrot.lane.b32.xlu0 %v172, 80
  %v638 = vpop.permute.xlu0 %637
  %v640 = vsel %vm177, %v636, 0
  %v643 = vsel %vm177, %v638, 0
  %645 = vmatprep.subr.bf16.mxu0 0
  %646 = vmatpush1.bf16.xpose.msra.mxu0 %v643
  %647 = vmatprep.subr.bf16.mxu0 0
  %648 = vmatpush1.bf16.xpose.msra.mxu0 0
  %649 = vmatprep.subr.bf16.mxu0 0
  %650 = vmatpush1.bf16.xpose.msra.mxu0 0
  %651 = vmatprep.subr.bf16.mxu0 0
  %652 = vmatpush1.bf16.xpose.msra.mxu0 0
  %653 = vmatprep.subr.bf16.mxu0 0
  %654 = vmatpush1.bf16.xpose.msra.mxu0 0
  %655 = vmatprep.subr.bf16.mxu0 0
  %656 = vmatpush1.bf16.xpose.msra.mxu0 0
  %657 = vmatprep.subr.bf16.mxu0 0
  %658 = vmatpush1.bf16.xpose.msra.mxu0 0
  %659 = vmatprep.subr.bf16.mxu0 0
  %660 = vmatpush1.bf16.xpose.msra.mxu0 0
  %661 = vmatprep.subr.bf16.mxu0 0
  %662 = vmatpush1.bf16.xpose.msra.mxu0 0
  %663 = vmatprep.subr.bf16.mxu0 0
  %664 = vmatpush1.bf16.xpose.msra.mxu0 0
  %665 = vmatprep.subr.bf16.mxu0 0
  %666 = vmatpush1.bf16.xpose.msra.mxu0 0
  %667 = vmatprep.subr.bf16.mxu0 0
  %668 = vmatpush1.bf16.xpose.msra.mxu0 0
  %669 = vmatprep.subr.bf16.mxu0 0
  %670 = vmatpush1.bf16.xpose.msra.mxu0 0
  %671 = vmatprep.subr.bf16.mxu0 0
  %672 = vmatpush1.bf16.xpose.msra.mxu0 0
  %673 = vmatprep.subr.bf16.mxu0 0
  %674 = vmatpush1.bf16.xpose.msra.mxu0 0
  %675 = vmatprep.subr.bf16.mxu0 0
  %676 = vmatpush1.bf16.xpose.msra.mxu0 0
  %677 = vmatprep.mubr.bf16.mxu0 0
  %678 = vmatmul.mubr.bf16.gmra.mrb[0].mxu0 %v640
  %v679 = vpop.f32.mrb[0].mxu0
  %v680 = vadd.f32 0.0, %v679
  %v681 = vpop.f32.mrb[0].mxu0
  %v682 = vpop.f32.mrb[0].mxu0
  %v683 = vpop.f32.mrb[0].mxu0
  %684 = vdwg.mxu0
  %685 = vrot.lane.b32.xlu0 %v173, 112
  %v686 = vpop.permute.xlu0 %685
  %687 = vrot.lane.b32.xlu0 %v173, 80
  %v688 = vpop.permute.xlu0 %687
  %v690 = vsel %vm177, %v686, 0
  %v693 = vsel %vm177, %v688, 0
  %695 = vmatprep.subr.bf16.mxu0 0
  %696 = vmatpush1.bf16.xpose.msra.mxu0 %v693
  %697 = vmatprep.subr.bf16.mxu0 0
  %698 = vmatpush1.bf16.xpose.msra.mxu0 0
  %699 = vmatprep.subr.bf16.mxu0 0
  %700 = vmatpush1.bf16.xpose.msra.mxu0 0
  %701 = vmatprep.subr.bf16.mxu0 0
  %702 = vmatpush1.bf16.xpose.msra.mxu0 0
  %703 = vmatprep.subr.bf16.mxu0 0
  %704 = vmatpush1.bf16.xpose.msra.mxu0 0
  %705 = vmatprep.subr.bf16.mxu0 0
  %706 = vmatpush1.bf16.xpose.msra.mxu0 0
  %707 = vmatprep.subr.bf16.mxu0 0
  %708 = vmatpush1.bf16.xpose.msra.mxu0 0
  %709 = vmatprep.subr.bf16.mxu0 0
  %710 = vmatpush1.bf16.xpose.msra.mxu0 0
  %711 = vmatprep.subr.bf16.mxu0 0
  %712 = vmatpush1.bf16.xpose.msra.mxu0 0
  %713 = vmatprep.subr.bf16.mxu0 0
  %714 = vmatpush1.bf16.xpose.msra.mxu0 0
  %715 = vmatprep.subr.bf16.mxu0 0
  %716 = vmatpush1.bf16.xpose.msra.mxu0 0
  %717 = vmatprep.subr.bf16.mxu0 0
  %718 = vmatpush1.bf16.xpose.msra.mxu0 0
  %719 = vmatprep.subr.bf16.mxu0 0
  %720 = vmatpush1.bf16.xpose.msra.mxu0 0
  %721 = vmatprep.subr.bf16.mxu0 0
  %722 = vmatpush1.bf16.xpose.msra.mxu0 0
  %723 = vmatprep.subr.bf16.mxu0 0
  %724 = vmatpush1.bf16.xpose.msra.mxu0 0
  %725 = vmatprep.subr.bf16.mxu0 0
  %726 = vmatpush1.bf16.xpose.msra.mxu0 0
  %727 = vmatprep.mubr.bf16.mxu0 0
  %728 = vmatmul.mubr.bf16.gmra.mrb[0].mxu0 %v690
  %v729 = vpop.f32.mrb[0].mxu0
  %v730 = vadd.f32 0.0, %v729
  %v731 = vpop.f32.mrb[0].mxu0
  %v732 = vpop.f32.mrb[0].mxu0
  %v733 = vpop.f32.mrb[0].mxu0
  %734 = vdwg.mxu0
  %v735 = vmul.f32 %v680, 0.35355338
  %v736 = vmul.f32 %v730, 0.35355338
  %v737 = vadd.f32 %v735, %v102
  %v738 = vadd.f32 %v736, %v103
  %v739 = vsel %vm177, %v737, -inf
  %740 = vmax.xlane.f32.xlu0 %v739
  %v741 = vpop.xlane.xlu0 %740
  %v742 = vsel %vm177, %v738, -inf
  %743 = vmax.xlane.f32.xlu0 %v742
  %v744 = vpop.xlane.xlu0 %743
  %v745 = vsub.f32 %v737, %v741
  %v746 = vsub.f32 %v738, %v744
  %v747 = vmul.f32 %v745, 1.442695
  %v748 = vpow.pop %v747
  %v749 = vmul.f32 %v746, 1.442695
  %v750 = vpow.pop %v749
  %v751 = vsel %vm177, %v748, 0.0
  %752 = vadd.xlane.f32.xlu0 %v751
  %v753 = vpop.xlane.xlu0 %752
  %v754 = vsel %vm177, %v750, 0.0
  %755 = vadd.xlane.f32.xlu0 %v754
  %v756 = vpop.xlane.xlu0 %755
  %v757 = vrcp.pop %v753
  %v758 = vrcp.pop %v756
  %v759 = vmul.f32 %v748, %v757
  %v760 = vmul.f32 %v750, %v758
  %v761 = vpack.c.bf16 %v759, %v759
  %v762 = vpack.c.bf16 %v760, %v760
  %763 = vrot.lane.b32.xlu0 %v172, 48
  %v764 = vpop.permute.xlu0 %763
  %v766 = vsel %vm177, %v761, 0
  %v769 = vsel %vm306, %v764, 0
  %771 = vmatprep.subr.bf16.mxu0 0
  %772 = vmatpush1.bf16.msra.mxu0 %v769
  %773 = vmatprep.subr.bf16.mxu0 0
  %774 = vmatpush1.bf16.msra.mxu0 0
  %775 = vmatprep.subr.bf16.mxu0 0
  %776 = vmatpush1.bf16.msra.mxu0 0
  %777 = vmatprep.subr.bf16.mxu0 0
  %778 = vmatpush1.bf16.msra.mxu0 0
  %779 = vmatprep.subr.bf16.mxu0 0
  %780 = vmatpush1.bf16.msra.mxu0 0
  %781 = vmatprep.subr.bf16.mxu0 0
  %782 = vmatpush1.bf16.msra.mxu0 0
  %783 = vmatprep.subr.bf16.mxu0 0
  %784 = vmatpush1.bf16.msra.mxu0 0
  %785 = vmatprep.subr.bf16.mxu0 0
  %786 = vmatpush1.bf16.msra.mxu0 0
  %787 = vmatprep.subr.bf16.mxu0 0
  %788 = vmatpush1.bf16.msra.mxu0 0
  %789 = vmatprep.subr.bf16.mxu0 0
  %790 = vmatpush1.bf16.msra.mxu0 0
  %791 = vmatprep.subr.bf16.mxu0 0
  %792 = vmatpush1.bf16.msra.mxu0 0
  %793 = vmatprep.subr.bf16.mxu0 0
  %794 = vmatpush1.bf16.msra.mxu0 0
  %795 = vmatprep.subr.bf16.mxu0 0
  %796 = vmatpush1.bf16.msra.mxu0 0
  %797 = vmatprep.subr.bf16.mxu0 0
  %798 = vmatpush1.bf16.msra.mxu0 0
  %799 = vmatprep.subr.bf16.mxu0 0
  %800 = vmatpush1.bf16.msra.mxu0 0
  %801 = vmatprep.subr.bf16.mxu0 0
  %802 = vmatpush1.bf16.msra.mxu0 0
  %803 = vmatprep.mubr.bf16.mxu0 0
  %804 = vmatmul.mubr.bf16.gmra.mrb[0].mxu0 %v766
  %v805 = vpop.f32.mrb[0].mxu0
  %v806 = vadd.f32 0.0, %v805
  %v807 = vpop.f32.mrb[0].mxu0
  %v808 = vpop.f32.mrb[0].mxu0
  %v809 = vpop.f32.mrb[0].mxu0
  %810 = vdwg.mxu0
  %811 = vrot.lane.b32.xlu0 %v173, 48
  %v812 = vpop.permute.xlu0 %811
  %v814 = vsel %vm177, %v762, 0
  %v817 = vsel %vm306, %v812, 0
  %819 = vmatprep.subr.bf16.mxu0 0
  %820 = vmatpush1.bf16.msra.mxu0 %v817
  %821 = vmatprep.subr.bf16.mxu0 0
  %822 = vmatpush1.bf16.msra.mxu0 0
  %823 = vmatprep.subr.bf16.mxu0 0
  %824 = vmatpush1.bf16.msra.mxu0 0
  %825 = vmatprep.subr.bf16.mxu0 0
  %826 = vmatpush1.bf16.msra.mxu0 0
  %827 = vmatprep.subr.bf16.mxu0 0
  %828 = vmatpush1.bf16.msra.mxu0 0
  %829 = vmatprep.subr.bf16.mxu0 0
  %830 = vmatpush1.bf16.msra.mxu0 0
  %831 = vmatprep.subr.bf16.mxu0 0
  %832 = vmatpush1.bf16.msra.mxu0 0
  %833 = vmatprep.subr.bf16.mxu0 0
  %834 = vmatpush1.bf16.msra.mxu0 0
  %835 = vmatprep.subr.bf16.mxu0 0
  %836 = vmatpush1.bf16.msra.mxu0 0
  %837 = vmatprep.subr.bf16.mxu0 0
  %838 = vmatpush1.bf16.msra.mxu0 0
  %839 = vmatprep.subr.bf16.mxu0 0
  %840 = vmatpush1.bf16.msra.mxu0 0
  %841 = vmatprep.subr.bf16.mxu0 0
  %842 = vmatpush1.bf16.msra.mxu0 0
  %843 = vmatprep.subr.bf16.mxu0 0
  %844 = vmatpush1.bf16.msra.mxu0 0
  %845 = vmatprep.subr.bf16.mxu0 0
  %846 = vmatpush1.bf16.msra.mxu0 0
  %847 = vmatprep.subr.bf16.mxu0 0
  %848 = vmatpush1.bf16.msra.mxu0 0
  %849 = vmatprep.subr.bf16.mxu0 0
  %850 = vmatpush1.bf16.msra.mxu0 0
  %851 = vmatprep.mubr.bf16.mxu0 0
  %852 = vmatmul.mubr.bf16.gmra.mrb[0].mxu0 %v814
  %v853 = vpop.f32.mrb[0].mxu0
  %v854 = vadd.f32 0.0, %v853
  %v855 = vpop.f32.mrb[0].mxu0
  %v856 = vpop.f32.mrb[0].mxu0
  %v857 = vpop.f32.mrb[0].mxu0
  %858 = vdwg.mxu0
  %861 = vrot.lane.b32.xlu0 %v806, 16
  %v862 = vpop.permute.xlu0 %861
  %863 = vrot.lane.b32.xlu0 %v854, 16
  %v864 = vpop.permute.xlu0 %863
  %vm867 = vcmask 195712
  %868 = vst.msk [vmem:[#allocation2] sm:$0xff] %vm867, %v862
  %869 = vst.msk [vmem:[#allocation2 + $0x8] sm:$0xff] %vm867, %v864
  %870 = vrot.lane.b32.xlu0 %v172, 104
  %v871 = vpop.permute.xlu0 %870
  %872 = vrot.lane.b32.xlu0 %v172, 72
  %v873 = vpop.permute.xlu0 %872
  %v875 = vsel %vm177, %v871, 0
  %v878 = vsel %vm177, %v873, 0
  %880 = vmatprep.subr.bf16.mxu0 0
  %881 = vmatpush1.bf16.xpose.msra.mxu0 %v878
  %882 = vmatprep.subr.bf16.mxu0 0
  %883 = vmatpush1.bf16.xpose.msra.mxu0 0
  %884 = vmatprep.subr.bf16.mxu0 0
  %885 = vmatpush1.bf16.xpose.msra.mxu0 0
  %886 = vmatprep.subr.bf16.mxu0 0
  %887 = vmatpush1.bf16.xpose.msra.mxu0 0
  %888 = vmatprep.subr.bf16.mxu0 0
  %889 = vmatpush1.bf16.xpose.msra.mxu0 0
  %890 = vmatprep.subr.bf16.mxu0 0
  %891 = vmatpush1.bf16.xpose.msra.mxu0 0
  %892 = vmatprep.subr.bf16.mxu0 0
  %893 = vmatpush1.bf16.xpose.msra.mxu0 0
  %894 = vmatprep.subr.bf16.mxu0 0
  %895 = vmatpush1.bf16.xpose.msra.mxu0 0
  %896 = vmatprep.subr.bf16.mxu0 0
  %897 = vmatpush1.bf16.xpose.msra.mxu0 0
  %898 = vmatprep.subr.bf16.mxu0 0
  %899 = vmatpush1.bf16.xpose.msra.mxu0 0
  %900 = vmatprep.subr.bf16.mxu0 0
  %901 = vmatpush1.bf16.xpose.msra.mxu0 0
  %902 = vmatprep.subr.bf16.mxu0 0
  %903 = vmatpush1.bf16.xpose.msra.mxu0 0
  %904 = vmatprep.subr.bf16.mxu0 0
  %905 = vmatpush1.bf16.xpose.msra.mxu0 0
  %906 = vmatprep.subr.bf16.mxu0 0
  %907 = vmatpush1.bf16.xpose.msra.mxu0 0
  %908 = vmatprep.subr.bf16.mxu0 0
  %909 = vmatpush1.bf16.xpose.msra.mxu0 0
  %910 = vmatprep.subr.bf16.mxu0 0
  %911 = vmatpush1.bf16.xpose.msra.mxu0 0
  %912 = vmatprep.mubr.bf16.mxu0 0
  %913 = vmatmul.mubr.bf16.gmra.mrb[0].mxu0 %v875
  %v914 = vpop.f32.mrb[0].mxu0
  %v915 = vadd.f32 0.0, %v914
  %v916 = vpop.f32.mrb[0].mxu0
  %v917 = vpop.f32.mrb[0].mxu0
  %v918 = vpop.f32.mrb[0].mxu0
  %919 = vdwg.mxu0
  %920 = vrot.lane.b32.xlu0 %v173, 104
  %v921 = vpop.permute.xlu0 %920
  %922 = vrot.lane.b32.xlu0 %v173, 72
  %v923 = vpop.permute.xlu0 %922
  %v925 = vsel %vm177, %v921, 0
  %v928 = vsel %vm177, %v923, 0
  %930 = vmatprep.subr.bf16.mxu0 0
  %931 = vmatpush1.bf16.xpose.msra.mxu0 %v928
  %932 = vmatprep.subr.bf16.mxu0 0
  %933 = vmatpush1.bf16.xpose.msra.mxu0 0
  %934 = vmatprep.subr.bf16.mxu0 0
  %935 = vmatpush1.bf16.xpose.msra.mxu0 0
  %936 = vmatprep.subr.bf16.mxu0 0
  %937 = vmatpush1.bf16.xpose.msra.mxu0 0
  %938 = vmatprep.subr.bf16.mxu0 0
  %939 = vmatpush1.bf16.xpose.msra.mxu0 0
  %940 = vmatprep.subr.bf16.mxu0 0
  %941 = vmatpush1.bf16.xpose.msra.mxu0 0
  %942 = vmatprep.subr.bf16.mxu0 0
  %943 = vmatpush1.bf16.xpose.msra.mxu0 0
  %944 = vmatprep.subr.bf16.mxu0 0
  %945 = vmatpush1.bf16.xpose.msra.mxu0 0
  %946 = vmatprep.subr.bf16.mxu0 0
  %947 = vmatpush1.bf16.xpose.msra.mxu0 0
  %948 = vmatprep.subr.bf16.mxu0 0
  %949 = vmatpush1.bf16.xpose.msra.mxu0 0
  %950 = vmatprep.subr.bf16.mxu0 0
  %951 = vmatpush1.bf16.xpose.msra.mxu0 0
  %952 = vmatprep.subr.bf16.mxu0 0
  %953 = vmatpush1.bf16.xpose.msra.mxu0 0
  %954 = vmatprep.subr.bf16.mxu0 0
  %955 = vmatpush1.bf16.xpose.msra.mxu0 0
  %956 = vmatprep.subr.bf16.mxu0 0
  %957 = vmatpush1.bf16.xpose.msra.mxu0 0
  %958 = vmatprep.subr.bf16.mxu0 0
  %959 = vmatpush1.bf16.xpose.msra.mxu0 0
  %960 = vmatprep.subr.bf16.mxu0 0
  %961 = vmatpush1.bf16.xpose.msra.mxu0 0
  %962 = vmatprep.mubr.bf16.mxu0 0
  %963 = vmatmul.mubr.bf16.gmra.mrb[0].mxu0 %v925
  %v964 = vpop.f32.mrb[0].mxu0
  %v965 = vadd.f32 0.0, %v964
  %v966 = vpop.f32.mrb[0].mxu0
  %v967 = vpop.f32.mrb[0].mxu0
  %v968 = vpop.f32.mrb[0].mxu0
  %969 = vdwg.mxu0
  %v970 = vmul.f32 %v915, 0.35355338
  %v971 = vmul.f32 %v965, 0.35355338
  %v972 = vadd.f32 %v970, %v102
  %v973 = vadd.f32 %v971, %v103
  %v974 = vsel %vm177, %v972, -inf
  %975 = vmax.xlane.f32.xlu0 %v974
  %v976 = vpop.xlane.xlu0 %975
  %v977 = vsel %vm177, %v973, -inf
  %978 = vmax.xlane.f32.xlu0 %v977
  %v979 = vpop.xlane.xlu0 %978
  %v980 = vsub.f32 %v972, %v976
  %v981 = vsub.f32 %v973, %v979
  %v982 = vmul.f32 %v980, 1.442695
  %v983 = vpow.pop %v982
  %v984 = vmul.f32 %v981, 1.442695
  %v985 = vpow.pop %v984
  %v986 = vsel %vm177, %v983, 0.0
  %987 = vadd.xlane.f32.xlu0 %v986
  %v988 = vpop.xlane.xlu0 %987
  %v989 = vsel %vm177, %v985, 0.0
  %990 = vadd.xlane.f32.xlu0 %v989
  %v991 = vpop.xlane.xlu0 %990
  %v992 = vrcp.pop %v988
  %v993 = vrcp.pop %v991
  %v994 = vmul.f32 %v983, %v992
  %v995 = vmul.f32 %v985, %v993
  %v996 = vpack.c.bf16 %v994, %v994
  %v997 = vpack.c.bf16 %v995, %v995
  %998 = vrot.lane.b32.xlu0 %v172, 40
  %v999 = vpop.permute.xlu0 %998
  %v1001 = vsel %vm177, %v996, 0
  %v1004 = vsel %vm306, %v999, 0
  %1006 = vmatprep.subr.bf16.mxu0 0
  %1007 = vmatpush1.bf16.msra.mxu0 %v1004
  %1008 = vmatprep.subr.bf16.mxu0 0
  %1009 = vmatpush1.bf16.msra.mxu0 0
  %1010 = vmatprep.subr.bf16.mxu0 0
  %1011 = vmatpush1.bf16.msra.mxu0 0
  %1012 = vmatprep.subr.bf16.mxu0 0
  %1013 = vmatpush1.bf16.msra.mxu0 0
  %1014 = vmatprep.subr.bf16.mxu0 0
  %1015 = vmatpush1.bf16.msra.mxu0 0
  %1016 = vmatprep.subr.bf16.mxu0 0
  %1017 = vmatpush1.bf16.msra.mxu0 0
  %1018 = vmatprep.subr.bf16.mxu0 0
  %1019 = vmatpush1.bf16.msra.mxu0 0
  %1020 = vmatprep.subr.bf16.mxu0 0
  %1021 = vmatpush1.bf16.msra.mxu0 0
  %1022 = vmatprep.subr.bf16.mxu0 0
  %1023 = vmatpush1.bf16.msra.mxu0 0
  %1024 = vmatprep.subr.bf16.mxu0 0
  %1025 = vmatpush1.bf16.msra.mxu0 0
  %1026 = vmatprep.subr.bf16.mxu0 0
  %1027 = vmatpush1.bf16.msra.mxu0 0
  %1028 = vmatprep.subr.bf16.mxu0 0
  %1029 = vmatpush1.bf16.msra.mxu0 0
  %1030 = vmatprep.subr.bf16.mxu0 0
  %1031 = vmatpush1.bf16.msra.mxu0 0
  %1032 = vmatprep.subr.bf16.mxu0 0
  %1033 = vmatpush1.bf16.msra.mxu0 0
  %1034 = vmatprep.subr.bf16.mxu0 0
  %1035 = vmatpush1.bf16.msra.mxu0 0
  %1036 = vmatprep.subr.bf16.mxu0 0
  %1037 = vmatpush1.bf16.msra.mxu0 0
  %1038 = vmatprep.mubr.bf16.mxu0 0
  %1039 = vmatmul.mubr.bf16.gmra.mrb[0].mxu0 %v1001
  %v1040 = vpop.f32.mrb[0].mxu0
  %v1041 = vadd.f32 0.0, %v1040
  %v1042 = vpop.f32.mrb[0].mxu0
  %v1043 = vpop.f32.mrb[0].mxu0
  %v1044 = vpop.f32.mrb[0].mxu0
  %1045 = vdwg.mxu0
  %1046 = vrot.lane.b32.xlu0 %v173, 40
  %v1047 = vpop.permute.xlu0 %1046
  %v1049 = vsel %vm177, %v997, 0
  %v1052 = vsel %vm306, %v1047, 0
  %1054 = vmatprep.subr.bf16.mxu0 0
  %1055 = vmatpush1.bf16.msra.mxu0 %v1052
  %1056 = vmatprep.subr.bf16.mxu0 0
  %1057 = vmatpush1.bf16.msra.mxu0 0
  %1058 = vmatprep.subr.bf16.mxu0 0
  %1059 = vmatpush1.bf16.msra.mxu0 0
  %1060 = vmatprep.subr.bf16.mxu0 0
  %1061 = vmatpush1.bf16.msra.mxu0 0
  %1062 = vmatprep.subr.bf16.mxu0 0
  %1063 = vmatpush1.bf16.msra.mxu0 0
  %1064 = vmatprep.subr.bf16.mxu0 0
  %1065 = vmatpush1.bf16.msra.mxu0 0
  %1066 = vmatprep.subr.bf16.mxu0 0
  %1067 = vmatpush1.bf16.msra.mxu0 0
  %1068 = vmatprep.subr.bf16.mxu0 0
  %1069 = vmatpush1.bf16.msra.mxu0 0
  %1070 = vmatprep.subr.bf16.mxu0 0
  %1071 = vmatpush1.bf16.msra.mxu0 0
  %1072 = vmatprep.subr.bf16.mxu0 0
  %1073 = vmatpush1.bf16.msra.mxu0 0
  %1074 = vmatprep.subr.bf16.mxu0 0
  %1075 = vmatpush1.bf16.msra.mxu0 0
  %1076 = vmatprep.subr.bf16.mxu0 0
  %1077 = vmatpush1.bf16.msra.mxu0 0
  %1078 = vmatprep.subr.bf16.mxu0 0
  %1079 = vmatpush1.bf16.msra.mxu0 0
  %1080 = vmatprep.subr.bf16.mxu0 0
  %1081 = vmatpush1.bf16.msra.mxu0 0
  %1082 = vmatprep.subr.bf16.mxu0 0
  %1083 = vmatpush1.bf16.msra.mxu0 0
  %1084 = vmatprep.subr.bf16.mxu0 0
  %1085 = vmatpush1.bf16.msra.mxu0 0
  %1086 = vmatprep.mubr.bf16.mxu0 0
  %1087 = vmatmul.mubr.bf16.gmra.mrb[0].mxu0 %v1049
  %v1088 = vpop.f32.mrb[0].mxu0
  %v1089 = vadd.f32 0.0, %v1088
  %v1090 = vpop.f32.mrb[0].mxu0
  %v1091 = vpop.f32.mrb[0].mxu0
  %v1092 = vpop.f32.mrb[0].mxu0
  %1093 = vdwg.mxu0
  %1096 = vrot.lane.b32.xlu0 %v1041, 24
  %v1097 = vpop.permute.xlu0 %1096
  %1098 = vrot.lane.b32.xlu0 %v1089, 24
  %v1099 = vpop.permute.xlu0 %1098
  %vm1102 = vcmask 261312
  %1103 = vst.msk [vmem:[#allocation2] sm:$0xff] %vm1102, %v1097
  %1104 = vst.msk [vmem:[#allocation2 + $0x8] sm:$0xff] %vm1102, %v1099
  %v1105 = vld [vmem:[#allocation2] sm:$0xff]
  %v1106 = vld [vmem:[#allocation2 + $0x8] sm:$0xff]
  %v1107 = vpack.c.bf16 %v1106, %v1105
  %v1108 = vld [vmem:[%s6] sm:$0xf]
  %v1109 = vld [vmem:[%s6 + $0x4] sm:$0xf]
  %v1110 = vld [vmem:[%s6 + $0x8] sm:$0xf]
  %v1111 = vld [vmem:[%s6 + $0xc] sm:$0xf]
  %v1112 = vld [vmem:[%s7] sm:$0x1]
  %v1114 = vlaneseq
  %v1115 = vshrl.u32 %v1114, 7
  %v1116 = vsub.s32 0, %v1115
  %v1117 = vrot.slane %v1112, %v1116
  %v1123 = vunpack.c.l.b16 %v1108
  %v1124 = vunpack.c.l.b16 %v1109
  %v1125 = vunpack.c.l.b16 %v1110
  %v1126 = vunpack.c.l.b16 %v1111
  %v1127 = vpack.c.b16 %v1124, %v1123
  %v1128 = vpack.c.b16 %v1126, %v1125
  %v1132 = vsel %vm58, %v1107, 0
  %1134 = vmatprep.subr.bf16.mxu0 0
  %1135 = vmatpush1.bf16.msra.mxu0 %v1127
  %1136 = vmatprep.subr.bf16.mxu0 0
  %1137 = vmatpush1.bf16.msra.mxu0 %v1128
  %1138 = vmatprep.subr.bf16.mxu0 0
  %1139 = vmatpush1.bf16.msra.mxu0 0
  %1140 = vmatprep.subr.bf16.mxu0 0
  %1141 = vmatpush1.bf16.msra.mxu0 0
  %1142 = vmatprep.subr.bf16.mxu0 0
  %1143 = vmatpush1.bf16.msra.mxu0 0
  %1144 = vmatprep.subr.bf16.mxu0 0
  %1145 = vmatpush1.bf16.msra.mxu0 0
  %1146 = vmatprep.subr.bf16.mxu0 0
  %1147 = vmatpush1.bf16.msra.mxu0 0
  %1148 = vmatprep.subr.bf16.mxu0 0
  %1149 = vmatpush1.bf16.msra.mxu0 0
  %1150 = vmatprep.subr.bf16.mxu0 0
  %1151 = vmatpush1.bf16.msra.mxu0 0
  %1152 = vmatprep.subr.bf16.mxu0 0
  %1153 = vmatpush1.bf16.msra.mxu0 0
  %1154 = vmatprep.subr.bf16.mxu0 0
  %1155 = vmatpush1.bf16.msra.mxu0 0
  %1156 = vmatprep.subr.bf16.mxu0 0
  %1157 = vmatpush1.bf16.msra.mxu0 0
  %1158 = vmatprep.subr.bf16.mxu0 0
  %1159 = vmatpush1.bf16.msra.mxu0 0
  %1160 = vmatprep.subr.bf16.mxu0 0
  %1161 = vmatpush1.bf16.msra.mxu0 0
  %1162 = vmatprep.subr.bf16.mxu0 0
  %1163 = vmatpush1.bf16.msra.mxu0 0
  %1164 = vmatprep.subr.bf16.mxu0 0
  %1165 = vmatpush1.bf16.msra.mxu0 0
  %1166 = vmatprep.mubr.bf16.mxu0 0
  %1167 = vmatmul.mubr.bf16.gmra.mrb[0].mxu0 %v1132
  %v1168 = vpop.f32.mrb[0].mxu0
  %v1169 = vadd.f32 %v1117, %v1168
  %v1170 = vpop.f32.mrb[0].mxu0
  %v1171 = vpop.f32.mrb[0].mxu0
  %v1172 = vadd.f32 %v1117, %v1171
  %v1173 = vpop.f32.mrb[0].mxu0
  %1174 = vdwg.mxu0
  %v1175 = vadd.f32 %v100, %v1169
  %v1176 = vadd.f32 %v101, %v1172
  %v1177 = vld [vmem:[%s8] sm:$0x1]
  %v1178 = vld [vmem:[%s9] sm:$0x1]
  %v1179 = vsel %vm58, %v1175, 0.0
  %1180 = vadd.xlane.f32.xlu0 %v1179
  %v1181 = vpop.xlane.xlu0 %1180
  %v1182 = vsel %vm58, %v1176, 0.0
  %1183 = vadd.xlane.f32.xlu0 %v1182
  %v1184 = vpop.xlane.xlu0 %1183
  %v1185 = vmul.f32 %v1181, %v65
  %v1186 = vmul.f32 %v1184, %v65
  %v1187 = vsub.f32 %v1175, %v1185
  %v1188 = vsub.f32 %v1176, %v1186
  %v1189 = vmul.f32 %v1187, %v1187
  %v1190 = vmul.f32 %v1188, %v1188
  %v1191 = vsel %vm58, %v1189, 0.0
  %1192 = vadd.xlane.f32.xlu0 %v1191
  %v1193 = vpop.xlane.xlu0 %1192
  %v1194 = vsel %vm58, %v1190, 0.0
  %1195 = vadd.xlane.f32.xlu0 %v1194
  %v1196 = vpop.xlane.xlu0 %1195
  %v1197 = vmul.f32 %v1193, %v65
  %v1198 = vmul.f32 %v1196, %v65
  %v1199 = vadd.f32 %v1197, 1e-05
  %v1200 = vadd.f32 %v1198, 1e-05
  %v1201 = vrsqrt.pop %v1199
  %v1202 = vrsqrt.pop %v1200
  %v1203 = vmul.f32 %v1187, %v1201
  %v1204 = vmul.f32 %v1188, %v1202
  %v1206 = vlaneseq
  %v1207 = vshrl.u32 %v1206, 7
  %v1208 = vsub.s32 0, %v1207
  %v1209 = vrot.slane %v1177, %v1208
  %v1211 = vmul.f32 %v1203, %v1209
  %v1212 = vmul.f32 %v1204, %v1209
  %v1214 = vlaneseq
  %v1215 = vshrl.u32 %v1214, 7
  %v1216 = vsub.s32 0, %v1215
  %v1217 = vrot.slane %v1178, %v1216
  %v1219 = vadd.f32 %v1211, %v1217
  %v1220 = vadd.f32 %v1212, %v1217
  %v1221 = vpack.c.bf16 %v1220, %v1219
  %v1222 = vld [vmem:[%s10] sm:$0xf]
  %v1223 = vld [vmem:[%s10 + $0x4] sm:$0xf]
  %v1224 = vld [vmem:[%s10 + $0x8] sm:$0xf]
  %v1225 = vld [vmem:[%s10 + $0xc] sm:$0xf]
  %v1226 = vld [vmem:[%s11] sm:$0x1]
  %v1228 = vlaneseq
  %v1229 = vshrl.u32 %v1228, 7
  %v1230 = vsub.s32 0, %v1229
  %v1231 = vrot.slane %v1226, %v1230
  %v1237 = vunpack.c.l.b16 %v1222
  %v1238 = vunpack.c.l.b16 %v1223
  %v1239 = vunpack.c.l.b16 %v1224
  %v1240 = vunpack.c.l.b16 %v1225
  %v1241 = vpack.c.b16 %v1238, %v1237
  %v1242 = vpack.c.b16 %v1240, %v1239
  %v1246 = vsel %vm58, %v1221, 0
  %1248 = vmatprep.subr.bf16.mxu0 0
  %1249 = vmatpush1.bf16.msra.mxu0 %v1241
  %1250 = vmatprep.subr.bf16.mxu0 0
  %1251 = vmatpush1.bf16.msra.mxu0 %v1242
  %1252 = vmatprep.subr.bf16.mxu0 0
  %1253 = vmatpush1.bf16.msra.mxu0 0
  %1254 = vmatprep.subr.bf16.mxu0 0
  %1255 = vmatpush1.bf16.msra.mxu0 0
  %1256 = vmatprep.subr.bf16.mxu0 0
  %1257 = vmatpush1.bf16.msra.mxu0 0
  %1258 = vmatprep.subr.bf16.mxu0 0
  %1259 = vmatpush1.bf16.msra.mxu0 0
  %1260 = vmatprep.subr.bf16.mxu0 0
  %1261 = vmatpush1.bf16.msra.mxu0 0
  %1262 = vmatprep.subr.bf16.mxu0 0
  %1263 = vmatpush1.bf16.msra.mxu0 0
  %1264 = vmatprep.subr.bf16.mxu0 0
  %1265 = vmatpush1.bf16.msra.mxu0 0
  %1266 = vmatprep.subr.bf16.mxu0 0
  %1267 = vmatpush1.bf16.msra.mxu0 0
  %1268 = vmatprep.subr.bf16.mxu0 0
  %1269 = vmatpush1.bf16.msra.mxu0 0
  %1270 = vmatprep.subr.bf16.mxu0 0
  %1271 = vmatpush1.bf16.msra.mxu0 0
  %1272 = vmatprep.subr.bf16.mxu0 0
  %1273 = vmatpush1.bf16.msra.mxu0 0
  %1274 = vmatprep.subr.bf16.mxu0 0
  %1275 = vmatpush1.bf16.msra.mxu0 0
  %1276 = vmatprep.subr.bf16.mxu0 0
  %1277 = vmatpush1.bf16.msra.mxu0 0
  %1278 = vmatprep.subr.bf16.mxu0 0
  %1279 = vmatpush1.bf16.msra.mxu0 0
  %1280 = vmatprep.mubr.bf16.mxu0 0
  %1281 = vmatmul.mubr.bf16.gmra.mrb[0].mxu0 %v1246
  %v1282 = vpop.f32.mrb[0].mxu0
  %v1283 = vadd.f32 %v1231, %v1282
  %v1284 = vpop.f32.mrb[0].mxu0
  %v1285 = vpop.f32.mrb[0].mxu0
  %v1286 = vadd.f32 %v1231, %v1285
  %v1287 = vpop.f32.mrb[0].mxu0
  %1288 = vdwg.mxu0
  %v1289 = vmul.f32 %v1283, 0.5
  %v1290 = vmul.f32 %v1286, 0.5
  %v1291 = vmul.f32 %v1283, 0.044715
  %v1292 = vmul.f32 %v1286, 0.044715
  %v1293 = vmul.f32 %v1291, %v1283
  %v1294 = vmul.f32 %v1292, %v1286
  %v1295 = vmul.f32 %v1293, %v1283
  %v1296 = vmul.f32 %v1294, %v1286
  %v1297 = vadd.f32 %v1283, %v1295
  %v1298 = vadd.f32 %v1286, %v1296
  %v1299 = vmul.f32 %v1297, 0.7978846
  %v1300 = vmul.f32 %v1298, 0.7978846
  %v1301 = vtanh.pop %v1299
  %v1302 = vtanh.pop %v1300
  %v1303 = vadd.f32 %v1301, 1.0
  %v1304 = vadd.f32 %v1302, 1.0
  %v1305 = vmul.f32 %v1289, %v1303
  %v1306 = vmul.f32 %v1290, %v1304
  %v1307 = vpack.c.bf16 %v1306, %v1305
  %v1308 = vld [vmem:[%s12] sm:$0xf]
  %v1309 = vld [vmem:[%s12 + $0x4] sm:$0xf]
  %v1310 = vld [vmem:[%s12 + $0x8] sm:$0xf]
  %v1311 = vld [vmem:[%s12 + $0xc] sm:$0xf]
  %v1312 = vld [vmem:[%s12 + $0x10] sm:$0xf]
  %v1313 = vld [vmem:[%s12 + $0x14] sm:$0xf]
  %v1314 = vld [vmem:[%s12 + $0x18] sm:$0xf]
  %v1315 = vld [vmem:[%s12 + $0x1c] sm:$0xf]
  %v1316 = vld [vmem:[%s13] sm:$0x1]
  %v1318 = vlaneseq
  %v1319 = vshrl.u32 %v1318, 7
  %v1320 = vsub.s32 0, %v1319
  %v1321 = vrot.slane %v1316, %v1320
  %v1331 = vunpack.c.l.b16 %v1308
  %v1332 = vunpack.c.l.b16 %v1309
  %v1333 = vunpack.c.l.b16 %v1310
  %v1334 = vunpack.c.l.b16 %v1311
  %v1335 = vunpack.c.l.b16 %v1312
  %v1336 = vunpack.c.l.b16 %v1313
  %v1337 = vunpack.c.l.b16 %v1314
  %v1338 = vunpack.c.l.b16 %v1315
  %v1339 = vpack.c.b16 %v1332, %v1331
  %v1340 = vpack.c.b16 %v1334, %v1333
  %v1341 = vpack.c.b16 %v1336, %v1335
  %v1342 = vpack.c.b16 %v1338, %v1337
  %vm1347 = vcmask 523264
  %v1349 = vsel %vm1347, %v1307, 0
  %1351 = vmatprep.subr.bf16.mxu0 0
  %1352 = vmatpush1.bf16.msra.mxu0 %v1339
  %1353 = vmatprep.subr.bf16.mxu0 0
  %1354 = vmatpush1.bf16.msra.mxu0 %v1340
  %1355 = vmatprep.subr.bf16.mxu0 0
  %1356 = vmatpush1.bf16.msra.mxu0 %v1341
  %1357 = vmatprep.subr.bf16.mxu0 0
  %1358 = vmatpush1.bf16.msra.mxu0 %v1342
  %1359 = vmatprep.subr.bf16.mxu0 0
  %1360 = vmatpush1.bf16.msra.mxu0 0
  %1361 = vmatprep.subr.bf16.mxu0 0
  %1362 = vmatpush1.bf16.msra.mxu0 0
  %1363 = vmatprep.subr.bf16.mxu0 0
  %1364 = vmatpush1.bf16.msra.mxu0 0
  %1365 = vmatprep.subr.bf16.mxu0 0
  %1366 = vmatpush1.bf16.msra.mxu0 0
  %1367 = vmatprep.subr.bf16.mxu0 0
  %1368 = vmatpush1.bf16.msra.mxu0 0
  %1369 = vmatprep.subr.bf16.mxu0 0
  %1370 = vmatpush1.bf16.msra.mxu0 0
  %1371 = vmatprep.subr.bf16.mxu0 0
  %1372 = vmatpush1.bf16.msra.mxu0 0
  %1373 = vmatprep.subr.bf16.mxu0 0
  %1374 = vmatpush1.bf16.msra.mxu0 0
  %1375 = vmatprep.subr.bf16.mxu0 0
  %1376 = vmatpush1.bf16.msra.mxu0 0
  %1377 = vmatprep.subr.bf16.mxu0 0
  %1378 = vmatpush1.bf16.msra.mxu0 0
  %1379 = vmatprep.subr.bf16.mxu0 0
  %1380 = vmatpush1.bf16.msra.mxu0 0
  %1381 = vmatprep.subr.bf16.mxu0 0
  %1382 = vmatpush1.bf16.msra.mxu0 0
  %1383 = vmatprep.mubr.bf16.mxu0 0
  %1384 = vmatmul.mubr.bf16.gmra.mrb[0].mxu0 %v1349
  %v1385 = vpop.f32.mrb[0].mxu0
  %v1386 = vadd.f32 %v1321, %v1385
  %v1387 = vpop.f32.mrb[0].mxu0
  %v1388 = vpop.f32.mrb[0].mxu0
  %v1389 = vadd.f32 %v1321, %v1388
  %v1390 = vpop.f32.mrb[0].mxu0
  %1391 = vdwg.mxu0
  %v1392 = vadd.f32 %v1219, %v1386
  %v1393 = vadd.f32 %v1220, %v1389
  %v1394 = vld [vmem:[%s14] sm:$0x1]
  %v1395 = vld [vmem:[%s15] sm:$0x1]
  %v1396 = vsel %vm58, %v1392, 0.0
  %1397 = vadd.xlane.f32.xlu0 %v1396
  %v1398 = vpop.xlane.xlu0 %1397
  %v1399 = vsel %vm58, %v1393, 0.0
  %1400 = vadd.xlane.f32.xlu0 %v1399
  %v1401 = vpop.xlane.xlu0 %1400
  %v1402 = vmul.f32 %v1398, %v65
  %v1403 = vmul.f32 %v1401, %v65
  %v1404 = vsub.f32 %v1392, %v1402
  %v1405 = vsub.f32 %v1393, %v1403
  %v1406 = vmul.f32 %v1404, %v1404
  %v1407 = vmul.f32 %v1405, %v1405
  %v1408 = vsel %vm58, %v1406, 0.0
  %1409 = vadd.xlane.f32.xlu0 %v1408
  %v1410 = vpop.xlane.xlu0 %1409
  %v1411 = vsel %vm58, %v1407, 0.0
  %1412 = vadd.xlane.f32.xlu0 %v1411
  %v1413 = vpop.xlane.xlu0 %1412
  %v1414 = vmul.f32 %v1410, %v65
  %v1415 = vmul.f32 %v1413, %v65
  %v1416 = vadd.f32 %v1414, 1e-05
  %v1417 = vadd.f32 %v1415, 1e-05
  %v1418 = vrsqrt.pop %v1416
  %v1419 = vrsqrt.pop %v1417
  %v1420 = vmul.f32 %v1404, %v1418
  %v1421 = vmul.f32 %v1405, %v1419
  %v1423 = vlaneseq
  %v1424 = vshrl.u32 %v1423, 7
  %v1425 = vsub.s32 0, %v1424
  %v1426 = vrot.slane %v1394, %v1425
  %v1428 = vmul.f32 %v1420, %v1426
  %v1429 = vmul.f32 %v1421, %v1426
  %v1431 = vlaneseq
  %v1432 = vshrl.u32 %v1431, 7
  %v1433 = vsub.s32 0, %v1432
  %v1434 = vrot.slane %v1395, %v1433
  %v1436 = vadd.f32 %v1428, %v1434
  %v1437 = vadd.f32 %v1429, %v1434
  %v1438 = vpack.c.bf16 %v1437, %v1436
  %s1439 = scalar_lea.vmem %s4, 16
  %v1440 = vld [vmem:[%s1439] sm:$0xf]
  %v1441 = vld [vmem:[%s1439 + $0x4] sm:$0xf]
  %v1442 = vld [vmem:[%s1439 + $0x8] sm:$0xf]
  %v1443 = vld [vmem:[%s1439 + $0xc] sm:$0xf]
  %s1444 = scalar_lea.vmem %s5, 1
  %v1445 = vld [vmem:[%s1444] sm:$0x1]
  %v1447 = vlaneseq
  %v1448 = vshrl.u32 %v1447, 7
  %v1449 = vsub.s32 0, %v1448
  %v1450 = vrot.slane %v1445, %v1449
  %v1456 = vunpack.c.l.b16 %v1440
  %v1457 = vunpack.c.l.b16 %v1441
  %v1458 = vunpack.c.l.b16 %v1442
  %v1459 = vunpack.c.l.b16 %v1443
  %v1460 = vpack.c.b16 %v1457, %v1456
  %v1461 = vpack.c.b16 %v1459, %v1458
  %v1465 = vsel %vm58, %v1438, 0
  %1467 = vmatprep.subr.bf16.mxu0 0
  %1468 = vmatpush1.bf16.msra.mxu0 %v1460
  %1469 = vmatprep.subr.bf16.mxu0 0
  %1470 = vmatpush1.bf16.msra.mxu0 %v1461
  %1471 = vmatprep.subr.bf16.mxu0 0
  %1472 = vmatpush1.bf16.msra.mxu0 0
  %1473 = vmatprep.subr.bf16.mxu0 0
  %1474 = vmatpush1.bf16.msra.mxu0 0
  %1475 = vmatprep.subr.bf16.mxu0 0
  %1476 = vmatpush1.bf16.msra.mxu0 0
  %1477 = vmatprep.subr.bf16.mxu0 0
  %1478 = vmatpush1.bf16.msra.mxu0 0
  %1479 = vmatprep.subr.bf16.mxu0 0
  %1480 = vmatpush1.bf16.msra.mxu0 0
  %1481 = vmatprep.subr.bf16.mxu0 0
  %1482 = vmatpush1.bf16.msra.mxu0 0
  %1483 = vmatprep.subr.bf16.mxu0 0
  %1484 = vmatpush1.bf16.msra.mxu0 0
  %1485 = vmatprep.subr.bf16.mxu0 0
  %1486 = vmatpush1.bf16.msra.mxu0 0
  %1487 = vmatprep.subr.bf16.mxu0 0
  %1488 = vmatpush1.bf16.msra.mxu0 0
  %1489 = vmatprep.subr.bf16.mxu0 0
  %1490 = vmatpush1.bf16.msra.mxu0 0
  %1491 = vmatprep.subr.bf16.mxu0 0
  %1492 = vmatpush1.bf16.msra.mxu0 0
  %1493 = vmatprep.subr.bf16.mxu0 0
  %1494 = vmatpush1.bf16.msra.mxu0 0
  %1495 = vmatprep.subr.bf16.mxu0 0
  %1496 = vmatpush1.bf16.msra.mxu0 0
  %1497 = vmatprep.subr.bf16.mxu0 0
  %1498 = vmatpush1.bf16.msra.mxu0 0
  %1499 = vmatprep.mubr.bf16.mxu0 0
  %1500 = vmatmul.mubr.bf16.gmra.mrb[0].mxu0 %v1465
  %v1501 = vpop.f32.mrb[0].mxu0
  %v1502 = vadd.f32 %v1450, %v1501
  %v1503 = vpop.f32.mrb[0].mxu0
  %v1504 = vpop.f32.mrb[0].mxu0
  %v1505 = vadd.f32 %v1450, %v1504
  %v1506 = vpop.f32.mrb[0].mxu0
  %1507 = vdwg.mxu0
  %v1508 = vpack.c.bf16 %v1502, %v1502
  %v1509 = vpack.c.bf16 %v1505, %v1505
  %1511 = vrot.lane.b32.xlu0 %v1508, 96
  %v1512 = vpop.permute.xlu0 %1511
  %v1514 = vsel %vm177, %v1508, 0
  %v1517 = vsel %vm177, %v1512, 0
  %1519 = vmatprep.subr.bf16.mxu0 0
  %1520 = vmatpush1.bf16.xpose.msra.mxu0 %v1517
  %1521 = vmatprep.subr.bf16.mxu0 0
  %1522 = vmatpush1.bf16.xpose.msra.mxu0 0
  %1523 = vmatprep.subr.bf16.mxu0 0
  %1524 = vmatpush1.bf16.xpose.msra.mxu0 0
  %1525 = vmatprep.subr.bf16.mxu0 0
  %1526 = vmatpush1.bf16.xpose.msra.mxu0 0
  %1527 = vmatprep.subr.bf16.mxu0 0
  %1528 = vmatpush1.bf16.xpose.msra.mxu0 0
  %1529 = vmatprep.subr.bf16.mxu0 0
  %1530 = vmatpush1.bf16.xpose.msra.mxu0 0
  %1531 = vmatprep.subr.bf16.mxu0 0
  %1532 = vmatpush1.bf16.xpose.msra.mxu0 0
  %1533 = vmatprep.subr.bf16.mxu0 0
  %1534 = vmatpush1.bf16.xpose.msra.mxu0 0
  %1535 = vmatprep.subr.bf16.mxu0 0
  %1536 = vmatpush1.bf16.xpose.msra.mxu0 0
  %1537 = vmatprep.subr.bf16.mxu0 0
  %1538 = vmatpush1.bf16.xpose.msra.mxu0 0
  %1539 = vmatprep.subr.bf16.mxu0 0
  %1540 = vmatpush1.bf16.xpose.msra.mxu0 0
  %1541 = vmatprep.subr.bf16.mxu0 0
  %1542 = vmatpush1.bf16.xpose.msra.mxu0 0
  %1543 = vmatprep.subr.bf16.mxu0 0
  %1544 = vmatpush1.bf16.xpose.msra.mxu0 0
  %1545 = vmatprep.subr.bf16.mxu0 0
  %1546 = vmatpush1.bf16.xpose.msra.mxu0 0
  %1547 = vmatprep.subr.bf16.mxu0 0
  %1548 = vmatpush1.bf16.xpose.msra.mxu0 0
  %1549 = vmatprep.subr.bf16.mxu0 0
  %1550 = vmatpush1.bf16.xpose.msra.mxu0 0
  %1551 = vmatprep.mubr.bf16.mxu0 0
  %1552 = vmatmul.mubr.bf16.gmra.mrb[0].mxu0 %v1514
  %v1553 = vpop.f32.mrb[0].mxu0
  %v1554 = vadd.f32 0.0, %v1553
  %v1555 = vpop.f32.mrb[0].mxu0
  %v1556 = vpop.f32.mrb[0].mxu0
  %v1557 = vpop.f32.mrb[0].mxu0
  %1558 = vdwg.mxu0
  %1560 = vrot.lane.b32.xlu0 %v1509, 96
  %v1561 = vpop.permute.xlu0 %1560
  %v1563 = vsel %vm177, %v1509, 0
  %v1566 = vsel %vm177, %v1561, 0
  %1568 = vmatprep.subr.bf16.mxu0 0
  %1569 = vmatpush1.bf16.xpose.msra.mxu0 %v1566
  %1570 = vmatprep.subr.bf16.mxu0 0
  %1571 = vmatpush1.bf16.xpose.msra.mxu0 0
  %1572 = vmatprep.subr.bf16.mxu0 0
  %1573 = vmatpush1.bf16.xpose.msra.mxu0 0
  %1574 = vmatprep.subr.bf16.mxu0 0
  %1575 = vmatpush1.bf16.xpose.msra.mxu0 0
  %1576 = vmatprep.subr.bf16.mxu0 0
  %1577 = vmatpush1.bf16.xpose.msra.mxu0 0
  %1578 = vmatprep.subr.bf16.mxu0 0
  %1579 = vmatpush1.bf16.xpose.msra.mxu0 0
  %1580 = vmatprep.subr.bf16.mxu0 0
  %1581 = vmatpush1.bf16.xpose.msra.mxu0 0
  %1582 = vmatprep.subr.bf16.mxu0 0
  %1583 = vmatpush1.bf16.xpose.msra.mxu0 0
  %1584 = vmatprep.subr.bf16.mxu0 0
  %1585 = vmatpush1.bf16.xpose.msra.mxu0 0
  %1586 = vmatprep.subr.bf16.mxu0 0
  %1587 = vmatpush1.bf16.xpose.msra.mxu0 0
  %1588 = vmatprep.subr.bf16.mxu0 0
  %1589 = vmatpush1.bf16.xpose.msra.mxu0 0
  %1590 = vmatprep.subr.bf16.mxu0 0
  %1591 = vmatpush1.bf16.xpose.msra.mxu0 0
  %1592 = vmatprep.subr.bf16.mxu0 0
  %1593 = vmatpush1.bf16.xpose.msra.mxu0 0
  %1594 = vmatprep.subr.bf16.mxu0 0
  %1595 = vmatpush1.bf16.xpose.msra.mxu0 0
  %1596 = vmatprep.subr.bf16.mxu0 0
  %1597 = vmatpush1.bf16.xpose.msra.mxu0 0
  %1598 = vmatprep.subr.bf16.mxu0 0
  %1599 = vmatpush1.bf16.xpose.msra.mxu0 0
  %1600 = vmatprep.mubr.bf16.mxu0 0
  %1601 = vmatmul.mubr.bf16.gmra.mrb[0].mxu0 %v1563
  %v1602 = vpop.f32.mrb[0].mxu0
  %v1603 = vadd.f32 0.0, %v1602
  %v1604 = vpop.f32.mrb[0].mxu0
  %v1605 = vpop.f32.mrb[0].mxu0
  %v1606 = vpop.f32.mrb[0].mxu0
  %1607 = vdwg.mxu0
  %v1608 = vmul.f32 %v1554, 0.35355338
  %v1609 = vmul.f32 %v1603, 0.35355338
  %v1610 = vadd.f32 %v1608, %v102
  %v1611 = vadd.f32 %v1609, %v103
  %v1612 = vsel %vm177, %v1610, -inf
  %1613 = vmax.xlane.f32.xlu0 %v1612
  %v1614 = vpop.xlane.xlu0 %1613
  %v1615 = vsel %vm177, %v1611, -inf
  %1616 = vmax.xlane.f32.xlu0 %v1615
  %v1617 = vpop.xlane.xlu0 %1616
  %v1618 = vsub.f32 %v1610, %v1614
  %v1619 = vsub.f32 %v1611, %v1617
  %v1620 = vmul.f32 %v1618, 1.442695
  %v1621 = vpow.pop %v1620
  %v1622 = vmul.f32 %v1619, 1.442695
  %v1623 = vpow.pop %v1622
  %v1624 = vsel %vm177, %v1621, 0.0
  %1625 = vadd.xlane.f32.xlu0 %v1624
  %v1626 = vpop.xlane.xlu0 %1625
  %v1627 = vsel %vm177, %v1623, 0.0
  %1628 = vadd.xlane.f32.xlu0 %v1627
  %v1629 = vpop.xlane.xlu0 %1628
  %v1630 = vrcp.pop %v1626
  %v1631 = vrcp.pop %v1629
  %v1632 = vmul.f32 %v1621, %v1630
  %v1633 = vmul.f32 %v1623, %v1631
  %v1634 = vpack.c.bf16 %v1632, %v1632
  %v1635 = vpack.c.bf16 %v1633, %v1633
  %1636 = vrot.lane.b32.xlu0 %v1508, 64
  %v1637 = vpop.permute.xlu0 %1636
  %v1639 = vsel %vm177, %v1634, 0
  %v1642 = vsel %vm306, %v1637, 0
  %1644 = vmatprep.subr.bf16.mxu0 0
  %1645 = vmatpush1.bf16.msra.mxu0 %v1642
  %1646 = vmatprep.subr.bf16.mxu0 0
  %1647 = vmatpush1.bf16.msra.mxu0 0
  %1648 = vmatprep.subr.bf16.mxu0 0
  %1649 = vmatpush1.bf16.msra.mxu0 0
  %1650 = vmatprep.subr.bf16.mxu0 0
  %1651 = vmatpush1.bf16.msra.mxu0 0
  %1652 = vmatprep.subr.bf16.mxu0 0
  %1653 = vmatpush1.bf16.msra.mxu0 0
  %1654 = vmatprep.subr.bf16.mxu0 0
  %1655 = vmatpush1.bf16.msra.mxu0 0
  %1656 = vmatprep.subr.bf16.mxu0 0
  %1657 = vmatpush1.bf16.msra.mxu0 0
  %1658 = vmatprep.subr.bf16.mxu0 0
  %1659 = vmatpush1.bf16.msra.mxu0 0
  %1660 = vmatprep.subr.bf16.mxu0 0
  %1661 = vmatpush1.bf16.msra.mxu0 0
  %1662 = vmatprep.subr.bf16.mxu0 0
  %1663 = vmatpush1.bf16.msra.mxu0 0
  %1664 = vmatprep.subr.bf16.mxu0 0
  %1665 = vmatpush1.bf16.msra.mxu0 0
  %1666 = vmatprep.subr.bf16.mxu0 0
  %1667 = vmatpush1.bf16.msra.mxu0 0
  %1668 = vmatprep.subr.bf16.mxu0 0
  %1669 = vmatpush1.bf16.msra.mxu0 0
  %1670 = vmatprep.subr.bf16.mxu0 0
  %1671 = vmatpush1.bf16.msra.mxu0 0
  %1672 = vmatprep.subr.bf16.mxu0 0
  %1673 = vmatpush1.bf16.msra.mxu0 0
  %1674 = vmatprep.subr.bf16.mxu0 0
  %1675 = vmatpush1.bf16.msra.mxu0 0
  %1676 = vmatprep.mubr.bf16.mxu0 0
  %1677 = vmatmul.mubr.bf16.gmra.mrb[0].mxu0 %v1639
  %v1678 = vpop.f32.mrb[0].mxu0
  %v1679 = vadd.f32 0.0, %v1678
  %v1680 = vpop.f32.mrb[0].mxu0
  %v1681 = vpop.f32.mrb[0].mxu0
  %v1682 = vpop.f32.mrb[0].mxu0
  %1683 = vdwg.mxu0
  %1684 = vrot.lane.b32.xlu0 %v1509, 64
  %v1685 = vpop.permute.xlu0 %1684
  %v1687 = vsel %vm177, %v1635, 0
  %v1690 = vsel %vm306, %v1685, 0
  %1692 = vmatprep.subr.bf16.mxu0 0
  %1693 = vmatpush1.bf16.msra.mxu0 %v1690
  %1694 = vmatprep.subr.bf16.mxu0 0
  %1695 = vmatpush1.bf16.msra.mxu0 0
  %1696 = vmatprep.subr.bf16.mxu0 0
  %1697 = vmatpush1.bf16.msra.mxu0 0
  %1698 = vmatprep.subr.bf16.mxu0 0
  %1699 = vmatpush1.bf16.msra.mxu0 0
  %1700 = vmatprep.subr.bf16.mxu0 0
  %1701 = vmatpush1.bf16.msra.mxu0 0
  %1702 = vmatprep.subr.bf16.mxu0 0
  %1703 = vmatpush1.bf16.msra.mxu0 0
  %1704 = vmatprep.subr.bf16.mxu0 0
  %1705 = vmatpush1.bf16.msra.mxu0 0
  %1706 = vmatprep.subr.bf16.mxu0 0
  %1707 = vmatpush1.bf16.msra.mxu0 0
  %1708 = vmatprep.subr.bf16.mxu0 0
  %1709 = vmatpush1.bf16.msra.mxu0 0
  %1710 = vmatprep.subr.bf16.mxu0 0
  %1711 = vmatpush1.bf16.msra.mxu0 0
  %1712 = vmatprep.subr.bf16.mxu0 0
  %1713 = vmatpush1.bf16.msra.mxu0 0
  %1714 = vmatprep.subr.bf16.mxu0 0
  %1715 = vmatpush1.bf16.msra.mxu0 0
  %1716 = vmatprep.subr.bf16.mxu0 0
  %1717 = vmatpush1.bf16.msra.mxu0 0
  %1718 = vmatprep.subr.bf16.mxu0 0
  %1719 = vmatpush1.bf16.msra.mxu0 0
  %1720 = vmatprep.subr.bf16.mxu0 0
  %1721 = vmatpush1.bf16.msra.mxu0 0
  %1722 = vmatprep.subr.bf16.mxu0 0
  %1723 = vmatpush1.bf16.msra.mxu0 0
  %1724 = vmatprep.mubr.bf16.mxu0 0
  %1725 = vmatmul.mubr.bf16.gmra.mrb[0].mxu0 %v1687
  %v1726 = vpop.f32.mrb[0].mxu0
  %v1727 = vadd.f32 0.0, %v1726
  %v1728 = vpop.f32.mrb[0].mxu0
  %v1729 = vpop.f32.mrb[0].mxu0
  %v1730 = vpop.f32.mrb[0].mxu0
  %1731 = vdwg.mxu0
  %1732 = vst.msk [vmem:[#allocation2] sm:$0xff] %vm177, %v1679
  %1733 = vst.msk [vmem:[#allocation2 + $0x8] sm:$0xff] %vm177, %v1727
  %1734 = vrot.lane.b32.xlu0 %v1508, 120
  %v1735 = vpop.permute.xlu0 %1734
  %1736 = vrot.lane.b32.xlu0 %v1508, 88
  %v1737 = vpop.permute.xlu0 %1736
  %v1739 = vsel %vm177, %v1735, 0
  %v1742 = vsel %vm177, %v1737, 0
  %1744 = vmatprep.subr.bf16.mxu0 0
  %1745 = vmatpush1.bf16.xpose.msra.mxu0 %v1742
  %1746 = vmatprep.subr.bf16.mxu0 0
  %1747 = vmatpush1.bf16.xpose.msra.mxu0 0
  %1748 = vmatprep.subr.bf16.mxu0 0
  %1749 = vmatpush1.bf16.xpose.msra.mxu0 0
  %1750 = vmatprep.subr.bf16.mxu0 0
  %1751 = vmatpush1.bf16.xpose.msra.mxu0 0
  %1752 = vmatprep.subr.bf16.mxu0 0
  %1753 = vmatpush1.bf16.xpose.msra.mxu0 0
  %1754 = vmatprep.subr.bf16.mxu0 0
  %1755 = vmatpush1.bf16.xpose.msra.mxu0 0
  %1756 = vmatprep.subr.bf16.mxu0 0
  %1757 = vmatpush1.bf16.xpose.msra.mxu0 0
  %1758 = vmatprep.subr.bf16.mxu0 0
  %1759 = vmatpush1.bf16.xpose.msra.mxu0 0
  %1760 = vmatprep.subr.bf16.mxu0 0
  %1761 = vmatpush1.bf16.xpose.msra.mxu0 0
  %1762 = vmatprep.subr.bf16.mxu0 0
  %1763 = vmatpush1.bf16.xpose.msra.mxu0 0
  %1764 = vmatprep.subr.bf16.mxu0 0
  %1765 = vmatpush1.bf16.xpose.msra.mxu0 0
  %1766 = vmatprep.subr.bf16.mxu0 0
  %1767 = vmatpush1.bf16.xpose.msra.mxu0 0
  %1768 = vmatprep.subr.bf16.mxu0 0
  %1769 = vmatpush1.bf16.xpose.msra.mxu0 0
  %1770 = vmatprep.subr.bf16.mxu0 0
  %1771 = vmatpush1.bf16.xpose.msra.mxu0 0
  %1772 = vmatprep.subr.bf16.mxu0 0
  %1773 = vmatpush1.bf16.xpose.msra.mxu0 0
  %1774 = vmatprep.subr.bf16.mxu0 0
  %1775 = vmatpush1.bf16.xpose.msra.mxu0 0
  %1776 = vmatprep.mubr.bf16.mxu0 0
  %1777 = vmatmul.mubr.bf16.gmra.mrb[0].mxu0 %v1739
  %v1778 = vpop.f32.mrb[0].mxu0
  %v1779 = vadd.f32 0.0, %v1778
  %v1780 = vpop.f32.mrb[0].mxu0
  %v1781 = vpop.f32.mrb[0].mxu0
  %v1782 = vpop.f32.mrb[0].mxu0
  %1783 = vdwg.mxu0
  %1784 = vrot.lane.b32.xlu0 %v1509, 120
  %v1785 = vpop.permute.xlu0 %1784
  %1786 = vrot.lane.b32.xlu0 %v1509, 88
  %v1787 = vpop.permute.xlu0 %1786
  %v1789 = vsel %vm177, %v1785, 0
  %v1792 = vsel %vm177, %v1787, 0
  %1794 = vmatprep.subr.bf16.mxu0 0
  %1795 = vmatpush1.bf16.xpose.msra.mxu0 %v1792
  %1796 = vmatprep.subr.bf16.mxu0 0
  %1797 = vmatpush1.bf16.xpose.msra.mxu0 0
  %1798 = vmatprep.subr.bf16.mxu0 0
  %1799 = vmatpush1.bf16.xpose.msra.mxu0 0
  %1800 = vmatprep.subr.bf16.mxu0 0
  %1801 = vmatpush1.bf16.xpose.msra.mxu0 0
  %1802 = vmatprep.subr.bf16.mxu0 0
  %1803 = vmatpush1.bf16.xpose.msra.mxu0 0
  %1804 = vmatprep.subr.bf16.mxu0 0
  %1805 = vmatpush1.bf16.xpose.msra.mxu0 0
  %1806 = vmatprep.subr.bf16.mxu0 0
  %1807 = vmatpush1.bf16.xpose.msra.mxu0 0
  %1808 = vmatprep.subr.bf16.mxu0 0
  %1809 = vmatpush1.bf16.xpose.msra.mxu0 0
  %1810 = vmatprep.subr.bf16.mxu0 0
  %1811 = vmatpush1.bf16.xpose.msra.mxu0 0
  %1812 = vmatprep.subr.bf16.mxu0 0
  %1813 = vmatpush1.bf16.xpose.msra.mxu0 0
  %1814 = vmatprep.subr.bf16.mxu0 0
  %1815 = vmatpush1.bf16.xpose.msra.mxu0 0
  %1816 = vmatprep.subr.bf16.mxu0 0
  %1817 = vmatpush1.bf16.xpose.msra.mxu0 0
  %1818 = vmatprep.subr.bf16.mxu0 0
  %1819 = vmatpush1.bf16.xpose.msra.mxu0 0
  %1820 = vmatprep.subr.bf16.mxu0 0
  %1821 = vmatpush1.bf16.xpose.msra.mxu0 0
  %1822 = vmatprep.subr.bf16.mxu0 0
  %1823 = vmatpush1.bf16.xpose.msra.mxu0 0
  %1824 = vmatprep.subr.bf16.mxu0 0
  %1825 = vmatpush1.bf16.xpose.msra.mxu0 0
  %1826 = vmatprep.mubr.bf16.mxu0 0
  %1827 = vmatmul.mubr.bf16.gmra.mrb[0].mxu0 %v1789
  %v1828 = vpop.f32.mrb[0].mxu0
  %v1829 = vadd.f32 0.0, %v1828
  %v1830 = vpop.f32.mrb[0].mxu0
  %v1831 = vpop.f32.mrb[0].mxu0
  %v1832 = vpop.f32.mrb[0].mxu0
  %1833 = vdwg.mxu0
  %v1834 = vmul.f32 %v1779, 0.35355338
  %v1835 = vmul.f32 %v1829, 0.35355338
  %v1836 = vadd.f32 %v1834, %v102
  %v1837 = vadd.f32 %v1835, %v103
  %v1838 = vsel %vm177, %v1836, -inf
  %1839 = vmax.xlane.f32.xlu0 %v1838
  %v1840 = vpop.xlane.xlu0 %1839
  %v1841 = vsel %vm177, %v1837, -inf
  %1842 = vmax.xlane.f32.xlu0 %v1841
  %v1843 = vpop.xlane.xlu0 %1842
  %v1844 = vsub.f32 %v1836, %v1840
  %v1845 = vsub.f32 %v1837, %v1843
  %v1846 = vmul.f32 %v1844, 1.442695
  %v1847 = vpow.pop %v1846
  %v1848 = vmul.f32 %v1845, 1.442695
  %v1849 = vpow.pop %v1848
  %v1850 = vsel %vm177, %v1847, 0.0
  %1851 = vadd.xlane.f32.xlu0 %v1850
  %v1852 = vpop.xlane.xlu0 %1851
  %v1853 = vsel %vm177, %v1849, 0.0
  %1854 = vadd.xlane.f32.xlu0 %v1853
  %v1855 = vpop.xlane.xlu0 %1854
  %v1856 = vrcp.pop %v1852
  %v1857 = vrcp.pop %v1855
  %v1858 = vmul.f32 %v1847, %v1856
  %v1859 = vmul.f32 %v1849, %v1857
  %v1860 = vpack.c.bf16 %v1858, %v1858
  %v1861 = vpack.c.bf16 %v1859, %v1859
  %1862 = vrot.lane.b32.xlu0 %v1508, 56
  %v1863 = vpop.permute.xlu0 %1862
  %v1865 = vsel %vm177, %v1860, 0
  %v1868 = vsel %vm306, %v1863, 0
  %1870 = vmatprep.subr.bf16.mxu0 0
  %1871 = vmatpush1.bf16.msra.mxu0 %v1868
  %1872 = vmatprep.subr.bf16.mxu0 0
  %1873 = vmatpush1.bf16.msra.mxu0 0
  %1874 = vmatprep.subr.bf16.mxu0 0
  %1875 = vmatpush1.bf16.msra.mxu0 0
  %1876 = vmatprep.subr.bf16.mxu0 0
  %1877 = vmatpush1.bf16.msra.mxu0 0
  %1878 = vmatprep.subr.bf16.mxu0 0
  %1879 = vmatpush1.bf16.msra.mxu0 0
  %1880 = vmatprep.subr.bf16.mxu0 0
  %1881 = vmatpush1.bf16.msra.mxu0 0
  %1882 = vmatprep.subr.bf16.mxu0 0
  %1883 = vmatpush1.bf16.msra.mxu0 0
  %1884 = vmatprep.subr.bf16.mxu0 0
  %1885 = vmatpush1.bf16.msra.mxu0 0
  %1886 = vmatprep.subr.bf16.mxu0 0
  %1887 = vmatpush1.bf16.msra.mxu0 0
  %1888 = vmatprep.subr.bf16.mxu0 0
  %1889 = vmatpush1.bf16.msra.mxu0 0
  %1890 = vmatprep.subr.bf16.mxu0 0
  %1891 = vmatpush1.bf16.msra.mxu0 0
  %1892 = vmatprep.subr.bf16.mxu0 0
  %1893 = vmatpush1.bf16.msra.mxu0 0
  %1894 = vmatprep.subr.bf16.mxu0 0
  %1895 = vmatpush1.bf16.msra.mxu0 0
  %1896 = vmatprep.subr.bf16.mxu0 0
  %1897 = vmatpush1.bf16.msra.mxu0 0
  %1898 = vmatprep.subr.bf16.mxu0 0
  %1899 = vmatpush1.bf16.msra.mxu0 0
  %1900 = vmatprep.subr.bf16.mxu0 0
  %1901 = vmatpush1.bf16.msra.mxu0 0
  %1902 = vmatprep.mubr.bf16.mxu0 0
  %1903 = vmatmul.mubr.bf16.gmra.mrb[0].mxu0 %v1865
  %v1904 = vpop.f32.mrb[0].mxu0
  %v1905 = vadd.f32 0.0, %v1904
  %v1906 = vpop.f32.mrb[0].mxu0
  %v1907 = vpop.f32.mrb[0].mxu0
  %v1908 = vpop.f32.mrb[0].mxu0
  %1909 = vdwg.mxu0
  %1910 = vrot.lane.b32.xlu0 %v1509, 56
  %v1911 = vpop.permute.xlu0 %1910
  %v1913 = vsel %vm177, %v1861, 0
  %v1916 = vsel %vm306, %v1911, 0
  %1918 = vmatprep.subr.bf16.mxu0 0
  %1919 = vmatpush1.bf16.msra.mxu0 %v1916
  %1920 = vmatprep.subr.bf16.mxu0 0
  %1921 = vmatpush1.bf16.msra.mxu0 0
  %1922 = vmatprep.subr.bf16.mxu0 0
  %1923 = vmatpush1.bf16.msra.mxu0 0
  %1924 = vmatprep.subr.bf16.mxu0 0
  %1925 = vmatpush1.bf16.msra.mxu0 0
  %1926 = vmatprep.subr.bf16.mxu0 0
  %1927 = vmatpush1.bf16.msra.mxu0 0
  %1928 = vmatprep.subr.bf16.mxu0 0
  %1929 = vmatpush1.bf16.msra.mxu0 0
  %1930 = vmatprep.subr.bf16.mxu0 0
  %1931 = vmatpush1.bf16.msra.mxu0 0
  %1932 = vmatprep.subr.bf16.mxu0 0
  %1933 = vmatpush1.bf16.msra.mxu0 0
  %1934 = vmatprep.subr.bf16.mxu0 0
  %1935 = vmatpush1.bf16.msra.mxu0 0
  %1936 = vmatprep.subr.bf16.mxu0 0
  %1937 = vmatpush1.bf16.msra.mxu0 0
  %1938 = vmatprep.subr.bf16.mxu0 0
  %1939 = vmatpush1.bf16.msra.mxu0 0
  %1940 = vmatprep.subr.bf16.mxu0 0
  %1941 = vmatpush1.bf16.msra.mxu0 0
  %1942 = vmatprep.subr.bf16.mxu0 0
  %1943 = vmatpush1.bf16.msra.mxu0 0
  %1944 = vmatprep.subr.bf16.mxu0 0
  %1945 = vmatpush1.bf16.msra.mxu0 0
  %1946 = vmatprep.subr.bf16.mxu0 0
  %1947 = vmatpush1.bf16.msra.mxu0 0
  %1948 = vmatprep.subr.bf16.mxu0 0
  %1949 = vmatpush1.bf16.msra.mxu0 0
  %1950 = vmatprep.mubr.bf16.mxu0 0
  %1951 = vmatmul.mubr.bf16.gmra.mrb[0].mxu0 %v1913
  %v1952 = vpop.f32.mrb[0].mxu0
  %v1953 = vadd.f32 0.0, %v1952
  %v1954 = vpop.f32.mrb[0].mxu0
  %v1955 = vpop.f32.mrb[0].mxu0
  %v1956 = vpop.f32.mrb[0].mxu0
  %1957 = vdwg.mxu0
  %1960 = vrot.lane.b32.xlu0 %v1905, 8
  %v1961 = vpop.permute.xlu0 %1960
  %1962 = vrot.lane.b32.xlu0 %v1953, 8
  %v1963 = vpop.permute.xlu0 %1962
  %1966 = vst.msk [vmem:[#allocation2] sm:$0xff] %vm632, %v1961
  %1967 = vst.msk [vmem:[#allocation2 + $0x8] sm:$0xff] %vm632, %v1963
  %1968 = vrot.lane.b32.xlu0 %v1508, 112
  %v1969 = vpop.permute.xlu0 %1968
  %1970 = vrot.lane.b32.xlu0 %v1508, 80
  %v1971 = vpop.permute.xlu0 %1970
  %v1973 = vsel %vm177, %v1969, 0
  %v1976 = vsel %vm177, %v1971, 0
  %1978 = vmatprep.subr.bf16.mxu0 0
  %1979 = vmatpush1.bf16.xpose.msra.mxu0 %v1976
  %1980 = vmatprep.subr.bf16.mxu0 0
  %1981 = vmatpush1.bf16.xpose.msra.mxu0 0
  %1982 = vmatprep.subr.bf16.mxu0 0
  %1983 = vmatpush1.bf16.xpose.msra.mxu0 0
  %1984 = vmatprep.subr.bf16.mxu0 0
  %1985 = vmatpush1.bf16.xpose.msra.mxu0 0
  %1986 = vmatprep.subr.bf16.mxu0 0
  %1987 = vmatpush1.bf16.xpose.msra.mxu0 0
  %1988 = vmatprep.subr.bf16.mxu0 0
  %1989 = vmatpush1.bf16.xpose.msra.mxu0 0
  %1990 = vmatprep.subr.bf16.mxu0 0
  %1991 = vmatpush1.bf16.xpose.msra.mxu0 0
  %1992 = vmatprep.subr.bf16.mxu0 0
  %1993 = vmatpush1.bf16.xpose.msra.mxu0 0
  %1994 = vmatprep.subr.bf16.mxu0 0
  %1995 = vmatpush1.bf16.xpose.msra.mxu0 0
  %1996 = vmatprep.subr.bf16.mxu0 0
  %1997 = vmatpush1.bf16.xpose.msra.mxu0 0
  %1998 = vmatprep.subr.bf16.mxu0 0
  %1999 = vmatpush1.bf16.xpose.msra.mxu0 0
  %2000 = vmatprep.subr.bf16.mxu0 0
  %2001 = vmatpush1.bf16.xpose.msra.mxu0 0
  %2002 = vmatprep.subr.bf16.mxu0 0
  %2003 = vmatpush1.bf16.xpose.msra.mxu0 0
  %2004 = vmatprep.subr.bf16.mxu0 0
  %2005 = vmatpush1.bf16.xpose.msra.mxu0 0
  %2006 = vmatprep.subr.bf16.mxu0 0
  %2007 = vmatpush1.bf16.xpose.msra.mxu0 0
  %2008 = vmatprep.subr.bf16.mxu0 0
  %2009 = vmatpush1.bf16.xpose.msra.mxu0 0
  %2010 = vmatprep.mubr.bf16.mxu0 0
  %2011 = vmatmul.mubr.bf16.gmra.mrb[0].mxu0 %v1973
  %v2012 = vpop.f32.mrb[0].mxu0
  %v2013 = vadd.f32 0.0, %v2012
  %v2014 = vpop.f32.mrb[0].mxu0
  %v2015 = vpop.f32.mrb[0].mxu0
  %v2016 = vpop.f32.mrb[0].mxu0
  %2017 = vdwg.mxu0
  %2018 = vrot.lane.b32.xlu0 %v1509, 112
  %v2019 = vpop.permute.xlu0 %2018
  %2020 = vrot.lane.b32.xlu0 %v1509, 80
  %v2021 = vpop.permute.xlu0 %2020
  %v2023 = vsel %vm177, %v2019, 0
  %v2026 = vsel %vm177, %v2021, 0
  %2028 = vmatprep.subr.bf16.mxu0 0
  %2029 = vmatpush1.bf16.xpose.msra.mxu0 %v2026
  %2030 = vmatprep.subr.bf16.mxu0 0
  %2031 = vmatpush1.bf16.xpose.msra.mxu0 0
  %2032 = vmatprep.subr.bf16.mxu0 0
  %2033 = vmatpush1.bf16.xpose.msra.mxu0 0
  %2034 = vmatprep.subr.bf16.mxu0 0
  %2035 = vmatpush1.bf16.xpose.msra.mxu0 0
  %2036 = vmatprep.subr.bf16.mxu0 0
  %2037 = vmatpush1.bf16.xpose.msra.mxu0 0
  %2038 = vmatprep.subr.bf16.mxu0 0
  %2039 = vmatpush1.bf16.xpose.msra.mxu0 0
  %2040 = vmatprep.subr.bf16.mxu0 0
  %2041 = vmatpush1.bf16.xpose.msra.mxu0 0
  %2042 = vmatprep.subr.bf16.mxu0 0
  %2043 = vmatpush1.bf16.xpose.msra.mxu0 0
  %2044 = vmatprep.subr.bf16.mxu0 0
  %2045 = vmatpush1.bf16.xpose.msra.mxu0 0
  %2046 = vmatprep.subr.bf16.mxu0 0
  %2047 = vmatpush1.bf16.xpose.msra.mxu0 0
  %2048 = vmatprep.subr.bf16.mxu0 0
  %2049 = vmatpush1.bf16.xpose.msra.mxu0 0
  %2050 = vmatprep.subr.bf16.mxu0 0
  %2051 = vmatpush1.bf16.xpose.msra.mxu0 0
  %2052 = vmatprep.subr.bf16.mxu0 0
  %2053 = vmatpush1.bf16.xpose.msra.mxu0 0
  %2054 = vmatprep.subr.bf16.mxu0 0
  %2055 = vmatpush1.bf16.xpose.msra.mxu0 0
  %2056 = vmatprep.subr.bf16.mxu0 0
  %2057 = vmatpush1.bf16.xpose.msra.mxu0 0
  %2058 = vmatprep.subr.bf16.mxu0 0
  %2059 = vmatpush1.bf16.xpose.msra.mxu0 0
  %2060 = vmatprep.mubr.bf16.mxu0 0
  %2061 = vmatmul.mubr.bf16.gmra.mrb[0].mxu0 %v2023
  %v2062 = vpop.f32.mrb[0].mxu0
  %v2063 = vadd.f32 0.0, %v2062
  %v2064 = vpop.f32.mrb[0].mxu0
  %v2065 = vpop.f32.mrb[0].mxu0
  %v2066 = vpop.f32.mrb[0].mxu0
  %2067 = vdwg.mxu0
  %v2068 = vmul.f32 %v2013, 0.35355338
  %v2069 = vmul.f32 %v2063, 0.35355338
  %v2070 = vadd.f32 %v2068, %v102
  %v2071 = vadd.f32 %v2069, %v103
  %v2072 = vsel %vm177, %v2070, -inf
  %2073 = vmax.xlane.f32.xlu0 %v2072
  %v2074 = vpop.xlane.xlu0 %2073
  %v2075 = vsel %vm177, %v2071, -inf
  %2076 = vmax.xlane.f32.xlu0 %v2075
  %v2077 = vpop.xlane.xlu0 %2076
  %v2078 = vsub.f32 %v2070, %v2074
  %v2079 = vsub.f32 %v2071, %v2077
  %v2080 = vmul.f32 %v2078, 1.442695
  %v2081 = vpow.pop %v2080
  %v2082 = vmul.f32 %v2079, 1.442695
  %v2083 = vpow.pop %v2082
  %v2084 = vsel %vm177, %v2081, 0.0
  %2085 = vadd.xlane.f32.xlu0 %v2084
  %v2086 = vpop.xlane.xlu0 %2085
  %v2087 = vsel %vm177, %v2083, 0.0
  %2088 = vadd.xlane.f32.xlu0 %v2087
  %v2089 = vpop.xlane.xlu0 %2088
  %v2090 = vrcp.pop %v2086
  %v2091 = vrcp.pop %v2089
  %v2092 = vmul.f32 %v2081, %v2090
  %v2093 = vmul.f32 %v2083, %v2091
  %v2094 = vpack.c.bf16 %v2092, %v2092
  %v2095 = vpack.c.bf16 %v2093, %v2093
  %2096 = vrot.lane.b32.xlu0 %v1508, 48
  %v2097 = vpop.permute.xlu0 %2096
  %v2099 = vsel %vm177, %v2094, 0
  %v2102 = vsel %vm306, %v2097, 0
  %2104 = vmatprep.subr.bf16.mxu0 0
  %2105 = vmatpush1.bf16.msra.mxu0 %v2102
  %2106 = vmatprep.subr.bf16.mxu0 0
  %2107 = vmatpush1.bf16.msra.mxu0 0
  %2108 = vmatprep.subr.bf16.mxu0 0
  %2109 = vmatpush1.bf16.msra.mxu0 0
  %2110 = vmatprep.subr.bf16.mxu0 0
  %2111 = vmatpush1.bf16.msra.mxu0 0
  %2112 = vmatprep.subr.bf16.mxu0 0
  %2113 = vmatpush1.bf16.msra.mxu0 0
  %2114 = vmatprep.subr.bf16.mxu0 0
  %2115 = vmatpush1.bf16.msra.mxu0 0
  %2116 = vmatprep.subr.bf16.mxu0 0
  %2117 = vmatpush1.bf16.msra.mxu0 0
  %2118 = vmatprep.subr.bf16.mxu0 0
  %2119 = vmatpush1.bf16.msra.mxu0 0
  %2120 = vmatprep.subr.bf16.mxu0 0
  %2121 = vmatpush1.bf16.msra.mxu0 0
  %2122 = vmatprep.subr.bf16.mxu0 0
  %2123 = vmatpush1.bf16.msra.mxu0 0
  %2124 = vmatprep.subr.bf16.mxu0 0
  %2125 = vmatpush1.bf16.msra.mxu0 0
  %2126 = vmatprep.subr.bf16.mxu0 0
  %2127 = vmatpush1.bf16.msra.mxu0 0
  %2128 = vmatprep.subr.bf16.mxu0 0
  %2129 = vmatpush1.bf16.msra.mxu0 0
  %2130 = vmatprep.subr.bf16.mxu0 0
  %2131 = vmatpush1.bf16.msra.mxu0 0
  %2132 = vmatprep.subr.bf16.mxu0 0
  %2133 = vmatpush1.bf16.msra.mxu0 0
  %2134 = vmatprep.subr.bf16.mxu0 0
  %2135 = vmatpush1.bf16.msra.mxu0 0
  %2136 = vmatprep.mubr.bf16.mxu0 0
  %2137 = vmatmul.mubr.bf16.gmra.mrb[0].mxu0 %v2099
  %v2138 = vpop.f32.mrb[0].mxu0
  %v2139 = vadd.f32 0.0, %v2138
  %v2140 = vpop.f32.mrb[0].mxu0
  %v2141 = vpop.f32.mrb[0].mxu0
  %v2142 = vpop.f32.mrb[0].mxu0
  %2143 = vdwg.mxu0
  %2144 = vrot.lane.b32.xlu0 %v1509, 48
  %v2145 = vpop.permute.xlu0 %2144
  %v2147 = vsel %vm177, %v2095, 0
  %v2150 = vsel %vm306, %v2145, 0
  %2152 = vmatprep.subr.bf16.mxu0 0
  %2153 = vmatpush1.bf16.msra.mxu0 %v2150
  %2154 = vmatprep.subr.bf16.mxu0 0
  %2155 = vmatpush1.bf16.msra.mxu0 0
  %2156 = vmatprep.subr.bf16.mxu0 0
  %2157 = vmatpush1.bf16.msra.mxu0 0
  %2158 = vmatprep.subr.bf16.mxu0 0
  %2159 = vmatpush1.bf16.msra.mxu0 0
  %2160 = vmatprep.subr.bf16.mxu0 0
  %2161 = vmatpush1.bf16.msra.mxu0 0
  %2162 = vmatprep.subr.bf16.mxu0 0
  %2163 = vmatpush1.bf16.msra.mxu0 0
  %2164 = vmatprep.subr.bf16.mxu0 0
  %2165 = vmatpush1.bf16.msra.mxu0 0
  %2166 = vmatprep.subr.bf16.mxu0 0
  %2167 = vmatpush1.bf16.msra.mxu0 0
  %2168 = vmatprep.subr.bf16.mxu0 0
  %2169 = vmatpush1.bf16.msra.mxu0 0
  %2170 = vmatprep.subr.bf16.mxu0 0
  %2171 = vmatpush1.bf16.msra.mxu0 0
  %2172 = vmatprep.subr.bf16.mxu0 0
  %2173 = vmatpush1.bf16.msra.mxu0 0
  %2174 = vmatprep.subr.bf16.mxu0 0
  %2175 = vmatpush1.bf16.msra.mxu0 0
  %2176 = vmatprep.subr.bf16.mxu0 0
  %2177 = vmatpush1.bf16.msra.mxu0 0
  %2178 = vmatprep.subr.bf16.mxu0 0
  %2179 = vmatpush1.bf16.msra.mxu0 0
  %2180 = vmatprep.subr.bf16.mxu0 0
  %2181 = vmatpush1.bf16.msra.mxu0 0
  %2182 = vmatprep.subr.bf16.mxu0 0
  %2183 = vmatpush1.bf16.msra.mxu0 0
  %2184 = vmatprep.mubr.bf16.mxu0 0
  %2185 = vmatmul.mubr.bf16.gmra.mrb[0].mxu0 %v2147
  %v2186 = vpop.f32.mrb[0].mxu0
  %v2187 = vadd.f32 0.0, %v2186
  %v2188 = vpop.f32.mrb[0].mxu0
  %v2189 = vpop.f32.mrb[0].mxu0
  %v2190 = vpop.f32.mrb[0].mxu0
  %2191 = vdwg.mxu0
  %2194 = vrot.lane.b32.xlu0 %v2139, 16
  %v2195 = vpop.permute.xlu0 %2194
  %2196 = vrot.lane.b32.xlu0 %v2187, 16
  %v2197 = vpop.permute.xlu0 %2196
  %2200 = vst.msk [vmem:[#allocation2] sm:$0xff] %vm867, %v2195
  %2201 = vst.msk [vmem:[#allocation2 + $0x8] sm:$0xff] %vm867, %v2197
  %2202 = vrot.lane.b32.xlu0 %v1508, 104
  %v2203 = vpop.permute.xlu0 %2202
  %2204 = vrot.lane.b32.xlu0 %v1508, 72
  %v2205 = vpop.permute.xlu0 %2204
  %v2207 = vsel %vm177, %v2203, 0
  %v2210 = vsel %vm177, %v2205, 0
  %2212 = vmatprep.subr.bf16.mxu0 0
  %2213 = vmatpush1.bf16.xpose.msra.mxu0 %v2210
  %2214 = vmatprep.subr.bf16.mxu0 0
  %2215 = vmatpush1.bf16.xpose.msra.mxu0 0
  %2216 = vmatprep.subr.bf16.mxu0 0
  %2217 = vmatpush1.bf16.xpose.msra.mxu0 0
  %2218 = vmatprep.subr.bf16.mxu0 0
  %2219 = vmatpush1.bf16.xpose.msra.mxu0 0
  %2220 = vmatprep.subr.bf16.mxu0 0
  %2221 = vmatpush1.bf16.xpose.msra.mxu0 0
  %2222 = vmatprep.subr.bf16.mxu0 0
  %2223 = vmatpush1.bf16.xpose.msra.mxu0 0
  %2224 = vmatprep.subr.bf16.mxu0 0
  %2225 = vmatpush1.bf16.xpose.msra.mxu0 0
  %2226 = vmatprep.subr.bf16.mxu0 0
  %2227 = vmatpush1.bf16.xpose.msra.mxu0 0
  %2228 = vmatprep.subr.bf16.mxu0 0
  %2229 = vmatpush1.bf16.xpose.msra.mxu0 0
  %2230 = vmatprep.subr.bf16.mxu0 0
  %2231 = vmatpush1.bf16.xpose.msra.mxu0 0
  %2232 = vmatprep.subr.bf16.mxu0 0
  %2233 = vmatpush1.bf16.xpose.msra.mxu0 0
  %2234 = vmatprep.subr.bf16.mxu0 0
  %2235 = vmatpush1.bf16.xpose.msra.mxu0 0
  %2236 = vmatprep.subr.bf16.mxu0 0
  %2237 = vmatpush1.bf16.xpose.msra.mxu0 0
  %2238 = vmatprep.subr.bf16.mxu0 0
  %2239 = vmatpush1.bf16.xpose.msra.mxu0 0
  %2240 = vmatprep.subr.bf16.mxu0 0
  %2241 = vmatpush1.bf16.xpose.msra.mxu0 0
  %2242 = vmatprep.subr.bf16.mxu0 0
  %2243 = vmatpush1.bf16.xpose.msra.mxu0 0
  %2244 = vmatprep.mubr.bf16.mxu0 0
  %2245 = vmatmul.mubr.bf16.gmra.mrb[0].mxu0 %v2207
  %v2246 = vpop.f32.mrb[0].mxu0
  %v2247 = vadd.f32 0.0, %v2246
  %v2248 = vpop.f32.mrb[0].mxu0
  %v2249 = vpop.f32.mrb[0].mxu0
  %v2250 = vpop.f32.mrb[0].mxu0
  %2251 = vdwg.mxu0
  %2252 = vrot.lane.b32.xlu0 %v1509, 104
  %v2253 = vpop.permute.xlu0 %2252
  %2254 = vrot.lane.b32.xlu0 %v1509, 72
  %v2255 = vpop.permute.xlu0 %2254
  %v2257 = vsel %vm177, %v2253, 0
  %v2260 = vsel %vm177, %v2255, 0
  %2262 = vmatprep.subr.bf16.mxu0 0
  %2263 = vmatpush1.bf16.xpose.msra.mxu0 %v2260
  %2264 = vmatprep.subr.bf16.mxu0 0
  %2265 = vmatpush1.bf16.xpose.msra.mxu0 0
  %2266 = vmatprep.subr.bf16.mxu0 0
  %2267 = vmatpush1.bf16.xpose.msra.mxu0 0
  %2268 = vmatprep.subr.bf16.mxu0 0
  %2269 = vmatpush1.bf16.xpose.msra.mxu0 0
  %2270 = vmatprep.subr.bf16.mxu0 0
  %2271 = vmatpush1.bf16.xpose.msra.mxu0 0
  %2272 = vmatprep.subr.bf16.mxu0 0
  %2273 = vmatpush1.bf16.xpose.msra.mxu0 0
  %2274 = vmatprep.subr.bf16.mxu0 0
  %2275 = vmatpush1.bf16.xpose.msra.mxu0 0
  %2276 = vmatprep.subr.bf16.mxu0 0
  %2277 = vmatpush1.bf16.xpose.msra.mxu0 0
  %2278 = vmatprep.subr.bf16.mxu0 0
  %2279 = vmatpush1.bf16.xpose.msra.mxu0 0
  %2280 = vmatprep.subr.bf16.mxu0 0
  %2281 = vmatpush1.bf16.xpose.msra.mxu0 0
  %2282 = vmatprep.subr.bf16.mxu0 0
  %2283 = vmatpush1.bf16.xpose.msra.mxu0 0
  %2284 = vmatprep.subr.bf16.mxu0 0
  %2285 = vmatpush1.bf16.xpose.msra.mxu0 0
  %2286 = vmatprep.subr.bf16.mxu0 0
  %2287 = vmatpush1.bf16.xpose.msra.mxu0 0
  %2288 = vmatprep.subr.bf16.mxu0 0
  %2289 = vmatpush1.bf16.xpose.msra.mxu0 0
  %2290 = vmatprep.subr.bf16.mxu0 0
  %2291 = vmatpush1.bf16.xpose.msra.mxu0 0
  %2292 = vmatprep.subr.bf16.mxu0 0
  %2293 = vmatpush1.bf16.xpose.msra.mxu0 0
  %2294 = vmatprep.mubr.bf16.mxu0 0
  %2295 = vmatmul.mubr.bf16.gmra.mrb[0].mxu0 %v2257
  %v2296 = vpop.f32.mrb[0].mxu0
  %v2297 = vadd.f32 0.0, %v2296
  %v2298 = vpop.f32.mrb[0].mxu0
  %v2299 = vpop.f32.mrb[0].mxu0
  %v2300 = vpop.f32.mrb[0].mxu0
  %2301 = vdwg.mxu0
  %v2302 = vmul.f32 %v2247, 0.35355338
  %v2303 = vmul.f32 %v2297, 0.35355338
  %v2304 = vadd.f32 %v2302, %v102
  %v2305 = vadd.f32 %v2303, %v103
  %v2306 = vsel %vm177, %v2304, -inf
  %2307 = vmax.xlane.f32.xlu0 %v2306
  %v2308 = vpop.xlane.xlu0 %2307
  %v2309 = vsel %vm177, %v2305, -inf
  %2310 = vmax.xlane.f32.xlu0 %v2309
  %v2311 = vpop.xlane.xlu0 %2310
  %v2312 = vsub.f32 %v2304, %v2308
  %v2313 = vsub.f32 %v2305, %v2311
  %v2314 = vmul.f32 %v2312, 1.442695
  %v2315 = vpow.pop %v2314
  %v2316 = vmul.f32 %v2313, 1.442695
  %v2317 = vpow.pop %v2316
  %v2318 = vsel %vm177, %v2315, 0.0
  %2319 = vadd.xlane.f32.xlu0 %v2318
  %v2320 = vpop.xlane.xlu0 %2319
  %v2321 = vsel %vm177, %v2317, 0.0
  %2322 = vadd.xlane.f32.xlu0 %v2321
  %v2323 = vpop.xlane.xlu0 %2322
  %v2324 = vrcp.pop %v2320
  %v2325 = vrcp.pop %v2323
  %v2326 = vmul.f32 %v2315, %v2324
  %v2327 = vmul.f32 %v2317, %v2325
  %v2328 = vpack.c.bf16 %v2326, %v2326
  %v2329 = vpack.c.bf16 %v2327, %v2327
  %2330 = vrot.lane.b32.xlu0 %v1508, 40
  %v2331 = vpop.permute.xlu0 %2330
  %v2333 = vsel %vm177, %v2328, 0
  %v2336 = vsel %vm306, %v2331, 0
  %2338 = vmatprep.subr.bf16.mxu0 0
  %2339 = vmatpush1.bf16.msra.mxu0 %v2336
  %2340 = vmatprep.subr.bf16.mxu0 0
  %2341 = vmatpush1.bf16.msra.mxu0 0
  %2342 = vmatprep.subr.bf16.mxu0 0
  %2343 = vmatpush1.bf16.msra.mxu0 0
  %2344 = vmatprep.subr.bf16.mxu0 0
  %2345 = vmatpush1.bf16.msra.mxu0 0
  %2346 = vmatprep.subr.bf16.mxu0 0
  %2347 = vmatpush1.bf16.msra.mxu0 0
  %2348 = vmatprep.subr.bf16.mxu0 0
  %2349 = vmatpush1.bf16.msra.mxu0 0
  %2350 = vmatprep.subr.bf16.mxu0 0
  %2351 = vmatpush1.bf16.msra.mxu0 0
  %2352 = vmatprep.subr.bf16.mxu0 0
  %2353 = vmatpush1.bf16.msra.mxu0 0
  %2354 = vmatprep.subr.bf16.mxu0 0
  %2355 = vmatpush1.bf16.msra.mxu0 0
  %2356 = vmatprep.subr.bf16.mxu0 0
  %2357 = vmatpush1.bf16.msra.mxu0 0
  %2358 = vmatprep.subr.bf16.mxu0 0
  %2359 = vmatpush1.bf16.msra.mxu0 0
  %2360 = vmatprep.subr.bf16.mxu0 0
  %2361 = vmatpush1.bf16.msra.mxu0 0
  %2362 = vmatprep.subr.bf16.mxu0 0
  %2363 = vmatpush1.bf16.msra.mxu0 0
  %2364 = vmatprep.subr.bf16.mxu0 0
  %2365 = vmatpush1.bf16.msra.mxu0 0
  %2366 = vmatprep.subr.bf16.mxu0 0
  %2367 = vmatpush1.bf16.msra.mxu0 0
  %2368 = vmatprep.subr.bf16.mxu0 0
  %2369 = vmatpush1.bf16.msra.mxu0 0
  %2370 = vmatprep.mubr.bf16.mxu0 0
  %2371 = vmatmul.mubr.bf16.gmra.mrb[0].mxu0 %v2333
  %v2372 = vpop.f32.mrb[0].mxu0
  %v2373 = vadd.f32 0.0, %v2372
  %v2374 = vpop.f32.mrb[0].mxu0
  %v2375 = vpop.f32.mrb[0].mxu0
  %v2376 = vpop.f32.mrb[0].mxu0
  %2377 = vdwg.mxu0
  %2378 = vrot.lane.b32.xlu0 %v1509, 40
  %v2379 = vpop.permute.xlu0 %2378
  %v2381 = vsel %vm177, %v2329, 0
  %v2384 = vsel %vm306, %v2379, 0
  %2386 = vmatprep.subr.bf16.mxu0 0
  %2387 = vmatpush1.bf16.msra.mxu0 %v2384
  %2388 = vmatprep.subr.bf16.mxu0 0
  %2389 = vmatpush1.bf16.msra.mxu0 0
  %2390 = vmatprep.subr.bf16.mxu0 0
  %2391 = vmatpush1.bf16.msra.mxu0 0
  %2392 = vmatprep.subr.bf16.mxu0 0
  %2393 = vmatpush1.bf16.msra.mxu0 0
  %2394 = vmatprep.subr.bf16.mxu0 0
  %2395 = vmatpush1.bf16.msra.mxu0 0
  %2396 = vmatprep.subr.bf16.mxu0 0
  %2397 = vmatpush1.bf16.msra.mxu0 0
  %2398 = vmatprep.subr.bf16.mxu0 0
  %2399 = vmatpush1.bf16.msra.mxu0 0
  %2400 = vmatprep.subr.bf16.mxu0 0
  %2401 = vmatpush1.bf16.msra.mxu0 0
  %2402 = vmatprep.subr.bf16.mxu0 0
  %2403 = vmatpush1.bf16.msra.mxu0 0
  %2404 = vmatprep.subr.bf16.mxu0 0
  %2405 = vmatpush1.bf16.msra.mxu0 0
  %2406 = vmatprep.subr.bf16.mxu0 0
  %2407 = vmatpush1.bf16.msra.mxu0 0
  %2408 = vmatprep.subr.bf16.mxu0 0
  %2409 = vmatpush1.bf16.msra.mxu0 0
  %2410 = vmatprep.subr.bf16.mxu0 0
  %2411 = vmatpush1.bf16.msra.mxu0 0
  %2412 = vmatprep.subr.bf16.mxu0 0
  %2413 = vmatpush1.bf16.msra.mxu0 0
  %2414 = vmatprep.subr.bf16.mxu0 0
  %2415 = vmatpush1.bf16.msra.mxu0 0
  %2416 = vmatprep.subr.bf16.mxu0 0
  %2417 = vmatpush1.bf16.msra.mxu0 0
  %2418 = vmatprep.mubr.bf16.mxu0 0
  %2419 = vmatmul.mubr.bf16.gmra.mrb[0].mxu0 %v2381
  %v2420 = vpop.f32.mrb[0].mxu0
  %v2421 = vadd.f32 0.0, %v2420
  %v2422 = vpop.f32.mrb[0].mxu0
  %v2423 = vpop.f32.mrb[0].mxu0
  %v2424 = vpop.f32.mrb[0].mxu0
  %2425 = vdwg.mxu0
  %2428 = vrot.lane.b32.xlu0 %v2373, 24
  %v2429 = vpop.permute.xlu0 %2428
  %2430 = vrot.lane.b32.xlu0 %v2421, 24
  %v2431 = vpop.permute.xlu0 %2430
  %2434 = vst.msk [vmem:[#allocation2] sm:$0xff] %vm1102, %v2429
  %2435 = vst.msk [vmem:[#allocation2 + $0x8] sm:$0xff] %vm1102, %v2431
  %v2436 = vld [vmem:[#allocation2] sm:$0xff]
  %v2437 = vld [vmem:[#allocation2 + $0x8] sm:$0xff]
  %v2438 = vpack.c.bf16 %v2437, %v2436
  %s2439 = scalar_lea.vmem %s6, 16
  %v2440 = vld [vmem:[%s2439] sm:$0xf]
  %v2441 = vld [vmem:[%s2439 + $0x4] sm:$0xf]
  %v2442 = vld [vmem:[%s2439 + $0x8] sm:$0xf]
  %v2443 = vld [vmem:[%s2439 + $0xc] sm:$0xf]
  %s2444 = scalar_lea.vmem %s7, 1
  %v2445 = vld [vmem:[%s2444] sm:$0x1]
  %v2447 = vlaneseq
  %v2448 = vshrl.u32 %v2447, 7
  %v2449 = vsub.s32 0, %v2448
  %v2450 = vrot.slane %v2445, %v2449
  %v2456 = vunpack.c.l.b16 %v2440
  %v2457 = vunpack.c.l.b16 %v2441
  %v2458 = vunpack.c.l.b16 %v2442
  %v2459 = vunpack.c.l.b16 %v2443
  %v2460 = vpack.c.b16 %v2457, %v2456
  %v2461 = vpack.c.b16 %v2459, %v2458
  %v2465 = vsel %vm58, %v2438, 0
  %2467 = vmatprep.subr.bf16.mxu0 0
  %2468 = vmatpush1.bf16.msra.mxu0 %v2460
  %2469 = vmatprep.subr.bf16.mxu0 0
  %2470 = vmatpush1.bf16.msra.mxu0 %v2461
  %2471 = vmatprep.subr.bf16.mxu0 0
  %2472 = vmatpush1.bf16.msra.mxu0 0
  %2473 = vmatprep.subr.bf16.mxu0 0
  %2474 = vmatpush1.bf16.msra.mxu0 0
  %2475 = vmatprep.subr.bf16.mxu0 0
  %2476 = vmatpush1.bf16.msra.mxu0 0
  %2477 = vmatprep.subr.bf16.mxu0 0
  %2478 = vmatpush1.bf16.msra.mxu0 0
  %2479 = vmatprep.subr.bf16.mxu0 0
  %2480 = vmatpush1.bf16.msra.mxu0 0
  %2481 = vmatprep.subr.bf16.mxu0 0
  %2482 = vmatpush1.bf16.msra.mxu0 0
  %2483 = vmatprep.subr.bf16.mxu0 0
  %2484 = vmatpush1.bf16.msra.mxu0 0
  %2485 = vmatprep.subr.bf16.mxu0 0
  %2486 = vmatpush1.bf16.msra.mxu0 0
  %2487 = vmatprep.subr.bf16.mxu0 0
  %2488 = vmatpush1.bf16.msra.mxu0 0
  %2489 = vmatprep.subr.bf16.mxu0 0
  %2490 = vmatpush1.bf16.msra.mxu0 0
  %2491 = vmatprep.subr.bf16.mxu0 0
  %2492 = vmatpush1.bf16.msra.mxu0 0
  %2493 = vmatprep.subr.bf16.mxu0 0
  %2494 = vmatpush1.bf16.msra.mxu0 0
  %2495 = vmatprep.subr.bf16.mxu0 0
  %2496 = vmatpush1.bf16.msra.mxu0 0
  %2497 = vmatprep.subr.bf16.mxu0 0
  %2498 = vmatpush1.bf16.msra.mxu0 0
  %2499 = vmatprep.mubr.bf16.mxu0 0
  %2500 = vmatmul.mubr.bf16.gmra.mrb[0].mxu0 %v2465
  %v2501 = vpop.f32.mrb[0].mxu0
  %v2502 = vadd.f32 %v2450, %v2501
  %v2503 = vpop.f32.mrb[0].mxu0
  %v2504 = vpop.f32.mrb[0].mxu0
  %v2505 = vadd.f32 %v2450, %v2504
  %v2506 = vpop.f32.mrb[0].mxu0
  %2507 = vdwg.mxu0
  %v2508 = vadd.f32 %v1436, %v2502
  %v2509 = vadd.f32 %v1437, %v2505
  %s2510 = scalar_lea.vmem %s8, 1
  %v2511 = vld [vmem:[%s2510] sm:$0x1]
  %s2512 = scalar_lea.vmem %s9, 1
  %v2513 = vld [vmem:[%s2512] sm:$0x1]
  %v2514 = vsel %vm58, %v2508, 0.0
  %2515 = vadd.xlane.f32.xlu0 %v2514
  %v2516 = vpop.xlane.xlu0 %2515
  %v2517 = vsel %vm58, %v2509, 0.0
  %2518 = vadd.xlane.f32.xlu0 %v2517
  %v2519 = vpop.xlane.xlu0 %2518
  %v2520 = vmul.f32 %v2516, %v65
  %v2521 = vmul.f32 %v2519, %v65
  %v2522 = vsub.f32 %v2508, %v2520
  %v2523 = vsub.f32 %v2509, %v2521
  %v2524 = vmul.f32 %v2522, %v2522
  %v2525 = vmul.f32 %v2523, %v2523
  %v2526 = vsel %vm58, %v2524, 0.0
  %2527 = vadd.xlane.f32.xlu0 %v2526
  %v2528 = vpop.xlane.xlu0 %2527
  %v2529 = vsel %vm58, %v2525, 0.0
  %2530 = vadd.xlane.f32.xlu0 %v2529
  %v2531 = vpop.xlane.xlu0 %2530
  %v2532 = vmul.f32 %v2528, %v65
  %v2533 = vmul.f32 %v2531, %v65
  %v2534 = vadd.f32 %v2532, 1e-05
  %v2535 = vadd.f32 %v2533, 1e-05
  %v2536 = vrsqrt.pop %v2534
  %v2537 = vrsqrt.pop %v2535
  %v2538 = vmul.f32 %v2522, %v2536
  %v2539 = vmul.f32 %v2523, %v2537
  %v2541 = vlaneseq
  %v2542 = vshrl.u32 %v2541, 7
  %v2543 = vsub.s32 0, %v2542
  %v2544 = vrot.slane %v2511, %v2543
  %v2546 = vmul.f32 %v2538, %v2544
  %v2547 = vmul.f32 %v2539, %v2544
  %v2549 = vlaneseq
  %v2550 = vshrl.u32 %v2549, 7
  %v2551 = vsub.s32 0, %v2550
  %v2552 = vrot.slane %v2513, %v2551
  %v2554 = vadd.f32 %v2546, %v2552
  %v2555 = vadd.f32 %v2547, %v2552
  %v2556 = vpack.c.bf16 %v2555, %v2554
  %s2557 = scalar_lea.vmem %s10, 16
  %v2558 = vld [vmem:[%s2557] sm:$0xf]
  %v2559 = vld [vmem:[%s2557 + $0x4] sm:$0xf]
  %v2560 = vld [vmem:[%s2557 + $0x8] sm:$0xf]
  %v2561 = vld [vmem:[%s2557 + $0xc] sm:$0xf]
  %s2562 = scalar_lea.vmem %s11, 1
  %v2563 = vld [vmem:[%s2562] sm:$0x1]
  %v2565 = vlaneseq
  %v2566 = vshrl.u32 %v2565, 7
  %v2567 = vsub.s32 0, %v2566
  %v2568 = vrot.slane %v2563, %v2567
  %v2574 = vunpack.c.l.b16 %v2558
  %v2575 = vunpack.c.l.b16 %v2559
  %v2576 = vunpack.c.l.b16 %v2560
  %v2577 = vunpack.c.l.b16 %v2561
  %v2578 = vpack.c.b16 %v2575, %v2574
  %v2579 = vpack.c.b16 %v2577, %v2576
  %v2583 = vsel %vm58, %v2556, 0
  %2585 = vmatprep.subr.bf16.mxu0 0
  %2586 = vmatpush1.bf16.msra.mxu0 %v2578
  %2587 = vmatprep.subr.bf16.mxu0 0
  %2588 = vmatpush1.bf16.msra.mxu0 %v2579
  %2589 = vmatprep.subr.bf16.mxu0 0
  %2590 = vmatpush1.bf16.msra.mxu0 0
  %2591 = vmatprep.subr.bf16.mxu0 0
  %2592 = vmatpush1.bf16.msra.mxu0 0
  %2593 = vmatprep.subr.bf16.mxu0 0
  %2594 = vmatpush1.bf16.msra.mxu0 0
  %2595 = vmatprep.subr.bf16.mxu0 0
  %2596 = vmatpush1.bf16.msra.mxu0 0
  %2597 = vmatprep.subr.bf16.mxu0 0
  %2598 = vmatpush1.bf16.msra.mxu0 0
  %2599 = vmatprep.subr.bf16.mxu0 0
  %2600 = vmatpush1.bf16.msra.mxu0 0
  %2601 = vmatprep.subr.bf16.mxu0 0
  %2602 = vmatpush1.bf16.msra.mxu0 0
  %2603 = vmatprep.subr.bf16.mxu0 0
  %2604 = vmatpush1.bf16.msra.mxu0 0
  %2605 = vmatprep.subr.bf16.mxu0 0
  %2606 = vmatpush1.bf16.msra.mxu0 0
  %2607 = vmatprep.subr.bf16.mxu0 0
  %2608 = vmatpush1.bf16.msra.mxu0 0
  %2609 = vmatprep.subr.bf16.mxu0 0
  %2610 = vmatpush1.bf16.msra.mxu0 0
  %2611 = vmatprep.subr.bf16.mxu0 0
  %2612 = vmatpush1.bf16.msra.mxu0 0
  %2613 = vmatprep.subr.bf16.mxu0 0
  %2614 = vmatpush1.bf16.msra.mxu0 0
  %2615 = vmatprep.subr.bf16.mxu0 0
  %2616 = vmatpush1.bf16.msra.mxu0 0
  %2617 = vmatprep.mubr.bf16.mxu0 0
  %2618 = vmatmul.mubr.bf16.gmra.mrb[0].mxu0 %v2583
  %v2619 = vpop.f32.mrb[0].mxu0
  %v2620 = vadd.f32 %v2568, %v2619
  %v2621 = vpop.f32.mrb[0].mxu0
  %v2622 = vpop.f32.mrb[0].mxu0
  %v2623 = vadd.f32 %v2568, %v2622
  %v2624 = vpop.f32.mrb[0].mxu0
  %2625 = vdwg.mxu0
  %v2626 = vmul.f32 %v2620, 0.5
  %v2627 = vmul.f32 %v2623, 0.5
  %v2628 = vmul.f32 %v2620, 0.044715
  %v2629 = vmul.f32 %v2623, 0.044715
  %v2630 = vmul.f32 %v2628, %v2620
  %v2631 = vmul.f32 %v2629, %v2623
  %v2632 = vmul.f32 %v2630, %v2620
  %v2633 = vmul.f32 %v2631, %v2623
  %v2634 = vadd.f32 %v2620, %v2632
  %v2635 = vadd.f32 %v2623, %v2633
  %v2636 = vmul.f32 %v2634, 0.7978846
  %v2637 = vmul.f32 %v2635, 0.7978846
  %v2638 = vtanh.pop %v2636
  %v2639 = vtanh.pop %v2637
  %v2640 = vadd.f32 %v2638, 1.0
  %v2641 = vadd.f32 %v2639, 1.0
  %v2642 = vmul.f32 %v2626, %v2640
  %v2643 = vmul.f32 %v2627, %v2641
  %v2644 = vpack.c.bf16 %v2643, %v2642
  %s2645 = scalar_lea.vmem %s12, 32
  %v2646 = vld [vmem:[%s2645] sm:$0xf]
  %v2647 = vld [vmem:[%s2645 + $0x4] sm:$0xf]
  %v2648 = vld [vmem:[%s2645 + $0x8] sm:$0xf]
  %v2649 = vld [vmem:[%s2645 + $0xc] sm:$0xf]
  %v2650 = vld [vmem:[%s2645 + $0x10] sm:$0xf]
  %v2651 = vld [vmem:[%s2645 + $0x14] sm:$0xf]
  %v2652 = vld [vmem:[%s2645 + $0x18] sm:$0xf]
  %v2653 = vld [vmem:[%s2645 + $0x1c] sm:$0xf]
  %s2654 = scalar_lea.vmem %s13, 1
  %v2655 = vld [vmem:[%s2654] sm:$0x1]
  %v2657 = vlaneseq
  %v2658 = vshrl.u32 %v2657, 7
  %v2659 = vsub.s32 0, %v2658
  %v2660 = vrot.slane %v2655, %v2659
  %v2670 = vunpack.c.l.b16 %v2646
  %v2671 = vunpack.c.l.b16 %v2647
  %v2672 = vunpack.c.l.b16 %v2648
  %v2673 = vunpack.c.l.b16 %v2649
  %v2674 = vunpack.c.l.b16 %v2650
  %v2675 = vunpack.c.l.b16 %v2651
  %v2676 = vunpack.c.l.b16 %v2652
  %v2677 = vunpack.c.l.b16 %v2653
  %v2678 = vpack.c.b16 %v2671, %v2670
  %v2679 = vpack.c.b16 %v2673, %v2672
  %v2680 = vpack.c.b16 %v2675, %v2674
  %v2681 = vpack.c.b16 %v2677, %v2676
  %v2687 = vsel %vm1347, %v2644, 0
  %2689 = vmatprep.subr.bf16.mxu0 0
  %2690 = vmatpush1.bf16.msra.mxu0 %v2678
  %2691 = vmatprep.subr.bf16.mxu0 0
  %2692 = vmatpush1.bf16.msra.mxu0 %v2679
  %2693 = vmatprep.subr.bf16.mxu0 0
  %2694 = vmatpush1.bf16.msra.mxu0 %v2680
  %2695 = vmatprep.subr.bf16.mxu0 0
  %2696 = vmatpush1.bf16.msra.mxu0 %v2681
  %2697 = vmatprep.subr.bf16.mxu0 0
  %2698 = vmatpush1.bf16.msra.mxu0 0
  %2699 = vmatprep.subr.bf16.mxu0 0
  %2700 = vmatpush1.bf16.msra.mxu0 0
  %2701 = vmatprep.subr.bf16.mxu0 0
  %2702 = vmatpush1.bf16.msra.mxu0 0
  %2703 = vmatprep.subr.bf16.mxu0 0
  %2704 = vmatpush1.bf16.msra.mxu0 0
  %2705 = vmatprep.subr.bf16.mxu0 0
  %2706 = vmatpush1.bf16.msra.mxu0 0
  %2707 = vmatprep.subr.bf16.mxu0 0
  %2708 = vmatpush1.bf16.msra.mxu0 0
  %2709 = vmatprep.subr.bf16.mxu0 0
  %2710 = vmatpush1.bf16.msra.mxu0 0
  %2711 = vmatprep.subr.bf16.mxu0 0
  %2712 = vmatpush1.bf16.msra.mxu0 0
  %2713 = vmatprep.subr.bf16.mxu0 0
  %2714 = vmatpush1.bf16.msra.mxu0 0
  %2715 = vmatprep.subr.bf16.mxu0 0
  %2716 = vmatpush1.bf16.msra.mxu0 0
  %2717 = vmatprep.subr.bf16.mxu0 0
  %2718 = vmatpush1.bf16.msra.mxu0 0
  %2719 = vmatprep.subr.bf16.mxu0 0
  %2720 = vmatpush1.bf16.msra.mxu0 0
  %2721 = vmatprep.mubr.bf16.mxu0 0
  %2722 = vmatmul.mubr.bf16.gmra.mrb[0].mxu0 %v2687
  %v2723 = vpop.f32.mrb[0].mxu0
  %v2724 = vadd.f32 %v2660, %v2723
  %v2725 = vpop.f32.mrb[0].mxu0
  %v2726 = vpop.f32.mrb[0].mxu0
  %v2727 = vadd.f32 %v2660, %v2726
  %v2728 = vpop.f32.mrb[0].mxu0
  %2729 = vdwg.mxu0
  %v2730 = vadd.f32 %v2554, %v2724
  %v2731 = vadd.f32 %v2555, %v2727
  %s2732 = scalar_lea.vmem %s14, 1
  %v2733 = vld [vmem:[%s2732] sm:$0x1]
  %s2734 = scalar_lea.vmem %s15, 1
  %v2735 = vld [vmem:[%s2734] sm:$0x1]
  %v2736 = vsel %vm58, %v2730, 0.0
  %2737 = vadd.xlane.f32.xlu0 %v2736
  %v2738 = vpop.xlane.xlu0 %2737
  %v2739 = vsel %vm58, %v2731, 0.0
  %2740 = vadd.xlane.f32.xlu0 %v2739
  %v2741 = vpop.xlane.xlu0 %2740
  %v2742 = vmul.f32 %v2738, %v65
  %v2743 = vmul.f32 %v2741, %v65
  %v2744 = vsub.f32 %v2730, %v2742
  %v2745 = vsub.f32 %v2731, %v2743
  %v2746 = vmul.f32 %v2744, %v2744
  %v2747 = vmul.f32 %v2745, %v2745
  %v2748 = vsel %vm58, %v2746, 0.0
  %2749 = vadd.xlane.f32.xlu0 %v2748
  %v2750 = vpop.xlane.xlu0 %2749
  %v2751 = vsel %vm58, %v2747, 0.0
  %2752 = vadd.xlane.f32.xlu0 %v2751
  %v2753 = vpop.xlane.xlu0 %2752
  %v2754 = vmul.f32 %v2750, %v65
  %v2755 = vmul.f32 %v2753, %v65
  %v2756 = vadd.f32 %v2754, 1e-05
  %v2757 = vadd.f32 %v2755, 1e-05
  %v2758 = vrsqrt.pop %v2756
  %v2759 = vrsqrt.pop %v2757
  %v2760 = vmul.f32 %v2744, %v2758
  %v2761 = vmul.f32 %v2745, %v2759
  %v2763 = vlaneseq
  %v2764 = vshrl.u32 %v2763, 7
  %v2765 = vsub.s32 0, %v2764
  %v2766 = vrot.slane %v2733, %v2765
  %v2768 = vmul.f32 %v2760, %v2766
  %v2769 = vmul.f32 %v2761, %v2766
  %v2771 = vlaneseq
  %v2772 = vshrl.u32 %v2771, 7
  %v2773 = vsub.s32 0, %v2772
  %v2774 = vrot.slane %v2735, %v2773
  %v2776 = vadd.f32 %v2768, %v2774
  %v2777 = vadd.f32 %v2769, %v2774
  %2778 = vst.msk [vmem:[%s16] sm:$0xff] %vm58, %v2776
  %2779 = vst.msk [vmem:[%s16 + $0x8] sm:$0xff] %vm58, %v2777
  // Predicated region
  $region66: #{roberta_classifier_forward.1} parent=0 // pred_check
    _
  $region67: #{roberta_classifier_forward.1} parent=0 // pred_check_branch
    %2781 = sbr.rel (0) target = $region69
  $region68: #{roberta_classifier_forward.1} parent=0 // pred_region
    _
  $region69: #{roberta_classifier_forward.1} parent=0 // pred_fallthru
    _
  // Predicated region
  $region70: #{roberta_classifier_forward.1} parent=0 // pred_check
    _
  $region71: #{roberta_classifier_forward.1} parent=0 // pred_check_branch
    %2783 = sbr.rel (0) target = $region73
  $region72: #{roberta_classifier_forward.1} parent=0 // pred_region
    _
  $region73: #{roberta_classifier_forward.1} parent=0 // pred_fallthru
    _

</llo_original>
